<compile_context>
chip_gen: v7x
topology: tpu7x:2x2x1
jax: 0.10.0
libtpu: 0.0.40
codegen_flags: <defaults>
</compile_context>

<pallas_src>
import functools

import jax
import jax.numpy as jnp
from jax.experimental import pallas as pl
from jax.experimental.pallas import tpu as pltpu


# ----------------------------------------------------------------------------
# Small helpers
# ----------------------------------------------------------------------------
def _round_up(x, m):
    return (x + m - 1) // m * m


def _pad2d(x, rows, cols):
    return jnp.pad(x, ((0, rows - x.shape[0]), (0, cols - x.shape[1])))


def _pad_row(v, cols):
    return jnp.pad(v, (0, cols - v.shape[0]))[None, :]


def _vmem_spec():
    return pl.BlockSpec(memory_space=pltpu.MemorySpace.VMEM)


def _vmem_capacity_bytes():
    """Physical VMEM per TensorCore; conservative 64 MiB (v7x) fallback."""
    try:
        info = pltpu.get_tpu_info()
        for attr in ("vmem_capacity_bytes", "vmem_size_bytes", "vmem_bytes"):
            v = getattr(info, attr, None)
            if v:
                return int(v)
    except Exception:
        pass
    return 64 * 1024 * 1024


def _vmem_limit_bytes():
    # ~56 MiB on v7x (64 MiB physical), 100 MiB on v5e/v6e (128 MiB physical).
    cap = _vmem_capacity_bytes()
    limit = min(cap - 8 * 1024 * 1024, 100 * 1024 * 1024)
    return int(max(limit, 32 * 1024 * 1024))


# ----------------------------------------------------------------------------
# Shared GraphNorm math (single graph, row-masked for zero padding rows)
# ----------------------------------------------------------------------------
def _graphnorm_relu(h, gnw, gnb, gna, n_valid):
    """GraphNorm + Dropout(eval)=identity + ReLU over the full [N, H] block."""
    rows = jax.lax.broadcasted_iota(jnp.int32, h.shape, 0)
    valid = (rows < n_valid).astype(jnp.float32)
    inv_n = 1.0 / float(n_valid)
    mean = jnp.sum(h * valid, axis=0, keepdims=True) * inv_n
    shifted = (h - gna * mean) * valid
    var = jnp.sum(shifted * shifted, axis=0, keepdims=True) * inv_n
    hn = shifted * jax.lax.rsqrt(var + 1e-5) * gnw + gnb
    # ReLU; re-mask so padded rows stay exactly zero for downstream matmuls.
    return jnp.maximum(hn, 0.0) * valid


# ----------------------------------------------------------------------------
# FUSED path: one kernel, A_hat resident in VMEM across all layers
# ----------------------------------------------------------------------------
def _fused_kernel(n_valid, num_layers,
                  x_ref, a_ref, w0_ref, wr_ref, b_ref,
                  gnw_ref, gnb_ref, gna_ref, wfc_ref, bfc_ref, o_ref):
    a = a_ref[...]                                           # (n_pad, n_pad) bf16
    xw = jnp.dot(x_ref[...], w0_ref[...],
                 preferred_element_type=jnp.float32).astype(jnp.bfloat16)
    for l in range(num_layers):                              # unrolled (static)
        agg = jnp.dot(a, xw, preferred_element_type=jnp.float32) + b_ref[l]
        act = _graphnorm_relu(agg, gnw_ref[l], gnb_ref[l], gna_ref[l], n_valid)
        if l + 1 < num_layers:
            # Fuse the next layer's feature transform; no HBM round trip.
            xw = jnp.dot(act.astype(jnp.bfloat16), wr_ref[l],
                         preferred_element_type=jnp.float32).astype(jnp.bfloat16)
        else:
            o_ref[...] = (jnp.dot(act.astype(jnp.bfloat16), wfc_ref[...],
                                  preferred_element_type=jnp.float32)
                          + bfc_ref[...])


def _fused_forward(params, x, a_hat_f32, n, hidden, out_dim):
    num_layers = len(params["layers"])
    n_pad = _round_up(max(n, 8), 256)
    hp = _round_up(hidden, 128)
    op = _round_up(out_dim, 128)
    fin_p = _round_up(x.shape[1], 128)

    a_hat = _pad2d(a_hat_f32, n_pad, n_pad).astype(jnp.bfloat16)
    x_p = _pad2d(x, n_pad, fin_p).astype(jnp.bfloat16)

    w0 = _pad2d(params["layers"][0][0], fin_p, hp).astype(jnp.bfloat16)
    if num_layers > 1:
        wr = jnp.stack([_pad2d(params["layers"][l][0], hp, hp)
                        for l in range(1, num_layers)]).astype(jnp.bfloat16)
    else:
        wr = jnp.zeros((1, hp, hp), jnp.bfloat16)            # unused dummy
    b_all = jnp.stack([_pad_row(params["layers"][l][1], hp)
                       for l in range(num_layers)])
    gnw = jnp.stack([_pad_row(params["layers"][l][2], hp)
                     for l in range(num_layers)])
    gnb = jnp.stack([_pad_row(params["layers"][l][3], hp)
                     for l in range(num_layers)])
    gna = jnp.stack([_pad_row(params["layers"][l][4], hp)
                     for l in range(num_layers)])
    wfc = _pad2d(params["fc_w"], hp, op).astype(jnp.bfloat16)
    bfc = _pad_row(params["fc_b"], op)

    out = pl.pallas_call(
        functools.partial(_fused_kernel, n, num_layers),
        out_shape=jax.ShapeDtypeStruct((n_pad, op), jnp.float32),
        in_specs=[_vmem_spec()] * 10,
        out_specs=_vmem_spec(),
        compiler_params=pltpu.CompilerParams(
            vmem_limit_bytes=_vmem_limit_bytes()),
    )(x_p, a_hat, w0, wr, b_all, gnw, gnb, gna, wfc, bfc)
    return out[:n, :out_dim]


# ----------------------------------------------------------------------------
# TILED path kernels (large graphs)
# ----------------------------------------------------------------------------
def _xw_kernel(x_ref, w_ref, o_ref):
    o_ref[...] = jnp.dot(x_ref[...], w_ref[...],
                         preferred_element_type=jnp.float32).astype(o_ref.dtype)


def _feature_transform(x, w, *, tm):
    n_pad, fin = x.shape
    hp = w.shape[1]
    return pl.pallas_call(
        _xw_kernel,
        out_shape=jax.ShapeDtypeStruct((n_pad, hp), jnp.bfloat16),
        grid_spec=pltpu.PrefetchScalarGridSpec(
            num_scalar_prefetch=0,
            grid=(n_pad // tm,),
            in_specs=[pl.BlockSpec((tm, fin), lambda i: (i, 0)),
                      pl.BlockSpec((fin, hp), lambda i: (0, 0))],
            out_specs=pl.BlockSpec((tm, hp), lambda i: (i, 0)),
        ),
        compiler_params=pltpu.CompilerParams(
            dimension_semantics=("parallel",),
            vmem_limit_bytes=_vmem_limit_bytes()),
    )(x, w)


def _aggregate_kernel(tk, xw_resident, a_ref, xw_ref, b_ref, o_ref):
    """A_hat @ XW + b, accumulating directly into the revisited f32 output."""
    k = pl.program_id(1)

    @pl.when(k == 0)
    def _():
        o_ref[...] = jnp.broadcast_to(b_ref[...], o_ref.shape)

    if xw_resident:
        start = pl.multiple_of(k * tk, tk)
        xw = xw_ref[pl.ds(start, tk), :]
    else:
        xw = xw_ref[...]
    o_ref[...] += jnp.dot(a_ref[...], xw, preferred_element_type=jnp.float32)


def _aggregate(a_hat, xw, bias, *, tm, tk):
    n_pad = a_hat.shape[0]
    hp = xw.shape[1]
    # Keep XW resident in VMEM (fetched from HBM once for the whole grid)
    # whenever it comfortably fits; otherwise stream a (tk, hp) slab per step.
    xw_resident = (n_pad * hp * 2) <= 8 * 1024 * 1024
    if xw_resident:
        xw_spec = pl.BlockSpec((n_pad, hp), lambda i, k: (0, 0))
    else:
        xw_spec = pl.BlockSpec((tk, hp), lambda i, k: (k, 0))
    # TODO(synk): on v7x consider fp8(e4m3) A_hat and pipeline_mode=pl.Buffered(3)
    # on the A operand once validated against the f32 reference.
    return pl.pallas_call(
        functools.partial(_aggregate_kernel, tk, xw_resident),
        out_shape=jax.ShapeDtypeStruct((n_pad, hp), jnp.float32),
        grid_spec=pltpu.PrefetchScalarGridSpec(
            num_scalar_prefetch=0,
            grid=(n_pad // tm, n_pad // tk),
            in_specs=[pl.BlockSpec((tm, tk), lambda i, k: (i, k)),
                      xw_spec,
                      pl.BlockSpec((1, hp), lambda i, k: (0, 0))],
            out_specs=pl.BlockSpec((tm, hp), lambda i, k: (i, 0)),
        ),
        compiler_params=pltpu.CompilerParams(
            dimension_semantics=("parallel", "arbitrary"),
            vmem_limit_bytes=_vmem_limit_bytes()),
    )(a_hat, xw, bias)


def _gn_stats_kernel(n_valid, tm, h_ref, sum_ref, sq_ref):
    """Pass 1: masked per-feature sum and sum-of-squares over valid rows."""
    i = pl.program_id(0)

    @pl.when(i == 0)
    def _():
        sum_ref[...] = jnp.zeros_like(sum_ref)
        sq_ref[...] = jnp.zeros_like(sq_ref)

    rows = jax.lax.broadcasted_iota(jnp.int32, h_ref.shape, 0) + i * tm
    valid = (rows < n_valid).astype(jnp.float32)
    hv = h_ref[...] * valid
    sum_ref[...] += jnp.sum(hv, axis=0, keepdims=True)
    sq_ref[...] += jnp.sum(hv * hv, axis=0, keepdims=True)


def _gn_stats(h, n_valid, *, tm):
    n_pad, hp = h.shape
    return pl.pallas_call(
        functools.partial(_gn_stats_kernel, n_valid, tm),
        out_shape=(jax.ShapeDtypeStruct((1, hp), jnp.float32),
                   jax.ShapeDtypeStruct((1, hp), jnp.float32)),
        grid_spec=pltpu.PrefetchScalarGridSpec(
            num_scalar_prefetch=0,
            grid=(n_pad // tm,),
            in_specs=[pl.BlockSpec((tm, hp), lambda i: (i, 0))],
            out_specs=(pl.BlockSpec((1, hp), lambda i: (0, 0)),
                       pl.BlockSpec((1, hp), lambda i: (0, 0))),
        ),
        compiler_params=pltpu.CompilerParams(
            dimension_semantics=("arbitrary",),
            vmem_limit_bytes=_vmem_limit_bytes()),
    )(h)


def _gn_norm_matmul_kernel(n_valid, tm, h_ref, sum_ref, sq_ref,
                           gnw_ref, gnb_ref, gna_ref, w_ref, b_ref, o_ref):
    """Pass 2: normalize + ReLU + fused matmul (next-layer X@W or final fc)."""
    i = pl.program_id(0)
    inv_n = 1.0 / float(n_valid)
    mean = sum_ref[...] * inv_n
    ex2 = sq_ref[...] * inv_n
    gna = gna_ref[...]
    # E[(x - a*mean)^2] = E[x^2] - (2a - a^2) * mean^2   (masked moments)
    var = jnp.maximum(ex2 - (2.0 * gna - gna * gna) * mean * mean, 0.0)
    rows = jax.lax.broadcasted_iota(jnp.int32, h_ref.shape, 0) + i * tm
    valid = (rows < n_valid).astype(jnp.float32)
    hn = ((h_ref[...] - gna * mean) * jax.lax.rsqrt(var + 1e-5)
          * gnw_ref[...] + gnb_ref[...])
    act = jnp.maximum(hn, 0.0) * valid        # Dropout(eval) == identity
    res = jnp.dot(act.astype(w_ref.dtype), w_ref[...],
                  preferred_element_type=jnp.float32) + b_ref[...]
    o_ref[...] = res.astype(o_ref.dtype)


def _gn_norm_matmul(h, sums, sqs, gnw, gnb, gna, w, b, n_valid, *, tm, out_dtype):
    n_pad, hp = h.shape
    cols = w.shape[1]
    vec = pl.BlockSpec((1, hp), lambda i: (0, 0))
    return pl.pallas_call(
        functools.partial(_gn_norm_matmul_kernel, n_valid, tm),
        out_shape=jax.ShapeDtypeStruct((n_pad, cols), out_dtype),
        grid_spec=pltpu.PrefetchScalarGridSpec(
            num_scalar_prefetch=0,
            grid=(n_pad // tm,),
            in_specs=[pl.BlockSpec((tm, hp), lambda i: (i, 0)),
                      vec, vec, vec, vec, vec,
                      pl.BlockSpec((hp, cols), lambda i: (0, 0)),
                      pl.BlockSpec((1, cols), lambda i: (0, 0))],
            out_specs=pl.BlockSpec((tm, cols), lambda i: (i, 0)),
        ),
        compiler_params=pltpu.CompilerParams(
            dimension_semantics=("parallel",),
            vmem_limit_bytes=_vmem_limit_bytes()),
    )(h, sums, sqs, gnw, gnb, gna, w, b)


def _tiled_forward(params, x, a_hat_f32, n, hidden, out_dim):
    num_layers = len(params["layers"])
    tm = 512
    n_pad = _round_up(n, tm)
    hp = _round_up(hidden, 128)
    op = _round_up(out_dim, 128)
    fin_p = _round_up(x.shape[1], 128)
    tk = max(t for t in (2048, 1024, 512) if n_pad % t == 0)

    a_hat = _pad2d(a_hat_f32, n_pad, n_pad).astype(jnp.bfloat16)
    x_p = _pad2d(x, n_pad, fin_p).astype(jnp.bfloat16)

    w0_p = _pad2d(params["layers"][0][0], fin_p, hp).astype(jnp.bfloat16)
    xw = _feature_transform(x_p, w0_p, tm=tm)            # only layer 0 needs this

    zeros_hp = jnp.zeros((1, hp), jnp.float32)
    wfc_p = _pad2d(params["fc_w"], hp, op).astype(jnp.bfloat16)
    bfc_p = _pad_row(params["fc_b"], op)

    out = None
    for li, (_, b, gn_w, gn_b, gn_a) in enumerate(params["layers"]):
        agg = _aggregate(a_hat, xw, _pad_row(b, hp), tm=tm, tk=tk)
        sums, sqs = _gn_stats(agg, n, tm=tm)
        gnw_p = _pad_row(gn_w, hp)
        gnb_p = _pad_row(gn_b, hp)
        gna_p = _pad_row(gn_a, hp)
        if li + 1 < num_layers:
            w_next = _pad2d(params["layers"][li + 1][0], hp, hp).astype(jnp.bfloat16)
            xw = _gn_norm_matmul(agg, sums, sqs, gnw_p, gnb_p, gna_p,
                                 w_next, zeros_hp, n, tm=tm,
                                 out_dtype=jnp.bfloat16)
        else:
            out = _gn_norm_matmul(agg, sums, sqs, gnw_p, gnb_p, gna_p,
                                  wfc_p, bfc_p, n, tm=tm,
                                  out_dtype=jnp.float32)
    return out[:n, :out_dim]


# ----------------------------------------------------------------------------
# Model: parameter setup + normalized adjacency + top-level forward
# ----------------------------------------------------------------------------
def init_params(key, input_dim, hidden_dim, output_dim, num_layers):
    params = {"layers": []}
    for i in range(num_layers):
        fin = input_dim if i == 0 else hidden_dim
        key, kw = jax.random.split(key)
        scale = jnp.sqrt(6.0 / (fin + hidden_dim))
        w = jax.random.uniform(kw, (fin, hidden_dim), jnp.float32, -scale, scale)
        b = jnp.zeros((hidden_dim,), jnp.float32)
        gn_w = jnp.ones((hidden_dim,), jnp.float32)    # GraphNorm gamma
        gn_b = jnp.zeros((hidden_dim,), jnp.float32)   # GraphNorm beta
        gn_a = jnp.ones((hidden_dim,), jnp.float32)    # GraphNorm mean-scale
        params["layers"].append((w, b, gn_w, gn_b, gn_a))
    key, kf = jax.random.split(key)
    scale = jnp.sqrt(1.0 / hidden_dim)
    params["fc_w"] = jax.random.uniform(
        kf, (hidden_dim, output_dim), jnp.float32, -scale, scale)
    params["fc_b"] = jnp.zeros((output_dim,), jnp.float32)
    return params


def normalized_adjacency(edge_index, num_nodes):
    """Dense GCN propagation matrix: D^{-1/2} (A + I) D^{-1/2}."""
    src, dst = edge_index
    a = jnp.zeros((num_nodes, num_nodes), jnp.float32)
    a = a.at[dst, src].add(1.0)                        # messages flow src -> dst
    a = a + jnp.eye(num_nodes, dtype=jnp.float32)      # self loops
    deg = jnp.sum(a, axis=1)
    dinv = jnp.where(deg > 0, 1.0 / jnp.sqrt(deg), 0.0)
    return dinv[:, None] * a * dinv[None, :]


@functools.partial(jax.jit, static_argnames=("force_tiled",))
def galactic_gnn_forward(params, x, edge_index, force_tiled=False):
    n = x.shape[0]
    hidden = params["layers"][0][0].shape[1]
    out_dim = params["fc_w"].shape[1]
    num_layers = len(params["layers"])

    # TODO(synk): for very large sparse graphs, replace the dense O(N^2) A_hat
    # with a scalar-prefetch neighbor-gather formulation.
    a_hat = normalized_adjacency(edge_index, n)

    # Decide fused (A_hat resident across all layers) vs tiled path from a
    # generation-aware VMEM budget (v7x: 64 MiB physical; v5e/v6e: 128 MiB).
    n_pad = _round_up(max(n, 8), 256)
    hp = _round_up(hidden, 128)
    fin_p = _round_up(x.shape[1], 128)
    op = _round_up(out_dim, 128)
    est = (n_pad * n_pad * 2                         # A_hat bf16
           + n_pad * fin_p * 2                       # x bf16
           + 3 * n_pad * hp * 4                      # xw / agg / act temporaries
           + n_pad * op * 4                          # output
           + (fin_p * hp + num_layers * hp * hp + hp * op) * 2)
    budget = int(_vmem_limit_bytes() * 0.7)

    if (not force_tiled) and est <= budget:
        return _fused_forward(params, x, a_hat, n, hidden, out_dim)
    return _tiled_forward(params, x, a_hat, n, hidden, out_dim)


# ----------------------------------------------------------------------------
# Demo
# ----------------------------------------------------------------------------
if __name__ == "__main__":
    key = jax.random.PRNGKey(0)

    num_nodes = 16
    input_dim = 8
    hidden_dim = 32
    output_dim = 4
    num_layers = 3
    # dropout probability irrelevant in eval mode

    key, kx, ke = jax.random.split(key, 3)
    x = jax.random.normal(kx, (num_nodes, input_dim), jnp.float32)

    num_edges = 32
    src = jax.random.randint(ke, (num_edges,), 0, num_nodes)
    dst = jax.random.randint(jax.random.fold_in(ke, 1), (num_edges,), 0, num_nodes)
    edge_index = jnp.stack([src, dst], axis=0)

    params = init_params(key, input_dim, hidden_dim, output_dim, num_layers)

    # Fused (A_hat-resident) path.
    out = galactic_gnn_forward(params, x, edge_index)
    jax.block_until_ready(out)
    assert out.shape == (num_nodes, output_dim)
    assert bool(jnp.all(jnp.isfinite(out)))

    # Also exercise the tiled (large-graph) path at the same small shape.
    out_tiled = galactic_gnn_forward(params, x, edge_index, force_tiled=True)
    jax.block_until_ready(out_tiled)
    assert out_tiled.shape == (num_nodes, output_dim)
    assert bool(jnp.all(jnp.isfinite(out_tiled)))

    # Loose bf16-level check against a pure-JAX f32 reference.
    def reference(params, x, edge_index):
        a_hat = normalized_adjacency(edge_index, x.shape[0])
        h = x
        for w, b, gw, gb, ga in params["layers"]:
            h = a_hat @ (h @ w) + b
            mean = jnp.mean(h, axis=0, keepdims=True)
            sh = h - ga * mean
            var = jnp.mean(sh * sh, axis=0, keepdims=True)
            h = jnp.maximum(sh * jax.lax.rsqrt(var + 1e-5) * gw + gb, 0.0)
        return h @ params["fc_w"] + params["fc_b"]

    ref = reference(params, x, edge_index)
    err_fused = float(jnp.max(jnp.abs(out - ref)))
    err_tiled = float(jnp.max(jnp.abs(out_tiled - ref)))
    assert err_fused < 0.25 and err_tiled < 0.25, (err_fused, err_tiled)

    print("KERNEL_OK")
</pallas_src>

<mosaic_0001>
module attributes {stable_mosaic.version = 11 : i64} {
  func.func private @main(%arg0: i32) attributes {dimension_semantics = [#tpu.dimension_semantics<core_parallel>], iteration_bounds = array<i64: 2>, tpu.core_type = #tpu.core_type<sc_scalar_subcore>, window_params = []} {
    return
  }
}

module attributes {stable_mosaic.version = 11 : i64} {
  func.func private @main(%arg0: i32) attributes {dimension_semantics = [#tpu.dimension_semantics<core_parallel>], iteration_bounds = array<i64: 2>, tpu.core_type = #tpu.core_type<sc_scalar_subcore>, window_params = []} {
    return
  }
}

module attributes {stable_mosaic.version = 11 : i64} {
  func.func @_fused_kernel(%arg0: memref<256x128xbf16, #tpu.memory_space<vmem>>, %arg1: memref<256x256xbf16, #tpu.memory_space<vmem>>, %arg2: memref<128x128xbf16, #tpu.memory_space<vmem>>, %arg3: memref<2x128x128xbf16, #tpu.memory_space<vmem>>, %arg4: memref<3x1x128xf32, #tpu.memory_space<vmem>>, %arg5: memref<3x1x128xf32, #tpu.memory_space<vmem>>, %arg6: memref<3x1x128xf32, #tpu.memory_space<vmem>>, %arg7: memref<3x1x128xf32, #tpu.memory_space<vmem>>, %arg8: memref<128x128xbf16, #tpu.memory_space<vmem>>, %arg9: memref<1x128xf32, #tpu.memory_space<vmem>>, %arg10: memref<256x128xf32, #tpu.memory_space<vmem>>) attributes {dimension_semantics = [], scalar_prefetch = 0 : i64, scratch_operands = 0 : i64, tpu.core_type = #tpu.core_type<tc>} {
    %c0 = arith.constant 0 : index
    %c0_0 = arith.constant 0 : index
    %0 = vector.load %arg1[%c0, %c0_0] : memref<256x256xbf16, #tpu.memory_space<vmem>>, vector<256x256xbf16>
    %c0_1 = arith.constant 0 : index
    %c0_2 = arith.constant 0 : index
    %1 = vector.load %arg0[%c0_1, %c0_2] : memref<256x128xbf16, #tpu.memory_space<vmem>>, vector<256x128xbf16>
    %c0_3 = arith.constant 0 : index
    %c0_4 = arith.constant 0 : index
    %2 = vector.load %arg2[%c0_3, %c0_4] : memref<128x128xbf16, #tpu.memory_space<vmem>>, vector<128x128xbf16>
    %cst = arith.constant dense<0.000000e+00> : vector<256x128xf32>
    %3 = tpu.matmul %1, %2, %cst {dimension_numbers = #tpu.dot_dimension_numbers<[1], [0], [0], [1], [0, 0, 1, 1], [], []>} : vector<256x128xbf16>, vector<128x128xbf16>, vector<256x128xf32> -> vector<256x128xf32>
    %4 = arith.truncf %3 : vector<256x128xf32> to vector<256x128xbf16>
    %cst_5 = arith.constant dense<0.000000e+00> : vector<256x128xf32>
    %5 = tpu.matmul %0, %4, %cst_5 {dimension_numbers = #tpu.dot_dimension_numbers<[1], [0], [0], [1], [0, 0, 1, 1], [], []>} : vector<256x256xbf16>, vector<256x128xbf16>, vector<256x128xf32> -> vector<256x128xf32>
    %c0_6 = arith.constant 0 : index
    %c0_7 = arith.constant 0 : index
    %c0_8 = arith.constant 0 : index
    %6 = vector.load %arg4[%c0_6, %c0_7, %c0_8] : memref<3x1x128xf32, #tpu.memory_space<vmem>>, vector<1x1x128xf32>
    %7 = vector.shape_cast %6 : vector<1x1x128xf32> to vector<1x128xf32>
    %8 = vector.broadcast %7 : vector<1x128xf32> to vector<256x128xf32>
    %9 = arith.addf %5, %8 : vector<256x128xf32>
    %c0_9 = arith.constant 0 : index
    %c0_10 = arith.constant 0 : index
    %c0_11 = arith.constant 0 : index
    %10 = vector.load %arg5[%c0_9, %c0_10, %c0_11] : memref<3x1x128xf32, #tpu.memory_space<vmem>>, vector<1x1x128xf32>
    %11 = vector.shape_cast %10 : vector<1x1x128xf32> to vector<1x128xf32>
    %c0_12 = arith.constant 0 : index
    %c0_13 = arith.constant 0 : index
    %c0_14 = arith.constant 0 : index
    %12 = vector.load %arg6[%c0_12, %c0_13, %c0_14] : memref<3x1x128xf32, #tpu.memory_space<vmem>>, vector<1x1x128xf32>
    %13 = vector.shape_cast %12 : vector<1x1x128xf32> to vector<1x128xf32>
    %c0_15 = arith.constant 0 : index
    %c0_16 = arith.constant 0 : index
    %c0_17 = arith.constant 0 : index
    %14 = vector.load %arg7[%c0_15, %c0_16, %c0_17] : memref<3x1x128xf32, #tpu.memory_space<vmem>>, vector<1x1x128xf32>
    %15 = vector.shape_cast %14 : vector<1x1x128xf32> to vector<1x128xf32>
    %16 = tpu.iota {dimensions = array<i32: 0>} : vector<256x128xi32>
    %c16_i32 = arith.constant 16 : i32
    %17 = vector.broadcast %c16_i32 : i32 to vector<256x128xi32>
    %18 = arith.cmpi slt, %16, %17 : vector<256x128xi32>
    %19 = arith.extui %18 : vector<256x128xi1> to vector<256x128xi32>
    %20 = arith.sitofp %19 : vector<256x128xi32> to vector<256x128xf32>
    %21 = arith.mulf %9, %20 : vector<256x128xf32>
    %cst_18 = arith.constant dense<0.000000e+00> : vector<128xf32>
    %22 = vector.multi_reduction <add>, %21, %cst_18 [0] : vector<256x128xf32> to vector<128xf32>
    %23 = vector.shape_cast %22 : vector<128xf32> to vector<1x128xf32>
    %cst_19 = arith.constant 6.250000e-02 : f32
    %24 = vector.broadcast %cst_19 : f32 to vector<1x128xf32>
    %25 = arith.mulf %23, %24 : vector<1x128xf32>
    %26 = arith.mulf %15, %25 : vector<1x128xf32>
    %27 = vector.broadcast %26 : vector<1x128xf32> to vector<256x128xf32>
    %28 = arith.subf %9, %27 : vector<256x128xf32>
    %29 = arith.mulf %28, %20 : vector<256x128xf32>
    %30 = arith.mulf %29, %29 : vector<256x128xf32>
    %cst_20 = arith.constant dense<0.000000e+00> : vector<128xf32>
    %31 = vector.multi_reduction <add>, %30, %cst_20 [0] : vector<256x128xf32> to vector<128xf32>
    %32 = vector.shape_cast %31 : vector<128xf32> to vector<1x128xf32>
    %cst_21 = arith.constant 6.250000e-02 : f32
    %33 = vector.broadcast %cst_21 : f32 to vector<1x128xf32>
    %34 = arith.mulf %32, %33 : vector<1x128xf32>
    %cst_22 = arith.constant 9.99999974E-6 : f32
    %35 = vector.broadcast %cst_22 : f32 to vector<1x128xf32>
    %36 = arith.addf %34, %35 : vector<1x128xf32>
    %37 = math.rsqrt %36 : vector<1x128xf32>
    %38 = vector.broadcast %37 : vector<1x128xf32> to vector<256x128xf32>
    %39 = arith.mulf %29, %38 : vector<256x128xf32>
    %40 = vector.broadcast %11 : vector<1x128xf32> to vector<256x128xf32>
    %41 = arith.mulf %39, %40 : vector<256x128xf32>
    %42 = vector.broadcast %13 : vector<1x128xf32> to vector<256x128xf32>
    %43 = arith.addf %41, %42 : vector<256x128xf32>
    %cst_23 = arith.constant 0.000000e+00 : f32
    %44 = vector.broadcast %cst_23 : f32 to vector<256x128xf32>
    %45 = arith.maximumf %43, %44 : vector<256x128xf32>
    %46 = arith.mulf %45, %20 : vector<256x128xf32>
    %47 = arith.truncf %46 : vector<256x128xf32> to vector<256x128xbf16>
    %c0_24 = arith.constant 0 : index
    %c0_25 = arith.constant 0 : index
    %c0_26 = arith.constant 0 : index
    %48 = vector.load %arg3[%c0_24, %c0_25, %c0_26] : memref<2x128x128xbf16, #tpu.memory_space<vmem>>, vector<1x128x128xbf16>
    %49 = vector.shape_cast %48 : vector<1x128x128xbf16> to vector<128x128xbf16>
    %cst_27 = arith.constant dense<0.000000e+00> : vector<256x128xf32>
    %50 = tpu.matmul %47, %49, %cst_27 {dimension_numbers = #tpu.dot_dimension_numbers<[1], [0], [0], [1], [0, 0, 1, 1], [], []>} : vector<256x128xbf16>, vector<128x128xbf16>, vector<256x128xf32> -> vector<256x128xf32>
    %51 = arith.truncf %50 : vector<256x128xf32> to vector<256x128xbf16>
    %cst_28 = arith.constant dense<0.000000e+00> : vector<256x128xf32>
    %52 = tpu.matmul %0, %51, %cst_28 {dimension_numbers = #tpu.dot_dimension_numbers<[1], [0], [0], [1], [0, 0, 1, 1], [], []>} : vector<256x256xbf16>, vector<256x128xbf16>, vector<256x128xf32> -> vector<256x128xf32>
    %c1 = arith.constant 1 : index
    %c0_29 = arith.constant 0 : index
    %c0_30 = arith.constant 0 : index
    %53 = vector.load %arg4[%c1, %c0_29, %c0_30] : memref<3x1x128xf32, #tpu.memory_space<vmem>>, vector<1x1x128xf32>
    %54 = vector.shape_cast %53 : vector<1x1x128xf32> to vector<1x128xf32>
    %55 = vector.broadcast %54 : vector<1x128xf32> to vector<256x128xf32>
    %56 = arith.addf %52, %55 : vector<256x128xf32>
    %c1_31 = arith.constant 1 : index
    %c0_32 = arith.constant 0 : index
    %c0_33 = arith.constant 0 : index
    %57 = vector.load %arg5[%c1_31, %c0_32, %c0_33] : memref<3x1x128xf32, #tpu.memory_space<vmem>>, vector<1x1x128xf32>
    %58 = vector.shape_cast %57 : vector<1x1x128xf32> to vector<1x128xf32>
    %c1_34 = arith.constant 1 : index
    %c0_35 = arith.constant 0 : index
    %c0_36 = arith.constant 0 : index
    %59 = vector.load %arg6[%c1_34, %c0_35, %c0_36] : memref<3x1x128xf32, #tpu.memory_space<vmem>>, vector<1x1x128xf32>
    %60 = vector.shape_cast %59 : vector<1x1x128xf32> to vector<1x128xf32>
    %c1_37 = arith.constant 1 : index
    %c0_38 = arith.constant 0 : index
    %c0_39 = arith.constant 0 : index
    %61 = vector.load %arg7[%c1_37, %c0_38, %c0_39] : memref<3x1x128xf32, #tpu.memory_space<vmem>>, vector<1x1x128xf32>
    %62 = vector.shape_cast %61 : vector<1x1x128xf32> to vector<1x128xf32>
    %63 = tpu.iota {dimensions = array<i32: 0>} : vector<256x128xi32>
    %c16_i32_40 = arith.constant 16 : i32
    %64 = vector.broadcast %c16_i32_40 : i32 to vector<256x128xi32>
    %65 = arith.cmpi slt, %63, %64 : vector<256x128xi32>
    %66 = arith.extui %65 : vector<256x128xi1> to vector<256x128xi32>
    %67 = arith.sitofp %66 : vector<256x128xi32> to vector<256x128xf32>
    %68 = arith.mulf %56, %67 : vector<256x128xf32>
    %cst_41 = arith.constant dense<0.000000e+00> : vector<128xf32>
    %69 = vector.multi_reduction <add>, %68, %cst_41 [0] : vector<256x128xf32> to vector<128xf32>
    %70 = vector.shape_cast %69 : vector<128xf32> to vector<1x128xf32>
    %cst_42 = arith.constant 6.250000e-02 : f32
    %71 = vector.broadcast %cst_42 : f32 to vector<1x128xf32>
    %72 = arith.mulf %70, %71 : vector<1x128xf32>
    %73 = arith.mulf %62, %72 : vector<1x128xf32>
    %74 = vector.broadcast %73 : vector<1x128xf32> to vector<256x128xf32>
    %75 = arith.subf %56, %74 : vector<256x128xf32>
    %76 = arith.mulf %75, %67 : vector<256x128xf32>
    %77 = arith.mulf %76, %76 : vector<256x128xf32>
    %cst_43 = arith.constant dense<0.000000e+00> : vector<128xf32>
    %78 = vector.multi_reduction <add>, %77, %cst_43 [0] : vector<256x128xf32> to vector<128xf32>
    %79 = vector.shape_cast %78 : vector<128xf32> to vector<1x128xf32>
    %cst_44 = arith.constant 6.250000e-02 : f32
    %80 = vector.broadcast %cst_44 : f32 to vector<1x128xf32>
    %81 = arith.mulf %79, %80 : vector<1x128xf32>
    %cst_45 = arith.constant 9.99999974E-6 : f32
    %82 = vector.broadcast %cst_45 : f32 to vector<1x128xf32>
    %83 = arith.addf %81, %82 : vector<1x128xf32>
    %84 = math.rsqrt %83 : vector<1x128xf32>
    %85 = vector.broadcast %84 : vector<1x128xf32> to vector<256x128xf32>
    %86 = arith.mulf %76, %85 : vector<256x128xf32>
    %87 = vector.broadcast %58 : vector<1x128xf32> to vector<256x128xf32>
    %88 = arith.mulf %86, %87 : vector<256x128xf32>
    %89 = vector.broadcast %60 : vector<1x128xf32> to vector<256x128xf32>
    %90 = arith.addf %88, %89 : vector<256x128xf32>
    %cst_46 = arith.constant 0.000000e+00 : f32
    %91 = vector.broadcast %cst_46 : f32 to vector<256x128xf32>
    %92 = arith.maximumf %90, %91 : vector<256x128xf32>
    %93 = arith.mulf %92, %67 : vector<256x128xf32>
    %94 = arith.truncf %93 : vector<256x128xf32> to vector<256x128xbf16>
    %c1_47 = arith.constant 1 : index
    %c0_48 = arith.constant 0 : index
    %c0_49 = arith.constant 0 : index
    %95 = vector.load %arg3[%c1_47, %c0_48, %c0_49] : memref<2x128x128xbf16, #tpu.memory_space<vmem>>, vector<1x128x128xbf16>
    %96 = vector.shape_cast %95 : vector<1x128x128xbf16> to vector<128x128xbf16>
    %cst_50 = arith.constant dense<0.000000e+00> : vector<256x128xf32>
    %97 = tpu.matmul %94, %96, %cst_50 {dimension_numbers = #tpu.dot_dimension_numbers<[1], [0], [0], [1], [0, 0, 1, 1], [], []>} : vector<256x128xbf16>, vector<128x128xbf16>, vector<256x128xf32> -> vector<256x128xf32>
    %98 = arith.truncf %97 : vector<256x128xf32> to vector<256x128xbf16>
    %cst_51 = arith.constant dense<0.000000e+00> : vector<256x128xf32>
    %99 = tpu.matmul %0, %98, %cst_51 {dimension_numbers = #tpu.dot_dimension_numbers<[1], [0], [0], [1], [0, 0, 1, 1], [], []>} : vector<256x256xbf16>, vector<256x128xbf16>, vector<256x128xf32> -> vector<256x128xf32>
    %c2 = arith.constant 2 : index
    %c0_52 = arith.constant 0 : index
    %c0_53 = arith.constant 0 : index
    %100 = vector.load %arg4[%c2, %c0_52, %c0_53] : memref<3x1x128xf32, #tpu.memory_space<vmem>>, vector<1x1x128xf32>
    %101 = vector.shape_cast %100 : vector<1x1x128xf32> to vector<1x128xf32>
    %102 = vector.broadcast %101 : vector<1x128xf32> to vector<256x128xf32>
    %103 = arith.addf %99, %102 : vector<256x128xf32>
    %c2_54 = arith.constant 2 : index
    %c0_55 = arith.constant 0 : index
    %c0_56 = arith.constant 0 : index
    %104 = vector.load %arg5[%c2_54, %c0_55, %c0_56] : memref<3x1x128xf32, #tpu.memory_space<vmem>>, vector<1x1x128xf32>
    %105 = vector.shape_cast %104 : vector<1x1x128xf32> to vector<1x128xf32>
    %c2_57 = arith.constant 2 : index
    %c0_58 = arith.constant 0 : index
    %c0_59 = arith.constant 0 : index
    %106 = vector.load %arg6[%c2_57, %c0_58, %c0_59] : memref<3x1x128xf32, #tpu.memory_space<vmem>>, vector<1x1x128xf32>
    %107 = vector.shape_cast %106 : vector<1x1x128xf32> to vector<1x128xf32>
    %c2_60 = arith.constant 2 : index
    %c0_61 = arith.constant 0 : index
    %c0_62 = arith.constant 0 : index
    %108 = vector.load %arg7[%c2_60, %c0_61, %c0_62] : memref<3x1x128xf32, #tpu.memory_space<vmem>>, vector<1x1x128xf32>
    %109 = vector.shape_cast %108 : vector<1x1x128xf32> to vector<1x128xf32>
    %110 = tpu.iota {dimensions = array<i32: 0>} : vector<256x128xi32>
    %c16_i32_63 = arith.constant 16 : i32
    %111 = vector.broadcast %c16_i32_63 : i32 to vector<256x128xi32>
    %112 = arith.cmpi slt, %110, %111 : vector<256x128xi32>
    %113 = arith.extui %112 : vector<256x128xi1> to vector<256x128xi32>
    %114 = arith.sitofp %113 : vector<256x128xi32> to vector<256x128xf32>
    %115 = arith.mulf %103, %114 : vector<256x128xf32>
    %cst_64 = arith.constant dense<0.000000e+00> : vector<128xf32>
    %116 = vector.multi_reduction <add>, %115, %cst_64 [0] : vector<256x128xf32> to vector<128xf32>
    %117 = vector.shape_cast %116 : vector<128xf32> to vector<1x128xf32>
    %cst_65 = arith.constant 6.250000e-02 : f32
    %118 = vector.broadcast %cst_65 : f32 to vector<1x128xf32>
    %119 = arith.mulf %117, %118 : vector<1x128xf32>
    %120 = arith.mulf %109, %119 : vector<1x128xf32>
    %121 = vector.broadcast %120 : vector<1x128xf32> to vector<256x128xf32>
    %122 = arith.subf %103, %121 : vector<256x128xf32>
    %123 = arith.mulf %122, %114 : vector<256x128xf32>
    %124 = arith.mulf %123, %123 : vector<256x128xf32>
    %cst_66 = arith.constant dense<0.000000e+00> : vector<128xf32>
    %125 = vector.multi_reduction <add>, %124, %cst_66 [0] : vector<256x128xf32> to vector<128xf32>
    %126 = vector.shape_cast %125 : vector<128xf32> to vector<1x128xf32>
    %cst_67 = arith.constant 6.250000e-02 : f32
    %127 = vector.broadcast %cst_67 : f32 to vector<1x128xf32>
    %128 = arith.mulf %126, %127 : vector<1x128xf32>
    %cst_68 = arith.constant 9.99999974E-6 : f32
    %129 = vector.broadcast %cst_68 : f32 to vector<1x128xf32>
    %130 = arith.addf %128, %129 : vector<1x128xf32>
    %131 = math.rsqrt %130 : vector<1x128xf32>
    %132 = vector.broadcast %131 : vector<1x128xf32> to vector<256x128xf32>
    %133 = arith.mulf %123, %132 : vector<256x128xf32>
    %134 = vector.broadcast %105 : vector<1x128xf32> to vector<256x128xf32>
    %135 = arith.mulf %133, %134 : vector<256x128xf32>
    %136 = vector.broadcast %107 : vector<1x128xf32> to vector<256x128xf32>
    %137 = arith.addf %135, %136 : vector<256x128xf32>
    %cst_69 = arith.constant 0.000000e+00 : f32
    %138 = vector.broadcast %cst_69 : f32 to vector<256x128xf32>
    %139 = arith.maximumf %137, %138 : vector<256x128xf32>
    %140 = arith.mulf %139, %114 : vector<256x128xf32>
    %141 = arith.truncf %140 : vector<256x128xf32> to vector<256x128xbf16>
    %c0_70 = arith.constant 0 : index
    %c0_71 = arith.constant 0 : index
    %142 = vector.load %arg8[%c0_70, %c0_71] : memref<128x128xbf16, #tpu.memory_space<vmem>>, vector<128x128xbf16>
    %cst_72 = arith.constant dense<0.000000e+00> : vector<256x128xf32>
    %143 = tpu.matmul %141, %142, %cst_72 {dimension_numbers = #tpu.dot_dimension_numbers<[1], [0], [0], [1], [0, 0, 1, 1], [], []>} : vector<256x128xbf16>, vector<128x128xbf16>, vector<256x128xf32> -> vector<256x128xf32>
    %c0_73 = arith.constant 0 : index
    %c0_74 = arith.constant 0 : index
    %144 = vector.load %arg9[%c0_73, %c0_74] : memref<1x128xf32, #tpu.memory_space<vmem>>, vector<1x128xf32>
    %145 = vector.broadcast %144 : vector<1x128xf32> to vector<256x128xf32>
    %146 = arith.addf %143, %145 : vector<256x128xf32>
    %c0_75 = arith.constant 0 : index
    %c0_76 = arith.constant 0 : index
    %147 = vector.load %arg10[%c0_75, %c0_76] : memref<256x128xf32, #tpu.memory_space<vmem>>, vector<256x128xf32>
    tpu.vector_store %arg10[%c0_75, %c0_76], %146 {strides = array<i32>} : memref<256x128xf32, #tpu.memory_space<vmem>>, vector<256x128xf32>,
    return
  }
}

</mosaic_0001>

<llo_original>
// kernel: galactic_gnn_forward.1
$region0: #{galactic_gnn_forward.1}
  #allocation0 [shape = 'u32[]', space=smem, size = 0x4, offset = 0x4, fixed_abs, tag = 'smem constant byte address 0x4 - core index']
  #allocation1 [shape = 'u32[144,128]{1,0:T(1,128)}', space=vmem, size = 0x12000, scoped, tag = 'internal scratch']
  %s0 = inlined_call_operand.vmem [shape: bf16[256,128], index: 0, kind: input, shape index: {}]
  %s1 = inlined_call_operand.vmem [shape: bf16[256,256], index: 1, kind: input, shape index: {}]
  %s2 = inlined_call_operand.vmem [shape: bf16[128,128], index: 2, kind: input, shape index: {}]
  %s3 = inlined_call_operand.vmem [shape: bf16[2,128,128], index: 3, kind: input, shape index: {}]
  %s4 = inlined_call_operand.vmem [shape: f32[3,1,128], index: 4, kind: input, shape index: {}]
  %s5 = inlined_call_operand.vmem [shape: f32[3,1,128], index: 5, kind: input, shape index: {}]
  %s6 = inlined_call_operand.vmem [shape: f32[3,1,128], index: 6, kind: input, shape index: {}]
  %s7 = inlined_call_operand.vmem [shape: f32[3,1,128], index: 7, kind: input, shape index: {}]
  %s8 = inlined_call_operand.vmem [shape: bf16[128,128], index: 8, kind: input, shape index: {}]
  %s9 = inlined_call_operand.vmem [shape: f32[1,128], index: 9, kind: input, shape index: {}]
  %s10 = inlined_call_operand.vmem [shape: f32[256,128], index: 10, kind: output, shape index: {}]
  %s11 = sld [smem:[#allocation0]]
  $region50: #{galactic_gnn_forward.1} parent=0
    _
  %s13 = ssub.s32 1, %s11
  %s14 = scalar_select 0, %s13, %s11
  // Predicated region
  $region2: #{galactic_gnn_forward.1} parent=0 // pred_check
    _
  $region3: #{galactic_gnn_forward.1} parent=0 // pred_check_branch
    %16 = sbr.rel (0) target = $region5
  $region4: #{galactic_gnn_forward.1} parent=0 // pred_region
    _
  $region5: #{galactic_gnn_forward.1} parent=0 // pred_fallthru
    _
  // Predicated region
  $region6: #{galactic_gnn_forward.1} parent=0 // pred_check
    _
  $region7: #{galactic_gnn_forward.1} parent=0 // pred_check_branch
    %18 = sbr.rel (0) target = $region9
  $region8: #{galactic_gnn_forward.1} parent=0 // pred_region
    _
  $region9: #{galactic_gnn_forward.1} parent=0 // pred_fallthru
    _
  // Predicated region
  $region10: #{galactic_gnn_forward.1} parent=0 // pred_check
    _
  $region11: #{galactic_gnn_forward.1} parent=0 // pred_check_branch
    %20 = sbr.rel (0) target = $region13
  $region12: #{galactic_gnn_forward.1} parent=0 // pred_region
    _
  $region13: #{galactic_gnn_forward.1} parent=0 // pred_fallthru
    _
  // Predicated region
  $region14: #{galactic_gnn_forward.1} parent=0 // pred_check
    _
  $region15: #{galactic_gnn_forward.1} parent=0 // pred_check_branch
    %22 = sbr.rel (0) target = $region17
  $region16: #{galactic_gnn_forward.1} parent=0 // pred_region
    _
  $region17: #{galactic_gnn_forward.1} parent=0 // pred_fallthru
    _
  // Predicated region
  $region18: #{galactic_gnn_forward.1} parent=0 // pred_check
    _
  $region19: #{galactic_gnn_forward.1} parent=0 // pred_check_branch
    %24 = sbr.rel (0) target = $region21
  $region20: #{galactic_gnn_forward.1} parent=0 // pred_region
    _
  $region21: #{galactic_gnn_forward.1} parent=0 // pred_fallthru
    _
  // Predicated region
  $region22: #{galactic_gnn_forward.1} parent=0 // pred_check
    _
  $region23: #{galactic_gnn_forward.1} parent=0 // pred_check_branch
    %26 = sbr.rel (0) target = $region25
  $region24: #{galactic_gnn_forward.1} parent=0 // pred_region
    _
  $region25: #{galactic_gnn_forward.1} parent=0 // pred_fallthru
    _
  // Predicated region
  $region26: #{galactic_gnn_forward.1} parent=0 // pred_check
    _
  $region27: #{galactic_gnn_forward.1} parent=0 // pred_check_branch
    %28 = sbr.rel (0) target = $region29
  $region28: #{galactic_gnn_forward.1} parent=0 // pred_region
    _
  $region29: #{galactic_gnn_forward.1} parent=0 // pred_fallthru
    _
  // Predicated region
  $region30: #{galactic_gnn_forward.1} parent=0 // pred_check
    _
  $region31: #{galactic_gnn_forward.1} parent=0 // pred_check_branch
    %30 = sbr.rel (0) target = $region33
  $region32: #{galactic_gnn_forward.1} parent=0 // pred_region
    _
  $region33: #{galactic_gnn_forward.1} parent=0 // pred_fallthru
    _
  // Predicated region
  $region34: #{galactic_gnn_forward.1} parent=0 // pred_check
    _
  $region35: #{galactic_gnn_forward.1} parent=0 // pred_check_branch
    %32 = sbr.rel (0) target = $region37
  $region36: #{galactic_gnn_forward.1} parent=0 // pred_region
    _
  $region37: #{galactic_gnn_forward.1} parent=0 // pred_fallthru
    _
  // Predicated region
  $region38: #{galactic_gnn_forward.1} parent=0 // pred_check
    _
  $region39: #{galactic_gnn_forward.1} parent=0 // pred_check_branch
    %34 = sbr.rel (0) target = $region41
  $region40: #{galactic_gnn_forward.1} parent=0 // pred_region
    _
  $region41: #{galactic_gnn_forward.1} parent=0 // pred_fallthru
    _
  %v36 = vld [vmem:[%s1] sm:$0xff]
  %v37 = vld [vmem:[%s1 + $0x8] sm:$0xff]
  %v38 = vld [vmem:[%s1 + $0x10] sm:$0xff]
  %v39 = vld [vmem:[%s1 + $0x18] sm:$0xff]
  %v40 = vld [vmem:[%s1 + $0x20] sm:$0xff]
  %v41 = vld [vmem:[%s1 + $0x28] sm:$0xff]
  %v42 = vld [vmem:[%s1 + $0x30] sm:$0xff]
  %v43 = vld [vmem:[%s1 + $0x38] sm:$0xff]
  %v44 = vld [vmem:[%s1 + $0x40] sm:$0xff]
  %v45 = vld [vmem:[%s1 + $0x48] sm:$0xff]
  %v46 = vld [vmem:[%s1 + $0x50] sm:$0xff]
  %v47 = vld [vmem:[%s1 + $0x58] sm:$0xff]
  %v48 = vld [vmem:[%s1 + $0x60] sm:$0xff]
  %v49 = vld [vmem:[%s1 + $0x68] sm:$0xff]
  %v50 = vld [vmem:[%s1 + $0x70] sm:$0xff]
  %v51 = vld [vmem:[%s1 + $0x78] sm:$0xff]
  %v52 = vld [vmem:[%s1 + $0x80] sm:$0xff]
  %v53 = vld [vmem:[%s1 + $0x88] sm:$0xff]
  %v54 = vld [vmem:[%s1 + $0x90] sm:$0xff]
  %v55 = vld [vmem:[%s1 + $0x98] sm:$0xff]
  %v56 = vld [vmem:[%s1 + $0xa0] sm:$0xff]
  %v57 = vld [vmem:[%s1 + $0xa8] sm:$0xff]
  %v58 = vld [vmem:[%s1 + $0xb0] sm:$0xff]
  %v59 = vld [vmem:[%s1 + $0xb8] sm:$0xff]
  %v60 = vld [vmem:[%s1 + $0xc0] sm:$0xff]
  %v61 = vld [vmem:[%s1 + $0xc8] sm:$0xff]
  %v62 = vld [vmem:[%s1 + $0xd0] sm:$0xff]
  %v63 = vld [vmem:[%s1 + $0xd8] sm:$0xff]
  %v64 = vld [vmem:[%s1 + $0xe0] sm:$0xff]
  %v65 = vld [vmem:[%s1 + $0xe8] sm:$0xff]
  %v66 = vld [vmem:[%s1 + $0xf0] sm:$0xff]
  %v67 = vld [vmem:[%s1 + $0xf8] sm:$0xff]
  %v68 = vld [vmem:[%s0] sm:$0xf]
  %v69 = vld [vmem:[%s0 + $0x4] sm:$0xf]
  %v70 = vld [vmem:[%s0 + $0x8] sm:$0xf]
  %v71 = vld [vmem:[%s0 + $0xc] sm:$0xf]
  %v72 = vld [vmem:[%s0 + $0x10] sm:$0xf]
  %v73 = vld [vmem:[%s0 + $0x14] sm:$0xf]
  %v74 = vld [vmem:[%s0 + $0x18] sm:$0xf]
  %v75 = vld [vmem:[%s0 + $0x1c] sm:$0xf]
  %v76 = vld [vmem:[%s0 + $0x20] sm:$0xf]
  %v77 = vld [vmem:[%s0 + $0x24] sm:$0xf]
  %v78 = vld [vmem:[%s0 + $0x28] sm:$0xf]
  %v79 = vld [vmem:[%s0 + $0x2c] sm:$0xf]
  %v80 = vld [vmem:[%s0 + $0x30] sm:$0xf]
  %v81 = vld [vmem:[%s0 + $0x34] sm:$0xf]
  %v82 = vld [vmem:[%s0 + $0x38] sm:$0xf]
  %v83 = vld [vmem:[%s0 + $0x3c] sm:$0xf]
  %v84 = vld [vmem:[%s0 + $0x40] sm:$0xf]
  %v85 = vld [vmem:[%s0 + $0x44] sm:$0xf]
  %v86 = vld [vmem:[%s0 + $0x48] sm:$0xf]
  %v87 = vld [vmem:[%s0 + $0x4c] sm:$0xf]
  %v88 = vld [vmem:[%s0 + $0x50] sm:$0xf]
  %v89 = vld [vmem:[%s0 + $0x54] sm:$0xf]
  %v90 = vld [vmem:[%s0 + $0x58] sm:$0xf]
  %v91 = vld [vmem:[%s0 + $0x5c] sm:$0xf]
  %v92 = vld [vmem:[%s0 + $0x60] sm:$0xf]
  %v93 = vld [vmem:[%s0 + $0x64] sm:$0xf]
  %v94 = vld [vmem:[%s0 + $0x68] sm:$0xf]
  %v95 = vld [vmem:[%s0 + $0x6c] sm:$0xf]
  %v96 = vld [vmem:[%s0 + $0x70] sm:$0xf]
  %v97 = vld [vmem:[%s0 + $0x74] sm:$0xf]
  %v98 = vld [vmem:[%s0 + $0x78] sm:$0xf]
  %v99 = vld [vmem:[%s0 + $0x7c] sm:$0xf]
  %v100 = vld [vmem:[%s2] sm:$0xf]
  %v101 = vld [vmem:[%s2 + $0x4] sm:$0xf]
  %v102 = vld [vmem:[%s2 + $0x8] sm:$0xf]
  %v103 = vld [vmem:[%s2 + $0xc] sm:$0xf]
  %v104 = vld [vmem:[%s2 + $0x10] sm:$0xf]
  %v105 = vld [vmem:[%s2 + $0x14] sm:$0xf]
  %v106 = vld [vmem:[%s2 + $0x18] sm:$0xf]
  %v107 = vld [vmem:[%s2 + $0x1c] sm:$0xf]
  %v108 = vld [vmem:[%s2 + $0x20] sm:$0xf]
  %v109 = vld [vmem:[%s2 + $0x24] sm:$0xf]
  %v110 = vld [vmem:[%s2 + $0x28] sm:$0xf]
  %v111 = vld [vmem:[%s2 + $0x2c] sm:$0xf]
  %v112 = vld [vmem:[%s2 + $0x30] sm:$0xf]
  %v113 = vld [vmem:[%s2 + $0x34] sm:$0xf]
  %v114 = vld [vmem:[%s2 + $0x38] sm:$0xf]
  %v115 = vld [vmem:[%s2 + $0x3c] sm:$0xf]
  %v148 = vunpack.c.l.b16 %v68
  %v149 = vunpack.c.l.b16 %v69
  %v150 = vunpack.c.l.b16 %v70
  %v151 = vunpack.c.l.b16 %v71
  %v152 = vunpack.c.l.b16 %v72
  %v153 = vunpack.c.l.b16 %v73
  %v154 = vunpack.c.l.b16 %v74
  %v155 = vunpack.c.l.b16 %v75
  %v156 = vunpack.c.l.b16 %v76
  %v157 = vunpack.c.l.b16 %v77
  %v158 = vunpack.c.l.b16 %v78
  %v159 = vunpack.c.l.b16 %v79
  %v160 = vunpack.c.l.b16 %v80
  %v161 = vunpack.c.l.b16 %v81
  %v162 = vunpack.c.l.b16 %v82
  %v163 = vunpack.c.l.b16 %v83
  %v164 = vunpack.c.l.b16 %v84
  %v165 = vunpack.c.l.b16 %v85
  %v166 = vunpack.c.l.b16 %v86
  %v167 = vunpack.c.l.b16 %v87
  %v168 = vunpack.c.l.b16 %v88
  %v169 = vunpack.c.l.b16 %v89
  %v170 = vunpack.c.l.b16 %v90
  %v171 = vunpack.c.l.b16 %v91
  %v172 = vunpack.c.l.b16 %v92
  %v173 = vunpack.c.l.b16 %v93
  %v174 = vunpack.c.l.b16 %v94
  %v175 = vunpack.c.l.b16 %v95
  %v176 = vunpack.c.l.b16 %v96
  %v177 = vunpack.c.l.b16 %v97
  %v178 = vunpack.c.l.b16 %v98
  %v179 = vunpack.c.l.b16 %v99
  %v180 = vpack.c.b16 %v149, %v148
  %v181 = vpack.c.b16 %v151, %v150
  %v182 = vpack.c.b16 %v153, %v152
  %v183 = vpack.c.b16 %v155, %v154
  %v184 = vpack.c.b16 %v157, %v156
  %v185 = vpack.c.b16 %v159, %v158
  %v186 = vpack.c.b16 %v161, %v160
  %v187 = vpack.c.b16 %v163, %v162
  %v188 = vpack.c.b16 %v165, %v164
  %v189 = vpack.c.b16 %v167, %v166
  %v190 = vpack.c.b16 %v169, %v168
  %v191 = vpack.c.b16 %v171, %v170
  %v192 = vpack.c.b16 %v173, %v172
  %v193 = vpack.c.b16 %v175, %v174
  %v194 = vpack.c.b16 %v177, %v176
  %v195 = vpack.c.b16 %v179, %v178
  %v228 = vunpack.c.l.b16 %v100
  %v229 = vunpack.c.l.b16 %v101
  %v230 = vunpack.c.l.b16 %v102
  %v231 = vunpack.c.l.b16 %v103
  %v232 = vunpack.c.l.b16 %v104
  %v233 = vunpack.c.l.b16 %v105
  %v234 = vunpack.c.l.b16 %v106
  %v235 = vunpack.c.l.b16 %v107
  %v236 = vunpack.c.l.b16 %v108
  %v237 = vunpack.c.l.b16 %v109
  %v238 = vunpack.c.l.b16 %v110
  %v239 = vunpack.c.l.b16 %v111
  %v240 = vunpack.c.l.b16 %v112
  %v241 = vunpack.c.l.b16 %v113
  %v242 = vunpack.c.l.b16 %v114
  %v243 = vunpack.c.l.b16 %v115
  %v244 = vpack.c.b16 %v229, %v228
  %v245 = vpack.c.b16 %v231, %v230
  %v246 = vpack.c.b16 %v233, %v232
  %v247 = vpack.c.b16 %v235, %v234
  %v248 = vpack.c.b16 %v237, %v236
  %v249 = vpack.c.b16 %v239, %v238
  %v250 = vpack.c.b16 %v241, %v240
  %v251 = vpack.c.b16 %v243, %v242
  %260 = vmatprep.subr.bf16.mxu0 0
  %261 = vmatpush1.bf16.msra.mxu0 %v244
  %262 = vmatprep.subr.bf16.mxu0 0
  %263 = vmatpush1.bf16.msra.mxu0 %v245
  %264 = vmatprep.subr.bf16.mxu0 0
  %265 = vmatpush1.bf16.msra.mxu0 %v246
  %266 = vmatprep.subr.bf16.mxu0 0
  %267 = vmatpush1.bf16.msra.mxu0 %v247
  %268 = vmatprep.subr.bf16.mxu0 0
  %269 = vmatpush1.bf16.msra.mxu0 %v248
  %270 = vmatprep.subr.bf16.mxu0 0
  %271 = vmatpush1.bf16.msra.mxu0 %v249
  %272 = vmatprep.subr.bf16.mxu0 0
  %273 = vmatpush1.bf16.msra.mxu0 %v250
  %274 = vmatprep.subr.bf16.mxu0 0
  %275 = vmatpush1.bf16.msra.mxu0 %v251
  %276 = vmatprep.subr.bf16.mxu0 0
  %277 = vmatpush1.bf16.msra.mxu0 0
  %278 = vmatprep.subr.bf16.mxu0 0
  %279 = vmatpush1.bf16.msra.mxu0 0
  %280 = vmatprep.subr.bf16.mxu0 0
  %281 = vmatpush1.bf16.msra.mxu0 0
  %282 = vmatprep.subr.bf16.mxu0 0
  %283 = vmatpush1.bf16.msra.mxu0 0
  %284 = vmatprep.subr.bf16.mxu0 0
  %285 = vmatpush1.bf16.msra.mxu0 0
  %286 = vmatprep.subr.bf16.mxu0 0
  %287 = vmatpush1.bf16.msra.mxu0 0
  %288 = vmatprep.subr.bf16.mxu0 0
  %289 = vmatpush1.bf16.msra.mxu0 0
  %290 = vmatprep.subr.bf16.mxu0 0
  %291 = vmatpush1.bf16.msra.mxu0 0
  %292 = vmatprep.mubr.bf16.mxu0 0
  %293 = vmatmul.mubr.bf16.gmra.mrb[0].mxu0 %v180
  %v294 = vpop.f32.mrb[0].mxu0
  %v295 = vadd.f32 0.0, %v294
  %v296 = vpop.f32.mrb[0].mxu0
  %v297 = vpop.f32.mrb[0].mxu0
  %v298 = vadd.f32 0.0, %v297
  %v299 = vpop.f32.mrb[0].mxu0
  %300 = vmatprep.mubr.bf16.mxu0 0
  %301 = vmatmul.mubr.bf16.gmra.mrb[0].mxu0 %v181
  %v302 = vpop.f32.mrb[0].mxu0
  %v303 = vadd.f32 0.0, %v302
  %v304 = vpop.f32.mrb[0].mxu0
  %v305 = vpop.f32.mrb[0].mxu0
  %v306 = vadd.f32 0.0, %v305
  %v307 = vpop.f32.mrb[0].mxu0
  %308 = vmatprep.mubr.bf16.mxu0 0
  %309 = vmatmul.mubr.bf16.gmra.mrb[0].mxu0 %v182
  %v310 = vpop.f32.mrb[0].mxu0
  %v311 = vadd.f32 0.0, %v310
  %v312 = vpop.f32.mrb[0].mxu0
  %v313 = vpop.f32.mrb[0].mxu0
  %v314 = vadd.f32 0.0, %v313
  %v315 = vpop.f32.mrb[0].mxu0
  %316 = vmatprep.mubr.bf16.mxu0 0
  %317 = vmatmul.mubr.bf16.gmra.mrb[0].mxu0 %v183
  %v318 = vpop.f32.mrb[0].mxu0
  %v319 = vadd.f32 0.0, %v318
  %v320 = vpop.f32.mrb[0].mxu0
  %v321 = vpop.f32.mrb[0].mxu0
  %v322 = vadd.f32 0.0, %v321
  %v323 = vpop.f32.mrb[0].mxu0
  %324 = vmatprep.mubr.bf16.mxu0 0
  %325 = vmatmul.mubr.bf16.gmra.mrb[0].mxu0 %v184
  %v326 = vpop.f32.mrb[0].mxu0
  %v327 = vadd.f32 0.0, %v326
  %v328 = vpop.f32.mrb[0].mxu0
  %v329 = vpop.f32.mrb[0].mxu0
  %v330 = vadd.f32 0.0, %v329
  %v331 = vpop.f32.mrb[0].mxu0
  %332 = vmatprep.mubr.bf16.mxu0 0
  %333 = vmatmul.mubr.bf16.gmra.mrb[0].mxu0 %v185
  %v334 = vpop.f32.mrb[0].mxu0
  %v335 = vadd.f32 0.0, %v334
  %v336 = vpop.f32.mrb[0].mxu0
  %v337 = vpop.f32.mrb[0].mxu0
  %v338 = vadd.f32 0.0, %v337
  %v339 = vpop.f32.mrb[0].mxu0
  %340 = vmatprep.mubr.bf16.mxu0 0
  %341 = vmatmul.mubr.bf16.gmra.mrb[0].mxu0 %v186
  %v342 = vpop.f32.mrb[0].mxu0
  %v343 = vadd.f32 0.0, %v342
  %v344 = vpop.f32.mrb[0].mxu0
  %v345 = vpop.f32.mrb[0].mxu0
  %v346 = vadd.f32 0.0, %v345
  %v347 = vpop.f32.mrb[0].mxu0
  %348 = vmatprep.mubr.bf16.mxu0 0
  %349 = vmatmul.mubr.bf16.gmra.mrb[0].mxu0 %v187
  %v350 = vpop.f32.mrb[0].mxu0
  %v351 = vadd.f32 0.0, %v350
  %v352 = vpop.f32.mrb[0].mxu0
  %v353 = vpop.f32.mrb[0].mxu0
  %v354 = vadd.f32 0.0, %v353
  %v355 = vpop.f32.mrb[0].mxu0
  %356 = vmatprep.mubr.bf16.mxu0 0
  %357 = vmatmul.mubr.bf16.gmra.mrb[0].mxu0 %v188
  %v358 = vpop.f32.mrb[0].mxu0
  %v359 = vadd.f32 0.0, %v358
  %v360 = vpop.f32.mrb[0].mxu0
  %v361 = vpop.f32.mrb[0].mxu0
  %v362 = vadd.f32 0.0, %v361
  %v363 = vpop.f32.mrb[0].mxu0
  %364 = vmatprep.mubr.bf16.mxu0 0
  %365 = vmatmul.mubr.bf16.gmra.mrb[0].mxu0 %v189
  %v366 = vpop.f32.mrb[0].mxu0
  %v367 = vadd.f32 0.0, %v366
  %v368 = vpop.f32.mrb[0].mxu0
  %v369 = vpop.f32.mrb[0].mxu0
  %v370 = vadd.f32 0.0, %v369
  %v371 = vpop.f32.mrb[0].mxu0
  %372 = vmatprep.mubr.bf16.mxu0 0
  %373 = vmatmul.mubr.bf16.gmra.mrb[0].mxu0 %v190
  %v374 = vpop.f32.mrb[0].mxu0
  %v375 = vadd.f32 0.0, %v374
  %v376 = vpop.f32.mrb[0].mxu0
  %v377 = vpop.f32.mrb[0].mxu0
  %v378 = vadd.f32 0.0, %v377
  %v379 = vpop.f32.mrb[0].mxu0
  %380 = vmatprep.mubr.bf16.mxu0 0
  %381 = vmatmul.mubr.bf16.gmra.mrb[0].mxu0 %v191
  %v382 = vpop.f32.mrb[0].mxu0
  %v383 = vadd.f32 0.0, %v382
  %v384 = vpop.f32.mrb[0].mxu0
  %v385 = vpop.f32.mrb[0].mxu0
  %v386 = vadd.f32 0.0, %v385
  %v387 = vpop.f32.mrb[0].mxu0
  %388 = vmatprep.mubr.bf16.mxu0 0
  %389 = vmatmul.mubr.bf16.gmra.mrb[0].mxu0 %v192
  %v390 = vpop.f32.mrb[0].mxu0
  %v391 = vadd.f32 0.0, %v390
  %v392 = vpop.f32.mrb[0].mxu0
  %v393 = vpop.f32.mrb[0].mxu0
  %v394 = vadd.f32 0.0, %v393
  %v395 = vpop.f32.mrb[0].mxu0
  %396 = vmatprep.mubr.bf16.mxu0 0
  %397 = vmatmul.mubr.bf16.gmra.mrb[0].mxu0 %v193
  %v398 = vpop.f32.mrb[0].mxu0
  %v399 = vadd.f32 0.0, %v398
  %v400 = vpop.f32.mrb[0].mxu0
  %v401 = vpop.f32.mrb[0].mxu0
  %v402 = vadd.f32 0.0, %v401
  %v403 = vpop.f32.mrb[0].mxu0
  %404 = vmatprep.mubr.bf16.mxu0 0
  %405 = vmatmul.mubr.bf16.gmra.mrb[0].mxu0 %v194
  %v406 = vpop.f32.mrb[0].mxu0
  %v407 = vadd.f32 0.0, %v406
  %v408 = vpop.f32.mrb[0].mxu0
  %v409 = vpop.f32.mrb[0].mxu0
  %v410 = vadd.f32 0.0, %v409
  %v411 = vpop.f32.mrb[0].mxu0
  %412 = vmatprep.mubr.bf16.mxu0 0
  %413 = vmatmul.mubr.bf16.gmra.mrb[0].mxu0 %v195
  %v414 = vpop.f32.mrb[0].mxu0
  %v415 = vadd.f32 0.0, %v414
  %v416 = vpop.f32.mrb[0].mxu0
  %v417 = vpop.f32.mrb[0].mxu0
  %v418 = vadd.f32 0.0, %v417
  %v419 = vpop.f32.mrb[0].mxu0
  %420 = vdwg.mxu0
  %v421 = vpack.c.bf16 %v298, %v295
  %v422 = vpack.c.bf16 %v306, %v303
  %v423 = vpack.c.bf16 %v314, %v311
  %v424 = vpack.c.bf16 %v322, %v319
  %v425 = vpack.c.bf16 %v330, %v327
  %v426 = vpack.c.bf16 %v338, %v335
  %v427 = vpack.c.bf16 %v346, %v343
  %v428 = vpack.c.bf16 %v354, %v351
  %v429 = vpack.c.bf16 %v362, %v359
  %v430 = vpack.c.bf16 %v370, %v367
  %v431 = vpack.c.bf16 %v378, %v375
  %v432 = vpack.c.bf16 %v386, %v383
  %v433 = vpack.c.bf16 %v394, %v391
  %v434 = vpack.c.bf16 %v402, %v399
  %v435 = vpack.c.bf16 %v410, %v407
  %v436 = vpack.c.bf16 %v418, %v415
  %v437 = vld [vmem:[%s4] sm:$0x1]
  %v439 = vlaneseq
  %v440 = vshrl.u32 %v439, 7
  %v441 = vsub.s32 0, %v440
  %v442 = vrot.slane %v437, %v441
  %v476 = vunpack.c.l.b16 %v36
  %v477 = vunpack.c.h.b16 %v36
  %v478 = vunpack.c.l.b16 %v37
  %v479 = vunpack.c.h.b16 %v37
  %v480 = vunpack.c.l.b16 %v38
  %v481 = vunpack.c.h.b16 %v38
  %v482 = vunpack.c.l.b16 %v39
  %v483 = vunpack.c.h.b16 %v39
  %v484 = vunpack.c.l.b16 %v40
  %v485 = vunpack.c.h.b16 %v40
  %v486 = vunpack.c.l.b16 %v41
  %v487 = vunpack.c.h.b16 %v41
  %v488 = vunpack.c.l.b16 %v42
  %v489 = vunpack.c.h.b16 %v42
  %v490 = vunpack.c.l.b16 %v43
  %v491 = vunpack.c.h.b16 %v43
  %v492 = vunpack.c.l.b16 %v44
  %v493 = vunpack.c.h.b16 %v44
  %v494 = vunpack.c.l.b16 %v45
  %v495 = vunpack.c.h.b16 %v45
  %v496 = vunpack.c.l.b16 %v46
  %v497 = vunpack.c.h.b16 %v46
  %v498 = vunpack.c.l.b16 %v47
  %v499 = vunpack.c.h.b16 %v47
  %v500 = vunpack.c.l.b16 %v48
  %v501 = vunpack.c.h.b16 %v48
  %v502 = vunpack.c.l.b16 %v49
  %v503 = vunpack.c.h.b16 %v49
  %v504 = vunpack.c.l.b16 %v50
  %v505 = vunpack.c.h.b16 %v50
  %v506 = vunpack.c.l.b16 %v51
  %v507 = vunpack.c.h.b16 %v51
  %v508 = vunpack.c.l.b16 %v52
  %v509 = vunpack.c.h.b16 %v52
  %v510 = vunpack.c.l.b16 %v53
  %v511 = vunpack.c.h.b16 %v53
  %v512 = vunpack.c.l.b16 %v54
  %v513 = vunpack.c.h.b16 %v54
  %v514 = vunpack.c.l.b16 %v55
  %v515 = vunpack.c.h.b16 %v55
  %v516 = vunpack.c.l.b16 %v56
  %v517 = vunpack.c.h.b16 %v56
  %v518 = vunpack.c.l.b16 %v57
  %v519 = vunpack.c.h.b16 %v57
  %v520 = vunpack.c.l.b16 %v58
  %v521 = vunpack.c.h.b16 %v58
  %v522 = vunpack.c.l.b16 %v59
  %v523 = vunpack.c.h.b16 %v59
  %v524 = vunpack.c.l.b16 %v60
  %v525 = vunpack.c.h.b16 %v60
  %v526 = vunpack.c.l.b16 %v61
  %v527 = vunpack.c.h.b16 %v61
  %v528 = vunpack.c.l.b16 %v62
  %v529 = vunpack.c.h.b16 %v62
  %v530 = vunpack.c.l.b16 %v63
  %v531 = vunpack.c.h.b16 %v63
  %v532 = vunpack.c.l.b16 %v64
  %v533 = vunpack.c.h.b16 %v64
  %v534 = vunpack.c.l.b16 %v65
  %v535 = vunpack.c.h.b16 %v65
  %v536 = vunpack.c.l.b16 %v66
  %v537 = vunpack.c.h.b16 %v66
  %v538 = vunpack.c.l.b16 %v67
  %v539 = vunpack.c.h.b16 %v67
  %v540 = vpack.c.b16 %v478, %v476
  %v541 = vpack.c.b16 %v479, %v477
  %v542 = vpack.c.b16 %v482, %v480
  %v543 = vpack.c.b16 %v483, %v481
  %v544 = vpack.c.b16 %v486, %v484
  %v545 = vpack.c.b16 %v487, %v485
  %v546 = vpack.c.b16 %v490, %v488
  %v547 = vpack.c.b16 %v491, %v489
  %v548 = vpack.c.b16 %v494, %v492
  %v549 = vpack.c.b16 %v495, %v493
  %v550 = vpack.c.b16 %v498, %v496
  %v551 = vpack.c.b16 %v499, %v497
  %v552 = vpack.c.b16 %v502, %v500
  %v553 = vpack.c.b16 %v503, %v501
  %v554 = vpack.c.b16 %v506, %v504
  %v555 = vpack.c.b16 %v507, %v505
  %v556 = vpack.c.b16 %v510, %v508
  %v557 = vpack.c.b16 %v511, %v509
  %v558 = vpack.c.b16 %v514, %v512
  %v559 = vpack.c.b16 %v515, %v513
  %v560 = vpack.c.b16 %v518, %v516
  %v561 = vpack.c.b16 %v519, %v517
  %v562 = vpack.c.b16 %v522, %v520
  %v563 = vpack.c.b16 %v523, %v521
  %v564 = vpack.c.b16 %v526, %v524
  %v565 = vpack.c.b16 %v527, %v525
  %v566 = vpack.c.b16 %v530, %v528
  %v567 = vpack.c.b16 %v531, %v529
  %v568 = vpack.c.b16 %v534, %v532
  %v569 = vpack.c.b16 %v535, %v533
  %v570 = vpack.c.b16 %v538, %v536
  %v571 = vpack.c.b16 %v539, %v537
  %604 = vmatprep.subr.bf16.mxu0 0
  %605 = vmatpush1.bf16.msra.mxu0 %v421
  %606 = vmatprep.subr.bf16.mxu0 0
  %607 = vmatpush1.bf16.msra.mxu0 %v422
  %608 = vmatprep.subr.bf16.mxu0 0
  %609 = vmatpush1.bf16.msra.mxu0 %v423
  %610 = vmatprep.subr.bf16.mxu0 0
  %611 = vmatpush1.bf16.msra.mxu0 %v424
  %612 = vmatprep.subr.bf16.mxu0 0
  %613 = vmatpush1.bf16.msra.mxu0 %v425
  %614 = vmatprep.subr.bf16.mxu0 0
  %615 = vmatpush1.bf16.msra.mxu0 %v426
  %616 = vmatprep.subr.bf16.mxu0 0
  %617 = vmatpush1.bf16.msra.mxu0 %v427
  %618 = vmatprep.subr.bf16.mxu0 0
  %619 = vmatpush1.bf16.msra.mxu0 %v428
  %620 = vmatprep.subr.bf16.mxu0 0
  %621 = vmatpush1.bf16.msra.mxu0 %v429
  %622 = vmatprep.subr.bf16.mxu0 0
  %623 = vmatpush1.bf16.msra.mxu0 %v430
  %624 = vmatprep.subr.bf16.mxu0 0
  %625 = vmatpush1.bf16.msra.mxu0 %v431
  %626 = vmatprep.subr.bf16.mxu0 0
  %627 = vmatpush1.bf16.msra.mxu0 %v432
  %628 = vmatprep.subr.bf16.mxu0 0
  %629 = vmatpush1.bf16.msra.mxu0 %v433
  %630 = vmatprep.subr.bf16.mxu0 0
  %631 = vmatpush1.bf16.msra.mxu0 %v434
  %632 = vmatprep.subr.bf16.mxu0 0
  %633 = vmatpush1.bf16.msra.mxu0 %v435
  %634 = vmatprep.subr.bf16.mxu0 0
  %635 = vmatpush1.bf16.msra.mxu0 %v436
  %636 = vmatprep.mubr.bf16.mxu0 %v541
  %637 = vmatmul.mubr.bf16.gmra.mrb[0].mxu0 %v540
  %v638 = vpop.f32.mrb[0].mxu0
  %v639 = vadd.f32 %v442, %v638
  %v640 = vpop.f32.mrb[0].mxu0
  %v641 = vpop.f32.mrb[0].mxu0
  %v642 = vadd.f32 %v442, %v641
  %v643 = vpop.f32.mrb[0].mxu0
  %644 = vmatprep.mubr.bf16.mxu0 %v543
  %645 = vmatmul.mubr.bf16.gmra.mrb[0].mxu0 %v542
  %v646 = vpop.f32.mrb[0].mxu0
  %v647 = vadd.f32 %v442, %v646
  %v648 = vpop.f32.mrb[0].mxu0
  %v649 = vpop.f32.mrb[0].mxu0
  %v650 = vadd.f32 %v442, %v649
  %v651 = vpop.f32.mrb[0].mxu0
  %652 = vmatprep.mubr.bf16.mxu0 %v545
  %653 = vmatmul.mubr.bf16.gmra.mrb[0].mxu0 %v544
  %v654 = vpop.f32.mrb[0].mxu0
  %v655 = vadd.f32 %v442, %v654
  %v656 = vpop.f32.mrb[0].mxu0
  %v657 = vpop.f32.mrb[0].mxu0
  %v658 = vadd.f32 %v442, %v657
  %v659 = vpop.f32.mrb[0].mxu0
  %660 = vmatprep.mubr.bf16.mxu0 %v547
  %661 = vmatmul.mubr.bf16.gmra.mrb[0].mxu0 %v546
  %v662 = vpop.f32.mrb[0].mxu0
  %v663 = vadd.f32 %v442, %v662
  %v664 = vpop.f32.mrb[0].mxu0
  %v665 = vpop.f32.mrb[0].mxu0
  %v666 = vadd.f32 %v442, %v665
  %v667 = vpop.f32.mrb[0].mxu0
  %668 = vmatprep.mubr.bf16.mxu0 %v549
  %669 = vmatmul.mubr.bf16.gmra.mrb[0].mxu0 %v548
  %v670 = vpop.f32.mrb[0].mxu0
  %v671 = vadd.f32 %v442, %v670
  %v672 = vpop.f32.mrb[0].mxu0
  %v673 = vpop.f32.mrb[0].mxu0
  %v674 = vadd.f32 %v442, %v673
  %v675 = vpop.f32.mrb[0].mxu0
  %676 = vmatprep.mubr.bf16.mxu0 %v551
  %677 = vmatmul.mubr.bf16.gmra.mrb[0].mxu0 %v550
  %v678 = vpop.f32.mrb[0].mxu0
  %v679 = vadd.f32 %v442, %v678
  %v680 = vpop.f32.mrb[0].mxu0
  %v681 = vpop.f32.mrb[0].mxu0
  %v682 = vadd.f32 %v442, %v681
  %v683 = vpop.f32.mrb[0].mxu0
  %684 = vmatprep.mubr.bf16.mxu0 %v553
  %685 = vmatmul.mubr.bf16.gmra.mrb[0].mxu0 %v552
  %v686 = vpop.f32.mrb[0].mxu0
  %v687 = vadd.f32 %v442, %v686
  %v688 = vpop.f32.mrb[0].mxu0
  %v689 = vpop.f32.mrb[0].mxu0
  %v690 = vadd.f32 %v442, %v689
  %v691 = vpop.f32.mrb[0].mxu0
  %692 = vmatprep.mubr.bf16.mxu0 %v555
  %693 = vmatmul.mubr.bf16.gmra.mrb[0].mxu0 %v554
  %v694 = vpop.f32.mrb[0].mxu0
  %v695 = vadd.f32 %v442, %v694
  %v696 = vpop.f32.mrb[0].mxu0
  %v697 = vpop.f32.mrb[0].mxu0
  %v698 = vadd.f32 %v442, %v697
  %v699 = vpop.f32.mrb[0].mxu0
  %700 = vmatprep.mubr.bf16.mxu0 %v557
  %701 = vmatmul.mubr.bf16.gmra.mrb[0].mxu0 %v556
  %v702 = vpop.f32.mrb[0].mxu0
  %v703 = vadd.f32 %v442, %v702
  %v704 = vpop.f32.mrb[0].mxu0
  %v705 = vpop.f32.mrb[0].mxu0
  %v706 = vadd.f32 %v442, %v705
  %v707 = vpop.f32.mrb[0].mxu0
  %708 = vmatprep.mubr.bf16.mxu0 %v559
  %709 = vmatmul.mubr.bf16.gmra.mrb[0].mxu0 %v558
  %v710 = vpop.f32.mrb[0].mxu0
  %v711 = vadd.f32 %v442, %v710
  %v712 = vpop.f32.mrb[0].mxu0
  %v713 = vpop.f32.mrb[0].mxu0
  %v714 = vadd.f32 %v442, %v713
  %v715 = vpop.f32.mrb[0].mxu0
  %716 = vmatprep.mubr.bf16.mxu0 %v561
  %717 = vmatmul.mubr.bf16.gmra.mrb[0].mxu0 %v560
  %v718 = vpop.f32.mrb[0].mxu0
  %v719 = vadd.f32 %v442, %v718
  %v720 = vpop.f32.mrb[0].mxu0
  %v721 = vpop.f32.mrb[0].mxu0
  %v722 = vadd.f32 %v442, %v721
  %v723 = vpop.f32.mrb[0].mxu0
  %724 = vmatprep.mubr.bf16.mxu0 %v563
  %725 = vmatmul.mubr.bf16.gmra.mrb[0].mxu0 %v562
  %v726 = vpop.f32.mrb[0].mxu0
  %v727 = vadd.f32 %v442, %v726
  %v728 = vpop.f32.mrb[0].mxu0
  %v729 = vpop.f32.mrb[0].mxu0
  %v730 = vadd.f32 %v442, %v729
  %v731 = vpop.f32.mrb[0].mxu0
  %732 = vmatprep.mubr.bf16.mxu0 %v565
  %733 = vmatmul.mubr.bf16.gmra.mrb[0].mxu0 %v564
  %v734 = vpop.f32.mrb[0].mxu0
  %v735 = vadd.f32 %v442, %v734
  %v736 = vpop.f32.mrb[0].mxu0
  %v737 = vpop.f32.mrb[0].mxu0
  %v738 = vadd.f32 %v442, %v737
  %v739 = vpop.f32.mrb[0].mxu0
  %740 = vmatprep.mubr.bf16.mxu0 %v567
  %741 = vmatmul.mubr.bf16.gmra.mrb[0].mxu0 %v566
  %v742 = vpop.f32.mrb[0].mxu0
  %v743 = vadd.f32 %v442, %v742
  %v744 = vpop.f32.mrb[0].mxu0
  %v745 = vpop.f32.mrb[0].mxu0
  %v746 = vadd.f32 %v442, %v745
  %v747 = vpop.f32.mrb[0].mxu0
  %748 = vmatprep.mubr.bf16.mxu0 %v569
  %749 = vmatmul.mubr.bf16.gmra.mrb[0].mxu0 %v568
  %v750 = vpop.f32.mrb[0].mxu0
  %v751 = vadd.f32 %v442, %v750
  %v752 = vpop.f32.mrb[0].mxu0
  %v753 = vpop.f32.mrb[0].mxu0
  %v754 = vadd.f32 %v442, %v753
  %v755 = vpop.f32.mrb[0].mxu0
  %756 = vmatprep.mubr.bf16.mxu0 %v571
  %757 = vmatmul.mubr.bf16.gmra.mrb[0].mxu0 %v570
  %v758 = vpop.f32.mrb[0].mxu0
  %v759 = vadd.f32 %v442, %v758
  %v760 = vpop.f32.mrb[0].mxu0
  %v761 = vpop.f32.mrb[0].mxu0
  %v762 = vadd.f32 %v442, %v761
  %v763 = vpop.f32.mrb[0].mxu0
  %764 = vdwg.mxu0
  %v765 = vld [vmem:[%s5] sm:$0x1]
  %v766 = vld [vmem:[%s6] sm:$0x1]
  %v767 = vld [vmem:[%s7] sm:$0x1]
  %v768 = vlaneseq
  %v769 = vshrl.u32 %v768, 7
  %v770 = vadd.s32 %v769, 8
  %v771 = vadd.s32 %v769, 16
  %v772 = vadd.s32 %v769, 24
  %v773 = vadd.s32 %v769, 32
  %v774 = vadd.s32 %v769, 40
  %v775 = vadd.s32 %v769, 48
  %v776 = vadd.s32 %v769, 56
  %v777 = vadd.s32 %v769, 64
  %v778 = vadd.s32 %v769, 72
  %v779 = vadd.s32 %v769, 80
  %v780 = vadd.s32 %v769, 88
  %v781 = vadd.s32 %v769, 96
  %v782 = vadd.s32 %v769, 104
  %v783 = vadd.s32 %v769, 112
  %v784 = vadd.s32 %v769, 120
  %v785 = vadd.s32 %v769, 128
  %v786 = vadd.s32 %v769, 136
  %v787 = vadd.s32 %v769, 144
  %v788 = vadd.s32 %v769, 152
  %v789 = vadd.s32 %v769, 160
  %v790 = vadd.s32 %v769, 168
  %v791 = vadd.s32 %v769, 176
  %v792 = vadd.s32 %v769, 184
  %v793 = vadd.s32 %v769, 192
  %v794 = vadd.s32 %v769, 200
  %v795 = vadd.s32 %v769, 208
  %v796 = vadd.s32 %v769, 216
  %v797 = vadd.s32 %v769, 224
  %v798 = vadd.s32 %v769, 232
  %v799 = vadd.s32 %v769, 240
  %v800 = vadd.s32 %v769, 248
  %vm801 = vcmp.lt.s32.totalorder %v769, 16
  %vm802 = vcmp.lt.s32.totalorder %v770, 16
  %vm803 = vcmp.lt.s32.totalorder %v771, 16
  %vm804 = vcmp.lt.s32.totalorder %v772, 16
  %vm805 = vcmp.lt.s32.totalorder %v773, 16
  %vm806 = vcmp.lt.s32.totalorder %v774, 16
  %vm807 = vcmp.lt.s32.totalorder %v775, 16
  %vm808 = vcmp.lt.s32.totalorder %v776, 16
  %vm809 = vcmp.lt.s32.totalorder %v777, 16
  %vm810 = vcmp.lt.s32.totalorder %v778, 16
  %vm811 = vcmp.lt.s32.totalorder %v779, 16
  %vm812 = vcmp.lt.s32.totalorder %v780, 16
  %vm813 = vcmp.lt.s32.totalorder %v781, 16
  %vm814 = vcmp.lt.s32.totalorder %v782, 16
  %vm815 = vcmp.lt.s32.totalorder %v783, 16
  %vm816 = vcmp.lt.s32.totalorder %v784, 16
  %vm817 = vcmp.lt.s32.totalorder %v785, 16
  %vm818 = vcmp.lt.s32.totalorder %v786, 16
  %vm819 = vcmp.lt.s32.totalorder %v787, 16
  %vm820 = vcmp.lt.s32.totalorder %v788, 16
  %vm821 = vcmp.lt.s32.totalorder %v789, 16
  %vm822 = vcmp.lt.s32.totalorder %v790, 16
  %vm823 = vcmp.lt.s32.totalorder %v791, 16
  %vm824 = vcmp.lt.s32.totalorder %v792, 16
  %vm825 = vcmp.lt.s32.totalorder %v793, 16
  %vm826 = vcmp.lt.s32.totalorder %v794, 16
  %vm827 = vcmp.lt.s32.totalorder %v795, 16
  %vm828 = vcmp.lt.s32.totalorder %v796, 16
  %vm829 = vcmp.lt.s32.totalorder %v797, 16
  %vm830 = vcmp.lt.s32.totalorder %v798, 16
  %vm831 = vcmp.lt.s32.totalorder %v799, 16
  %vm832 = vcmp.lt.s32.totalorder %v800, 16
  %v833 = vsel %vm801, 1, 0
  %v834 = vsel %vm802, 1, 0
  %v835 = vsel %vm803, 1, 0
  %v836 = vsel %vm804, 1, 0
  %v837 = vsel %vm805, 1, 0
  %v838 = vsel %vm806, 1, 0
  %v839 = vsel %vm807, 1, 0
  %v840 = vsel %vm808, 1, 0
  %v841 = vsel %vm809, 1, 0
  %v842 = vsel %vm810, 1, 0
  %v843 = vsel %vm811, 1, 0
  %v844 = vsel %vm812, 1, 0
  %v845 = vsel %vm813, 1, 0
  %v846 = vsel %vm814, 1, 0
  %v847 = vsel %vm815, 1, 0
  %v848 = vsel %vm816, 1, 0
  %v849 = vsel %vm817, 1, 0
  %v850 = vsel %vm818, 1, 0
  %v851 = vsel %vm819, 1, 0
  %v852 = vsel %vm820, 1, 0
  %v853 = vsel %vm821, 1, 0
  %v854 = vsel %vm822, 1, 0
  %v855 = vsel %vm823, 1, 0
  %v856 = vsel %vm824, 1, 0
  %v857 = vsel %vm825, 1, 0
  %v858 = vsel %vm826, 1, 0
  %v859 = vsel %vm827, 1, 0
  %v860 = vsel %vm828, 1, 0
  %v861 = vsel %vm829, 1, 0
  %v862 = vsel %vm830, 1, 0
  %v863 = vsel %vm831, 1, 0
  %v864 = vsel %vm832, 1, 0
  %v865 = vcvt.s32.f32 %v833
  %v866 = vcvt.s32.f32 %v834
  %v867 = vcvt.s32.f32 %v835
  %v868 = vcvt.s32.f32 %v836
  %v869 = vcvt.s32.f32 %v837
  %v870 = vcvt.s32.f32 %v838
  %v871 = vcvt.s32.f32 %v839
  %v872 = vcvt.s32.f32 %v840
  %v873 = vcvt.s32.f32 %v841
  %v874 = vcvt.s32.f32 %v842
  %v875 = vcvt.s32.f32 %v843
  %v876 = vcvt.s32.f32 %v844
  %v877 = vcvt.s32.f32 %v845
  %v878 = vcvt.s32.f32 %v846
  %v879 = vcvt.s32.f32 %v847
  %v880 = vcvt.s32.f32 %v848
  %v881 = vcvt.s32.f32 %v849
  %v882 = vcvt.s32.f32 %v850
  %v883 = vcvt.s32.f32 %v851
  %v884 = vcvt.s32.f32 %v852
  %v885 = vcvt.s32.f32 %v853
  %v886 = vcvt.s32.f32 %v854
  %v887 = vcvt.s32.f32 %v855
  %v888 = vcvt.s32.f32 %v856
  %v889 = vcvt.s32.f32 %v857
  %v890 = vcvt.s32.f32 %v858
  %v891 = vcvt.s32.f32 %v859
  %v892 = vcvt.s32.f32 %v860
  %v893 = vcvt.s32.f32 %v861
  %v894 = vcvt.s32.f32 %v862
  %v895 = vcvt.s32.f32 %v863
  %v896 = vcvt.s32.f32 %v864
  %v897 = vmul.f32 %v639, %v865
  %v898 = vmul.f32 %v642, %v866
  %v899 = vmul.f32 %v647, %v867
  %v900 = vmul.f32 %v650, %v868
  %v901 = vmul.f32 %v655, %v869
  %v902 = vmul.f32 %v658, %v870
  %v903 = vmul.f32 %v663, %v871
  %v904 = vmul.f32 %v666, %v872
  %v905 = vmul.f32 %v671, %v873
  %v906 = vmul.f32 %v674, %v874
  %v907 = vmul.f32 %v679, %v875
  %v908 = vmul.f32 %v682, %v876
  %v909 = vmul.f32 %v687, %v877
  %v910 = vmul.f32 %v690, %v878
  %v911 = vmul.f32 %v695, %v879
  %v912 = vmul.f32 %v698, %v880
  %v913 = vmul.f32 %v703, %v881
  %v914 = vmul.f32 %v706, %v882
  %v915 = vmul.f32 %v711, %v883
  %v916 = vmul.f32 %v714, %v884
  %v917 = vmul.f32 %v719, %v885
  %v918 = vmul.f32 %v722, %v886
  %v919 = vmul.f32 %v727, %v887
  %v920 = vmul.f32 %v730, %v888
  %v921 = vmul.f32 %v735, %v889
  %v922 = vmul.f32 %v738, %v890
  %v923 = vmul.f32 %v743, %v891
  %v924 = vmul.f32 %v746, %v892
  %v925 = vmul.f32 %v751, %v893
  %v926 = vmul.f32 %v754, %v894
  %v927 = vmul.f32 %v759, %v895
  %v928 = vmul.f32 %v762, %v896
  %v929 = vadd.f32 %v897, %v898
  %v930 = vadd.f32 %v929, %v899
  %v931 = vadd.f32 %v930, %v900
  %v932 = vadd.f32 %v931, %v901
  %v933 = vadd.f32 %v932, %v902
  %v934 = vadd.f32 %v933, %v903
  %v935 = vadd.f32 %v934, %v904
  %v936 = vadd.f32 %v935, %v905
  %v937 = vadd.f32 %v936, %v906
  %v938 = vadd.f32 %v937, %v907
  %v939 = vadd.f32 %v938, %v908
  %v940 = vadd.f32 %v939, %v909
  %v941 = vadd.f32 %v940, %v910
  %v942 = vadd.f32 %v941, %v911
  %v943 = vadd.f32 %v942, %v912
  %v944 = vadd.f32 %v943, %v913
  %v945 = vadd.f32 %v944, %v914
  %v946 = vadd.f32 %v945, %v915
  %v947 = vadd.f32 %v946, %v916
  %v948 = vadd.f32 %v947, %v917
  %v949 = vadd.f32 %v948, %v918
  %v950 = vadd.f32 %v949, %v919
  %v951 = vadd.f32 %v950, %v920
  %v952 = vadd.f32 %v951, %v921
  %v953 = vadd.f32 %v952, %v922
  %v954 = vadd.f32 %v953, %v923
  %v955 = vadd.f32 %v954, %v924
  %v956 = vadd.f32 %v955, %v925
  %v957 = vadd.f32 %v956, %v926
  %v958 = vadd.f32 %v957, %v927
  %v959 = vadd.f32 %v958, %v928
  %v960 = vrot.slane %v959, 4
  %v961 = vadd.f32 %v959, %v960
  %v962 = vrot.slane %v961, 2
  %v963 = vadd.f32 %v961, %v962
  %v964 = vrot.slane %v963, 1
  %v965 = vadd.f32 %v963, %v964
  %v966 = vmul.f32 %v965, 0.0625
  %v967 = vmul.f32 %v767, %v966
  %v969 = vlaneseq
  %v970 = vshrl.u32 %v969, 7
  %v971 = vsub.s32 0, %v970
  %v972 = vrot.slane %v967, %v971
  %v974 = vsub.f32 %v639, %v972
  %v975 = vsub.f32 %v642, %v972
  %v976 = vsub.f32 %v647, %v972
  %v977 = vsub.f32 %v650, %v972
  %v978 = vsub.f32 %v655, %v972
  %v979 = vsub.f32 %v658, %v972
  %v980 = vsub.f32 %v663, %v972
  %v981 = vsub.f32 %v666, %v972
  %v982 = vsub.f32 %v671, %v972
  %v983 = vsub.f32 %v674, %v972
  %v984 = vsub.f32 %v679, %v972
  %v985 = vsub.f32 %v682, %v972
  %v986 = vsub.f32 %v687, %v972
  %v987 = vsub.f32 %v690, %v972
  %v988 = vsub.f32 %v695, %v972
  %v989 = vsub.f32 %v698, %v972
  %v990 = vsub.f32 %v703, %v972
  %v991 = vsub.f32 %v706, %v972
  %v992 = vsub.f32 %v711, %v972
  %v993 = vsub.f32 %v714, %v972
  %v994 = vsub.f32 %v719, %v972
  %v995 = vsub.f32 %v722, %v972
  %v996 = vsub.f32 %v727, %v972
  %v997 = vsub.f32 %v730, %v972
  %v998 = vsub.f32 %v735, %v972
  %v999 = vsub.f32 %v738, %v972
  %v1000 = vsub.f32 %v743, %v972
  %v1001 = vsub.f32 %v746, %v972
  %v1002 = vsub.f32 %v751, %v972
  %v1003 = vsub.f32 %v754, %v972
  %v1004 = vsub.f32 %v759, %v972
  %v1005 = vsub.f32 %v762, %v972
  %v1006 = vmul.f32 %v974, %v865
  %v1007 = vmul.f32 %v975, %v866
  %v1008 = vmul.f32 %v976, %v867
  %v1009 = vmul.f32 %v977, %v868
  %v1010 = vmul.f32 %v978, %v869
  %v1011 = vmul.f32 %v979, %v870
  %v1012 = vmul.f32 %v980, %v871
  %v1013 = vmul.f32 %v981, %v872
  %v1014 = vmul.f32 %v982, %v873
  %v1015 = vmul.f32 %v983, %v874
  %v1016 = vmul.f32 %v984, %v875
  %v1017 = vmul.f32 %v985, %v876
  %v1018 = vmul.f32 %v986, %v877
  %v1019 = vmul.f32 %v987, %v878
  %v1020 = vmul.f32 %v988, %v879
  %v1021 = vmul.f32 %v989, %v880
  %v1022 = vmul.f32 %v990, %v881
  %v1023 = vmul.f32 %v991, %v882
  %v1024 = vmul.f32 %v992, %v883
  %v1025 = vmul.f32 %v993, %v884
  %v1026 = vmul.f32 %v994, %v885
  %v1027 = vmul.f32 %v995, %v886
  %v1028 = vmul.f32 %v996, %v887
  %v1029 = vmul.f32 %v997, %v888
  %v1030 = vmul.f32 %v998, %v889
  %v1031 = vmul.f32 %v999, %v890
  %v1032 = vmul.f32 %v1000, %v891
  %v1033 = vmul.f32 %v1001, %v892
  %v1034 = vmul.f32 %v1002, %v893
  %v1035 = vmul.f32 %v1003, %v894
  %v1036 = vmul.f32 %v1004, %v895
  %v1037 = vmul.f32 %v1005, %v896
  %v1038 = vmul.f32 %v1006, %v1006
  %v1039 = vmul.f32 %v1007, %v1007
  %v1040 = vmul.f32 %v1008, %v1008
  %v1041 = vmul.f32 %v1009, %v1009
  %v1042 = vmul.f32 %v1010, %v1010
  %v1043 = vmul.f32 %v1011, %v1011
  %v1044 = vmul.f32 %v1012, %v1012
  %v1045 = vmul.f32 %v1013, %v1013
  %v1046 = vmul.f32 %v1014, %v1014
  %v1047 = vmul.f32 %v1015, %v1015
  %v1048 = vmul.f32 %v1016, %v1016
  %v1049 = vmul.f32 %v1017, %v1017
  %v1050 = vmul.f32 %v1018, %v1018
  %v1051 = vmul.f32 %v1019, %v1019
  %v1052 = vmul.f32 %v1020, %v1020
  %v1053 = vmul.f32 %v1021, %v1021
  %v1054 = vmul.f32 %v1022, %v1022
  %v1055 = vmul.f32 %v1023, %v1023
  %v1056 = vmul.f32 %v1024, %v1024
  %v1057 = vmul.f32 %v1025, %v1025
  %v1058 = vmul.f32 %v1026, %v1026
  %v1059 = vmul.f32 %v1027, %v1027
  %v1060 = vmul.f32 %v1028, %v1028
  %v1061 = vmul.f32 %v1029, %v1029
  %v1062 = vmul.f32 %v1030, %v1030
  %v1063 = vmul.f32 %v1031, %v1031
  %v1064 = vmul.f32 %v1032, %v1032
  %v1065 = vmul.f32 %v1033, %v1033
  %v1066 = vmul.f32 %v1034, %v1034
  %v1067 = vmul.f32 %v1035, %v1035
  %v1068 = vmul.f32 %v1036, %v1036
  %v1069 = vmul.f32 %v1037, %v1037
  %v1070 = vadd.f32 %v1038, %v1039
  %v1071 = vadd.f32 %v1070, %v1040
  %v1072 = vadd.f32 %v1071, %v1041
  %v1073 = vadd.f32 %v1072, %v1042
  %v1074 = vadd.f32 %v1073, %v1043
  %v1075 = vadd.f32 %v1074, %v1044
  %v1076 = vadd.f32 %v1075, %v1045
  %v1077 = vadd.f32 %v1076, %v1046
  %v1078 = vadd.f32 %v1077, %v1047
  %v1079 = vadd.f32 %v1078, %v1048
  %v1080 = vadd.f32 %v1079, %v1049
  %v1081 = vadd.f32 %v1080, %v1050
  %v1082 = vadd.f32 %v1081, %v1051
  %v1083 = vadd.f32 %v1082, %v1052
  %v1084 = vadd.f32 %v1083, %v1053
  %v1085 = vadd.f32 %v1084, %v1054
  %v1086 = vadd.f32 %v1085, %v1055
  %v1087 = vadd.f32 %v1086, %v1056
  %v1088 = vadd.f32 %v1087, %v1057
  %v1089 = vadd.f32 %v1088, %v1058
  %v1090 = vadd.f32 %v1089, %v1059
  %v1091 = vadd.f32 %v1090, %v1060
  %v1092 = vadd.f32 %v1091, %v1061
  %v1093 = vadd.f32 %v1092, %v1062
  %v1094 = vadd.f32 %v1093, %v1063
  %v1095 = vadd.f32 %v1094, %v1064
  %v1096 = vadd.f32 %v1095, %v1065
  %v1097 = vadd.f32 %v1096, %v1066
  %v1098 = vadd.f32 %v1097, %v1067
  %v1099 = vadd.f32 %v1098, %v1068
  %v1100 = vadd.f32 %v1099, %v1069
  %v1101 = vrot.slane %v1100, 4
  %v1102 = vadd.f32 %v1100, %v1101
  %v1103 = vrot.slane %v1102, 2
  %v1104 = vadd.f32 %v1102, %v1103
  %v1105 = vrot.slane %v1104, 1
  %v1106 = vadd.f32 %v1104, %v1105
  %v1107 = vmul.f32 %v1106, 0.0625
  %v1108 = vadd.f32 %v1107, 1e-05
  %v1109 = vrsqrt.pop %v1108
  %v1110 = vmul.f32 %v1006, %v1109
  %v1111 = vmul.f32 %v1007, %v1109
  %v1112 = vmul.f32 %v1008, %v1109
  %v1113 = vmul.f32 %v1009, %v1109
  %v1114 = vmul.f32 %v1010, %v1109
  %v1115 = vmul.f32 %v1011, %v1109
  %v1116 = vmul.f32 %v1012, %v1109
  %v1117 = vmul.f32 %v1013, %v1109
  %v1118 = vmul.f32 %v1014, %v1109
  %v1119 = vmul.f32 %v1015, %v1109
  %v1120 = vmul.f32 %v1016, %v1109
  %v1121 = vmul.f32 %v1017, %v1109
  %v1122 = vmul.f32 %v1018, %v1109
  %v1123 = vmul.f32 %v1019, %v1109
  %v1124 = vmul.f32 %v1020, %v1109
  %v1125 = vmul.f32 %v1021, %v1109
  %v1126 = vmul.f32 %v1022, %v1109
  %v1127 = vmul.f32 %v1023, %v1109
  %v1128 = vmul.f32 %v1024, %v1109
  %v1129 = vmul.f32 %v1025, %v1109
  %v1130 = vmul.f32 %v1026, %v1109
  %v1131 = vmul.f32 %v1027, %v1109
  %v1132 = vmul.f32 %v1028, %v1109
  %v1133 = vmul.f32 %v1029, %v1109
  %v1134 = vmul.f32 %v1030, %v1109
  %v1135 = vmul.f32 %v1031, %v1109
  %v1136 = vmul.f32 %v1032, %v1109
  %v1137 = vmul.f32 %v1033, %v1109
  %v1138 = vmul.f32 %v1034, %v1109
  %v1139 = vmul.f32 %v1035, %v1109
  %v1140 = vmul.f32 %v1036, %v1109
  %v1141 = vmul.f32 %v1037, %v1109
  %v1143 = vlaneseq
  %v1144 = vshrl.u32 %v1143, 7
  %v1145 = vsub.s32 0, %v1144
  %v1146 = vrot.slane %v765, %v1145
  %v1148 = vmul.f32 %v1110, %v1146
  %v1149 = vmul.f32 %v1111, %v1146
  %v1150 = vmul.f32 %v1112, %v1146
  %v1151 = vmul.f32 %v1113, %v1146
  %v1152 = vmul.f32 %v1114, %v1146
  %v1153 = vmul.f32 %v1115, %v1146
  %v1154 = vmul.f32 %v1116, %v1146
  %v1155 = vmul.f32 %v1117, %v1146
  %v1156 = vmul.f32 %v1118, %v1146
  %v1157 = vmul.f32 %v1119, %v1146
  %v1158 = vmul.f32 %v1120, %v1146
  %v1159 = vmul.f32 %v1121, %v1146
  %v1160 = vmul.f32 %v1122, %v1146
  %v1161 = vmul.f32 %v1123, %v1146
  %v1162 = vmul.f32 %v1124, %v1146
  %v1163 = vmul.f32 %v1125, %v1146
  %v1164 = vmul.f32 %v1126, %v1146
  %v1165 = vmul.f32 %v1127, %v1146
  %v1166 = vmul.f32 %v1128, %v1146
  %v1167 = vmul.f32 %v1129, %v1146
  %v1168 = vmul.f32 %v1130, %v1146
  %v1169 = vmul.f32 %v1131, %v1146
  %v1170 = vmul.f32 %v1132, %v1146
  %v1171 = vmul.f32 %v1133, %v1146
  %v1172 = vmul.f32 %v1134, %v1146
  %v1173 = vmul.f32 %v1135, %v1146
  %v1174 = vmul.f32 %v1136, %v1146
  %v1175 = vmul.f32 %v1137, %v1146
  %v1176 = vmul.f32 %v1138, %v1146
  %v1177 = vmul.f32 %v1139, %v1146
  %v1178 = vmul.f32 %v1140, %v1146
  %v1179 = vmul.f32 %v1141, %v1146
  %v1181 = vlaneseq
  %v1182 = vshrl.u32 %v1181, 7
  %v1183 = vsub.s32 0, %v1182
  %v1184 = vrot.slane %v766, %v1183
  %v1186 = vadd.f32 %v1148, %v1184
  %v1187 = vadd.f32 %v1149, %v1184
  %v1188 = vadd.f32 %v1150, %v1184
  %v1189 = vadd.f32 %v1151, %v1184
  %v1190 = vadd.f32 %v1152, %v1184
  %v1191 = vadd.f32 %v1153, %v1184
  %v1192 = vadd.f32 %v1154, %v1184
  %v1193 = vadd.f32 %v1155, %v1184
  %v1194 = vadd.f32 %v1156, %v1184
  %v1195 = vadd.f32 %v1157, %v1184
  %v1196 = vadd.f32 %v1158, %v1184
  %v1197 = vadd.f32 %v1159, %v1184
  %v1198 = vadd.f32 %v1160, %v1184
  %v1199 = vadd.f32 %v1161, %v1184
  %v1200 = vadd.f32 %v1162, %v1184
  %v1201 = vadd.f32 %v1163, %v1184
  %v1202 = vadd.f32 %v1164, %v1184
  %v1203 = vadd.f32 %v1165, %v1184
  %v1204 = vadd.f32 %v1166, %v1184
  %v1205 = vadd.f32 %v1167, %v1184
  %v1206 = vadd.f32 %v1168, %v1184
  %v1207 = vadd.f32 %v1169, %v1184
  %v1208 = vadd.f32 %v1170, %v1184
  %v1209 = vadd.f32 %v1171, %v1184
  %v1210 = vadd.f32 %v1172, %v1184
  %v1211 = vadd.f32 %v1173, %v1184
  %v1212 = vadd.f32 %v1174, %v1184
  %v1213 = vadd.f32 %v1175, %v1184
  %v1214 = vadd.f32 %v1176, %v1184
  %v1215 = vadd.f32 %v1177, %v1184
  %v1216 = vadd.f32 %v1178, %v1184
  %v1217 = vadd.f32 %v1179, %v1184
  %v1218 = vmax.f32 %v1186, 0.0
  %v1219 = vmax.f32 %v1187, 0.0
  %v1220 = vmax.f32 %v1188, 0.0
  %v1221 = vmax.f32 %v1189, 0.0
  %v1222 = vmax.f32 %v1190, 0.0
  %v1223 = vmax.f32 %v1191, 0.0
  %v1224 = vmax.f32 %v1192, 0.0
  %v1225 = vmax.f32 %v1193, 0.0
  %v1226 = vmax.f32 %v1194, 0.0
  %v1227 = vmax.f32 %v1195, 0.0
  %v1228 = vmax.f32 %v1196, 0.0
  %v1229 = vmax.f32 %v1197, 0.0
  %v1230 = vmax.f32 %v1198, 0.0
  %v1231 = vmax.f32 %v1199, 0.0
  %v1232 = vmax.f32 %v1200, 0.0
  %v1233 = vmax.f32 %v1201, 0.0
  %v1234 = vmax.f32 %v1202, 0.0
  %v1235 = vmax.f32 %v1203, 0.0
  %v1236 = vmax.f32 %v1204, 0.0
  %v1237 = vmax.f32 %v1205, 0.0
  %v1238 = vmax.f32 %v1206, 0.0
  %v1239 = vmax.f32 %v1207, 0.0
  %v1240 = vmax.f32 %v1208, 0.0
  %v1241 = vmax.f32 %v1209, 0.0
  %v1242 = vmax.f32 %v1210, 0.0
  %v1243 = vmax.f32 %v1211, 0.0
  %v1244 = vmax.f32 %v1212, 0.0
  %v1245 = vmax.f32 %v1213, 0.0
  %v1246 = vmax.f32 %v1214, 0.0
  %v1247 = vmax.f32 %v1215, 0.0
  %v1248 = vmax.f32 %v1216, 0.0
  %v1249 = vmax.f32 %v1217, 0.0
  %v1250 = vmul.f32 %v1218, %v865
  %v1251 = vmul.f32 %v1219, %v866
  %v1252 = vmul.f32 %v1220, %v867
  %v1253 = vmul.f32 %v1221, %v868
  %v1254 = vmul.f32 %v1222, %v869
  %v1255 = vmul.f32 %v1223, %v870
  %v1256 = vmul.f32 %v1224, %v871
  %v1257 = vmul.f32 %v1225, %v872
  %v1258 = vmul.f32 %v1226, %v873
  %v1259 = vmul.f32 %v1227, %v874
  %v1260 = vmul.f32 %v1228, %v875
  %v1261 = vmul.f32 %v1229, %v876
  %v1262 = vmul.f32 %v1230, %v877
  %v1263 = vmul.f32 %v1231, %v878
  %v1264 = vmul.f32 %v1232, %v879
  %v1265 = vmul.f32 %v1233, %v880
  %v1266 = vmul.f32 %v1234, %v881
  %v1267 = vmul.f32 %v1235, %v882
  %v1268 = vmul.f32 %v1236, %v883
  %v1269 = vmul.f32 %v1237, %v884
  %v1270 = vmul.f32 %v1238, %v885
  %v1271 = vmul.f32 %v1239, %v886
  %v1272 = vmul.f32 %v1240, %v887
  %v1273 = vmul.f32 %v1241, %v888
  %v1274 = vmul.f32 %v1242, %v889
  %v1275 = vmul.f32 %v1243, %v890
  %v1276 = vmul.f32 %v1244, %v891
  %v1277 = vmul.f32 %v1245, %v892
  %v1278 = vmul.f32 %v1246, %v893
  %v1279 = vmul.f32 %v1247, %v894
  %v1280 = vmul.f32 %v1248, %v895
  %v1281 = vmul.f32 %v1249, %v896
  %v1282 = vpack.c.bf16 %v1251, %v1250
  %v1283 = vpack.c.bf16 %v1253, %v1252
  %v1284 = vpack.c.bf16 %v1255, %v1254
  %v1285 = vpack.c.bf16 %v1257, %v1256
  %v1286 = vpack.c.bf16 %v1259, %v1258
  %v1287 = vpack.c.bf16 %v1261, %v1260
  %v1288 = vpack.c.bf16 %v1263, %v1262
  %v1289 = vpack.c.bf16 %v1265, %v1264
  %v1290 = vpack.c.bf16 %v1267, %v1266
  %v1291 = vpack.c.bf16 %v1269, %v1268
  %v1292 = vpack.c.bf16 %v1271, %v1270
  %v1293 = vpack.c.bf16 %v1273, %v1272
  %v1294 = vpack.c.bf16 %v1275, %v1274
  %v1295 = vpack.c.bf16 %v1277, %v1276
  %v1296 = vpack.c.bf16 %v1279, %v1278
  %v1297 = vpack.c.bf16 %v1281, %v1280
  %v1298 = vld [vmem:[%s3] sm:$0xf]
  %v1299 = vld [vmem:[%s3 + $0x4] sm:$0xf]
  %v1300 = vld [vmem:[%s3 + $0x8] sm:$0xf]
  %v1301 = vld [vmem:[%s3 + $0xc] sm:$0xf]
  %v1302 = vld [vmem:[%s3 + $0x10] sm:$0xf]
  %v1303 = vld [vmem:[%s3 + $0x14] sm:$0xf]
  %v1304 = vld [vmem:[%s3 + $0x18] sm:$0xf]
  %v1305 = vld [vmem:[%s3 + $0x1c] sm:$0xf]
  %v1306 = vld [vmem:[%s3 + $0x20] sm:$0xf]
  %v1307 = vld [vmem:[%s3 + $0x24] sm:$0xf]
  %v1308 = vld [vmem:[%s3 + $0x28] sm:$0xf]
  %v1309 = vld [vmem:[%s3 + $0x2c] sm:$0xf]
  %v1310 = vld [vmem:[%s3 + $0x30] sm:$0xf]
  %v1311 = vld [vmem:[%s3 + $0x34] sm:$0xf]
  %v1312 = vld [vmem:[%s3 + $0x38] sm:$0xf]
  %v1313 = vld [vmem:[%s3 + $0x3c] sm:$0xf]
  %v1330 = vunpack.c.l.b16 %v1298
  %v1331 = vunpack.c.l.b16 %v1299
  %v1332 = vunpack.c.l.b16 %v1300
  %v1333 = vunpack.c.l.b16 %v1301
  %v1334 = vunpack.c.l.b16 %v1302
  %v1335 = vunpack.c.l.b16 %v1303
  %v1336 = vunpack.c.l.b16 %v1304
  %v1337 = vunpack.c.l.b16 %v1305
  %v1338 = vunpack.c.l.b16 %v1306
  %v1339 = vunpack.c.l.b16 %v1307
  %v1340 = vunpack.c.l.b16 %v1308
  %v1341 = vunpack.c.l.b16 %v1309
  %v1342 = vunpack.c.l.b16 %v1310
  %v1343 = vunpack.c.l.b16 %v1311
  %v1344 = vunpack.c.l.b16 %v1312
  %v1345 = vunpack.c.l.b16 %v1313
  %v1346 = vpack.c.b16 %v1331, %v1330
  %v1347 = vpack.c.b16 %v1333, %v1332
  %v1348 = vpack.c.b16 %v1335, %v1334
  %v1349 = vpack.c.b16 %v1337, %v1336
  %v1350 = vpack.c.b16 %v1339, %v1338
  %v1351 = vpack.c.b16 %v1341, %v1340
  %v1352 = vpack.c.b16 %v1343, %v1342
  %v1353 = vpack.c.b16 %v1345, %v1344
  %1362 = vmatprep.subr.bf16.mxu0 0
  %1363 = vmatpush1.bf16.msra.mxu0 %v1346
  %1364 = vmatprep.subr.bf16.mxu0 0
  %1365 = vmatpush1.bf16.msra.mxu0 %v1347
  %1366 = vmatprep.subr.bf16.mxu0 0
  %1367 = vmatpush1.bf16.msra.mxu0 %v1348
  %1368 = vmatprep.subr.bf16.mxu0 0
  %1369 = vmatpush1.bf16.msra.mxu0 %v1349
  %1370 = vmatprep.subr.bf16.mxu0 0
  %1371 = vmatpush1.bf16.msra.mxu0 %v1350
  %1372 = vmatprep.subr.bf16.mxu0 0
  %1373 = vmatpush1.bf16.msra.mxu0 %v1351
  %1374 = vmatprep.subr.bf16.mxu0 0
  %1375 = vmatpush1.bf16.msra.mxu0 %v1352
  %1376 = vmatprep.subr.bf16.mxu0 0
  %1377 = vmatpush1.bf16.msra.mxu0 %v1353
  %1378 = vmatprep.subr.bf16.mxu0 0
  %1379 = vmatpush1.bf16.msra.mxu0 0
  %1380 = vmatprep.subr.bf16.mxu0 0
  %1381 = vmatpush1.bf16.msra.mxu0 0
  %1382 = vmatprep.subr.bf16.mxu0 0
  %1383 = vmatpush1.bf16.msra.mxu0 0
  %1384 = vmatprep.subr.bf16.mxu0 0
  %1385 = vmatpush1.bf16.msra.mxu0 0
  %1386 = vmatprep.subr.bf16.mxu0 0
  %1387 = vmatpush1.bf16.msra.mxu0 0
  %1388 = vmatprep.subr.bf16.mxu0 0
  %1389 = vmatpush1.bf16.msra.mxu0 0
  %1390 = vmatprep.subr.bf16.mxu0 0
  %1391 = vmatpush1.bf16.msra.mxu0 0
  %1392 = vmatprep.subr.bf16.mxu0 0
  %1393 = vmatpush1.bf16.msra.mxu0 0
  %1394 = vmatprep.mubr.bf16.mxu0 0
  %1395 = vmatmul.mubr.bf16.gmra.mrb[0].mxu0 %v1282
  %v1396 = vpop.f32.mrb[0].mxu0
  %v1397 = vadd.f32 0.0, %v1396
  %v1398 = vpop.f32.mrb[0].mxu0
  %v1399 = vpop.f32.mrb[0].mxu0
  %v1400 = vadd.f32 0.0, %v1399
  %v1401 = vpop.f32.mrb[0].mxu0
  %1402 = vmatprep.mubr.bf16.mxu0 0
  %1403 = vmatmul.mubr.bf16.gmra.mrb[0].mxu0 %v1283
  %v1404 = vpop.f32.mrb[0].mxu0
  %v1405 = vadd.f32 0.0, %v1404
  %v1406 = vpop.f32.mrb[0].mxu0
  %v1407 = vpop.f32.mrb[0].mxu0
  %v1408 = vadd.f32 0.0, %v1407
  %v1409 = vpop.f32.mrb[0].mxu0
  %1410 = vmatprep.mubr.bf16.mxu0 0
  %1411 = vmatmul.mubr.bf16.gmra.mrb[0].mxu0 %v1284
  %v1412 = vpop.f32.mrb[0].mxu0
  %v1413 = vadd.f32 0.0, %v1412
  %v1414 = vpop.f32.mrb[0].mxu0
  %v1415 = vpop.f32.mrb[0].mxu0
  %v1416 = vadd.f32 0.0, %v1415
  %v1417 = vpop.f32.mrb[0].mxu0
  %1418 = vmatprep.mubr.bf16.mxu0 0
  %1419 = vmatmul.mubr.bf16.gmra.mrb[0].mxu0 %v1285
  %v1420 = vpop.f32.mrb[0].mxu0
  %v1421 = vadd.f32 0.0, %v1420
  %v1422 = vpop.f32.mrb[0].mxu0
  %v1423 = vpop.f32.mrb[0].mxu0
  %v1424 = vadd.f32 0.0, %v1423
  %v1425 = vpop.f32.mrb[0].mxu0
  %1426 = vmatprep.mubr.bf16.mxu0 0
  %1427 = vmatmul.mubr.bf16.gmra.mrb[0].mxu0 %v1286
  %v1428 = vpop.f32.mrb[0].mxu0
  %v1429 = vadd.f32 0.0, %v1428
  %v1430 = vpop.f32.mrb[0].mxu0
  %v1431 = vpop.f32.mrb[0].mxu0
  %v1432 = vadd.f32 0.0, %v1431
  %v1433 = vpop.f32.mrb[0].mxu0
  %1434 = vmatprep.mubr.bf16.mxu0 0
  %1435 = vmatmul.mubr.bf16.gmra.mrb[0].mxu0 %v1287
  %v1436 = vpop.f32.mrb[0].mxu0
  %v1437 = vadd.f32 0.0, %v1436
  %v1438 = vpop.f32.mrb[0].mxu0
  %v1439 = vpop.f32.mrb[0].mxu0
  %v1440 = vadd.f32 0.0, %v1439
  %v1441 = vpop.f32.mrb[0].mxu0
  %1442 = vmatprep.mubr.bf16.mxu0 0
  %1443 = vmatmul.mubr.bf16.gmra.mrb[0].mxu0 %v1288
  %v1444 = vpop.f32.mrb[0].mxu0
  %v1445 = vadd.f32 0.0, %v1444
  %v1446 = vpop.f32.mrb[0].mxu0
  %v1447 = vpop.f32.mrb[0].mxu0
  %v1448 = vadd.f32 0.0, %v1447
  %v1449 = vpop.f32.mrb[0].mxu0
  %1450 = vmatprep.mubr.bf16.mxu0 0
  %1451 = vmatmul.mubr.bf16.gmra.mrb[0].mxu0 %v1289
  %v1452 = vpop.f32.mrb[0].mxu0
  %v1453 = vadd.f32 0.0, %v1452
  %v1454 = vpop.f32.mrb[0].mxu0
  %v1455 = vpop.f32.mrb[0].mxu0
  %v1456 = vadd.f32 0.0, %v1455
  %v1457 = vpop.f32.mrb[0].mxu0
  %1458 = vmatprep.mubr.bf16.mxu0 0
  %1459 = vmatmul.mubr.bf16.gmra.mrb[0].mxu0 %v1290
  %v1460 = vpop.f32.mrb[0].mxu0
  %v1461 = vadd.f32 0.0, %v1460
  %v1462 = vpop.f32.mrb[0].mxu0
  %v1463 = vpop.f32.mrb[0].mxu0
  %v1464 = vadd.f32 0.0, %v1463
  %v1465 = vpop.f32.mrb[0].mxu0
  %1466 = vmatprep.mubr.bf16.mxu0 0
  %1467 = vmatmul.mubr.bf16.gmra.mrb[0].mxu0 %v1291
  %v1468 = vpop.f32.mrb[0].mxu0
  %v1469 = vadd.f32 0.0, %v1468
  %v1470 = vpop.f32.mrb[0].mxu0
  %v1471 = vpop.f32.mrb[0].mxu0
  %v1472 = vadd.f32 0.0, %v1471
  %v1473 = vpop.f32.mrb[0].mxu0
  %1474 = vmatprep.mubr.bf16.mxu0 0
  %1475 = vmatmul.mubr.bf16.gmra.mrb[0].mxu0 %v1292
  %v1476 = vpop.f32.mrb[0].mxu0
  %v1477 = vadd.f32 0.0, %v1476
  %v1478 = vpop.f32.mrb[0].mxu0
  %v1479 = vpop.f32.mrb[0].mxu0
  %v1480 = vadd.f32 0.0, %v1479
  %v1481 = vpop.f32.mrb[0].mxu0
  %1482 = vmatprep.mubr.bf16.mxu0 0
  %1483 = vmatmul.mubr.bf16.gmra.mrb[0].mxu0 %v1293
  %v1484 = vpop.f32.mrb[0].mxu0
  %v1485 = vadd.f32 0.0, %v1484
  %v1486 = vpop.f32.mrb[0].mxu0
  %v1487 = vpop.f32.mrb[0].mxu0
  %v1488 = vadd.f32 0.0, %v1487
  %v1489 = vpop.f32.mrb[0].mxu0
  %1490 = vmatprep.mubr.bf16.mxu0 0
  %1491 = vmatmul.mubr.bf16.gmra.mrb[0].mxu0 %v1294
  %v1492 = vpop.f32.mrb[0].mxu0
  %v1493 = vadd.f32 0.0, %v1492
  %v1494 = vpop.f32.mrb[0].mxu0
  %v1495 = vpop.f32.mrb[0].mxu0
  %v1496 = vadd.f32 0.0, %v1495
  %v1497 = vpop.f32.mrb[0].mxu0
  %1498 = vmatprep.mubr.bf16.mxu0 0
  %1499 = vmatmul.mubr.bf16.gmra.mrb[0].mxu0 %v1295
  %v1500 = vpop.f32.mrb[0].mxu0
  %v1501 = vadd.f32 0.0, %v1500
  %v1502 = vpop.f32.mrb[0].mxu0
  %v1503 = vpop.f32.mrb[0].mxu0
  %v1504 = vadd.f32 0.0, %v1503
  %v1505 = vpop.f32.mrb[0].mxu0
  %1506 = vmatprep.mubr.bf16.mxu0 0
  %1507 = vmatmul.mubr.bf16.gmra.mrb[0].mxu0 %v1296
  %v1508 = vpop.f32.mrb[0].mxu0
  %v1509 = vadd.f32 0.0, %v1508
  %v1510 = vpop.f32.mrb[0].mxu0
  %v1511 = vpop.f32.mrb[0].mxu0
  %v1512 = vadd.f32 0.0, %v1511
  %v1513 = vpop.f32.mrb[0].mxu0
  %1514 = vmatprep.mubr.bf16.mxu0 0
  %1515 = vmatmul.mubr.bf16.gmra.mrb[0].mxu0 %v1297
  %v1516 = vpop.f32.mrb[0].mxu0
  %v1517 = vadd.f32 0.0, %v1516
  %v1518 = vpop.f32.mrb[0].mxu0
  %v1519 = vpop.f32.mrb[0].mxu0
  %v1520 = vadd.f32 0.0, %v1519
  %v1521 = vpop.f32.mrb[0].mxu0
  %1522 = vdwg.mxu0
  %v1523 = vpack.c.bf16 %v1400, %v1397
  %v1524 = vpack.c.bf16 %v1408, %v1405
  %v1525 = vpack.c.bf16 %v1416, %v1413
  %v1526 = vpack.c.bf16 %v1424, %v1421
  %v1527 = vpack.c.bf16 %v1432, %v1429
  %v1528 = vpack.c.bf16 %v1440, %v1437
  %v1529 = vpack.c.bf16 %v1448, %v1445
  %v1530 = vpack.c.bf16 %v1456, %v1453
  %v1531 = vpack.c.bf16 %v1464, %v1461
  %v1532 = vpack.c.bf16 %v1472, %v1469
  %v1533 = vpack.c.bf16 %v1480, %v1477
  %v1534 = vpack.c.bf16 %v1488, %v1485
  %v1535 = vpack.c.bf16 %v1496, %v1493
  %v1536 = vpack.c.bf16 %v1504, %v1501
  %v1537 = vpack.c.bf16 %v1512, %v1509
  %v1538 = vpack.c.bf16 %v1520, %v1517
  %s1539 = scalar_lea.vmem %s4, 1
  %v1540 = vld [vmem:[%s1539] sm:$0x1]
  %v1542 = vlaneseq
  %v1543 = vshrl.u32 %v1542, 7
  %v1544 = vsub.s32 0, %v1543
  %v1545 = vrot.slane %v1540, %v1544
  %1547 = vmatprep.subr.bf16.mxu0 0
  %1548 = vmatpush1.bf16.msra.mxu0 %v1523
  %1549 = vmatprep.subr.bf16.mxu0 0
  %1550 = vmatpush1.bf16.msra.mxu0 %v1524
  %1551 = vmatprep.subr.bf16.mxu0 0
  %1552 = vmatpush1.bf16.msra.mxu0 %v1525
  %1553 = vmatprep.subr.bf16.mxu0 0
  %1554 = vmatpush1.bf16.msra.mxu0 %v1526
  %1555 = vmatprep.subr.bf16.mxu0 0
  %1556 = vmatpush1.bf16.msra.mxu0 %v1527
  %1557 = vmatprep.subr.bf16.mxu0 0
  %1558 = vmatpush1.bf16.msra.mxu0 %v1528
  %1559 = vmatprep.subr.bf16.mxu0 0
  %1560 = vmatpush1.bf16.msra.mxu0 %v1529
  %1561 = vmatprep.subr.bf16.mxu0 0
  %1562 = vmatpush1.bf16.msra.mxu0 %v1530
  %1563 = vmatprep.subr.bf16.mxu0 0
  %1564 = vmatpush1.bf16.msra.mxu0 %v1531
  %1565 = vmatprep.subr.bf16.mxu0 0
  %1566 = vmatpush1.bf16.msra.mxu0 %v1532
  %1567 = vmatprep.subr.bf16.mxu0 0
  %1568 = vmatpush1.bf16.msra.mxu0 %v1533
  %1569 = vmatprep.subr.bf16.mxu0 0
  %1570 = vmatpush1.bf16.msra.mxu0 %v1534
  %1571 = vmatprep.subr.bf16.mxu0 0
  %1572 = vmatpush1.bf16.msra.mxu0 %v1535
  %1573 = vmatprep.subr.bf16.mxu0 0
  %1574 = vmatpush1.bf16.msra.mxu0 %v1536
  %1575 = vmatprep.subr.bf16.mxu0 0
  %1576 = vmatpush1.bf16.msra.mxu0 %v1537
  %1577 = vmatprep.subr.bf16.mxu0 0
  %1578 = vmatpush1.bf16.msra.mxu0 %v1538
  %1579 = vmatprep.mubr.bf16.mxu0 %v541
  %1580 = vmatmul.mubr.bf16.gmra.mrb[0].mxu0 %v540
  %v1581 = vpop.f32.mrb[0].mxu0
  %v1582 = vadd.f32 %v1545, %v1581
  %v1583 = vpop.f32.mrb[0].mxu0
  %v1584 = vpop.f32.mrb[0].mxu0
  %v1585 = vadd.f32 %v1545, %v1584
  %v1586 = vpop.f32.mrb[0].mxu0
  %1587 = vmatprep.mubr.bf16.mxu0 %v543
  %1588 = vmatmul.mubr.bf16.gmra.mrb[0].mxu0 %v542
  %v1589 = vpop.f32.mrb[0].mxu0
  %v1590 = vadd.f32 %v1545, %v1589
  %v1591 = vpop.f32.mrb[0].mxu0
  %v1592 = vpop.f32.mrb[0].mxu0
  %v1593 = vadd.f32 %v1545, %v1592
  %v1594 = vpop.f32.mrb[0].mxu0
  %1595 = vmatprep.mubr.bf16.mxu0 %v545
  %1596 = vmatmul.mubr.bf16.gmra.mrb[0].mxu0 %v544
  %v1597 = vpop.f32.mrb[0].mxu0
  %v1598 = vadd.f32 %v1545, %v1597
  %v1599 = vpop.f32.mrb[0].mxu0
  %v1600 = vpop.f32.mrb[0].mxu0
  %v1601 = vadd.f32 %v1545, %v1600
  %v1602 = vpop.f32.mrb[0].mxu0
  %1603 = vmatprep.mubr.bf16.mxu0 %v547
  %1604 = vmatmul.mubr.bf16.gmra.mrb[0].mxu0 %v546
  %v1605 = vpop.f32.mrb[0].mxu0
  %v1606 = vadd.f32 %v1545, %v1605
  %v1607 = vpop.f32.mrb[0].mxu0
  %v1608 = vpop.f32.mrb[0].mxu0
  %v1609 = vadd.f32 %v1545, %v1608
  %v1610 = vpop.f32.mrb[0].mxu0
  %1611 = vmatprep.mubr.bf16.mxu0 %v549
  %1612 = vmatmul.mubr.bf16.gmra.mrb[0].mxu0 %v548
  %v1613 = vpop.f32.mrb[0].mxu0
  %v1614 = vadd.f32 %v1545, %v1613
  %v1615 = vpop.f32.mrb[0].mxu0
  %v1616 = vpop.f32.mrb[0].mxu0
  %v1617 = vadd.f32 %v1545, %v1616
  %v1618 = vpop.f32.mrb[0].mxu0
  %1619 = vmatprep.mubr.bf16.mxu0 %v551
  %1620 = vmatmul.mubr.bf16.gmra.mrb[0].mxu0 %v550
  %v1621 = vpop.f32.mrb[0].mxu0
  %v1622 = vadd.f32 %v1545, %v1621
  %v1623 = vpop.f32.mrb[0].mxu0
  %v1624 = vpop.f32.mrb[0].mxu0
  %v1625 = vadd.f32 %v1545, %v1624
  %v1626 = vpop.f32.mrb[0].mxu0
  %1627 = vmatprep.mubr.bf16.mxu0 %v553
  %1628 = vmatmul.mubr.bf16.gmra.mrb[0].mxu0 %v552
  %v1629 = vpop.f32.mrb[0].mxu0
  %v1630 = vadd.f32 %v1545, %v1629
  %v1631 = vpop.f32.mrb[0].mxu0
  %v1632 = vpop.f32.mrb[0].mxu0
  %v1633 = vadd.f32 %v1545, %v1632
  %v1634 = vpop.f32.mrb[0].mxu0
  %1635 = vmatprep.mubr.bf16.mxu0 %v555
  %1636 = vmatmul.mubr.bf16.gmra.mrb[0].mxu0 %v554
  %v1637 = vpop.f32.mrb[0].mxu0
  %v1638 = vadd.f32 %v1545, %v1637
  %v1639 = vpop.f32.mrb[0].mxu0
  %v1640 = vpop.f32.mrb[0].mxu0
  %v1641 = vadd.f32 %v1545, %v1640
  %v1642 = vpop.f32.mrb[0].mxu0
  %1643 = vmatprep.mubr.bf16.mxu0 %v557
  %1644 = vmatmul.mubr.bf16.gmra.mrb[0].mxu0 %v556
  %v1645 = vpop.f32.mrb[0].mxu0
  %v1646 = vadd.f32 %v1545, %v1645
  %v1647 = vpop.f32.mrb[0].mxu0
  %v1648 = vpop.f32.mrb[0].mxu0
  %v1649 = vadd.f32 %v1545, %v1648
  %v1650 = vpop.f32.mrb[0].mxu0
  %1651 = vmatprep.mubr.bf16.mxu0 %v559
  %1652 = vmatmul.mubr.bf16.gmra.mrb[0].mxu0 %v558
  %v1653 = vpop.f32.mrb[0].mxu0
  %v1654 = vadd.f32 %v1545, %v1653
  %v1655 = vpop.f32.mrb[0].mxu0
  %v1656 = vpop.f32.mrb[0].mxu0
  %v1657 = vadd.f32 %v1545, %v1656
  %v1658 = vpop.f32.mrb[0].mxu0
  %1659 = vmatprep.mubr.bf16.mxu0 %v561
  %1660 = vmatmul.mubr.bf16.gmra.mrb[0].mxu0 %v560
  %v1661 = vpop.f32.mrb[0].mxu0
  %v1662 = vadd.f32 %v1545, %v1661
  %v1663 = vpop.f32.mrb[0].mxu0
  %v1664 = vpop.f32.mrb[0].mxu0
  %v1665 = vadd.f32 %v1545, %v1664
  %v1666 = vpop.f32.mrb[0].mxu0
  %1667 = vmatprep.mubr.bf16.mxu0 %v563
  %1668 = vmatmul.mubr.bf16.gmra.mrb[0].mxu0 %v562
  %v1669 = vpop.f32.mrb[0].mxu0
  %v1670 = vadd.f32 %v1545, %v1669
  %v1671 = vpop.f32.mrb[0].mxu0
  %v1672 = vpop.f32.mrb[0].mxu0
  %v1673 = vadd.f32 %v1545, %v1672
  %v1674 = vpop.f32.mrb[0].mxu0
  %1675 = vmatprep.mubr.bf16.mxu0 %v565
  %1676 = vmatmul.mubr.bf16.gmra.mrb[0].mxu0 %v564
  %v1677 = vpop.f32.mrb[0].mxu0
  %v1678 = vadd.f32 %v1545, %v1677
  %v1679 = vpop.f32.mrb[0].mxu0
  %v1680 = vpop.f32.mrb[0].mxu0
  %v1681 = vadd.f32 %v1545, %v1680
  %v1682 = vpop.f32.mrb[0].mxu0
  %1683 = vmatprep.mubr.bf16.mxu0 %v567
  %1684 = vmatmul.mubr.bf16.gmra.mrb[0].mxu0 %v566
  %v1685 = vpop.f32.mrb[0].mxu0
  %v1686 = vadd.f32 %v1545, %v1685
  %v1687 = vpop.f32.mrb[0].mxu0
  %v1688 = vpop.f32.mrb[0].mxu0
  %v1689 = vadd.f32 %v1545, %v1688
  %v1690 = vpop.f32.mrb[0].mxu0
  %1691 = vmatprep.mubr.bf16.mxu0 %v569
  %1692 = vmatmul.mubr.bf16.gmra.mrb[0].mxu0 %v568
  %v1693 = vpop.f32.mrb[0].mxu0
  %v1694 = vadd.f32 %v1545, %v1693
  %v1695 = vpop.f32.mrb[0].mxu0
  %v1696 = vpop.f32.mrb[0].mxu0
  %v1697 = vadd.f32 %v1545, %v1696
  %v1698 = vpop.f32.mrb[0].mxu0
  %1699 = vmatprep.mubr.bf16.mxu0 %v571
  %1700 = vmatmul.mubr.bf16.gmra.mrb[0].mxu0 %v570
  %v1701 = vpop.f32.mrb[0].mxu0
  %v1702 = vadd.f32 %v1545, %v1701
  %v1703 = vpop.f32.mrb[0].mxu0
  %v1704 = vpop.f32.mrb[0].mxu0
  %v1705 = vadd.f32 %v1545, %v1704
  %v1706 = vpop.f32.mrb[0].mxu0
  %1707 = vdwg.mxu0
  %s1708 = scalar_lea.vmem %s5, 1
  %v1709 = vld [vmem:[%s1708] sm:$0x1]
  %s1710 = scalar_lea.vmem %s6, 1
  %v1711 = vld [vmem:[%s1710] sm:$0x1]
  %s1712 = scalar_lea.vmem %s7, 1
  %v1713 = vld [vmem:[%s1712] sm:$0x1]
  %v1714 = vmul.f32 %v1582, %v865
  %v1715 = vmul.f32 %v1585, %v866
  %v1716 = vmul.f32 %v1590, %v867
  %v1717 = vmul.f32 %v1593, %v868
  %v1718 = vmul.f32 %v1598, %v869
  %v1719 = vmul.f32 %v1601, %v870
  %v1720 = vmul.f32 %v1606, %v871
  %v1721 = vmul.f32 %v1609, %v872
  %v1722 = vmul.f32 %v1614, %v873
  %v1723 = vmul.f32 %v1617, %v874
  %v1724 = vmul.f32 %v1622, %v875
  %v1725 = vmul.f32 %v1625, %v876
  %v1726 = vmul.f32 %v1630, %v877
  %v1727 = vmul.f32 %v1633, %v878
  %v1728 = vmul.f32 %v1638, %v879
  %v1729 = vmul.f32 %v1641, %v880
  %v1730 = vmul.f32 %v1646, %v881
  %v1731 = vmul.f32 %v1649, %v882
  %v1732 = vmul.f32 %v1654, %v883
  %v1733 = vmul.f32 %v1657, %v884
  %v1734 = vmul.f32 %v1662, %v885
  %v1735 = vmul.f32 %v1665, %v886
  %v1736 = vmul.f32 %v1670, %v887
  %v1737 = vmul.f32 %v1673, %v888
  %v1738 = vmul.f32 %v1678, %v889
  %v1739 = vmul.f32 %v1681, %v890
  %v1740 = vmul.f32 %v1686, %v891
  %v1741 = vmul.f32 %v1689, %v892
  %v1742 = vmul.f32 %v1694, %v893
  %v1743 = vmul.f32 %v1697, %v894
  %v1744 = vmul.f32 %v1702, %v895
  %v1745 = vmul.f32 %v1705, %v896
  %v1746 = vadd.f32 %v1714, %v1715
  %v1747 = vadd.f32 %v1746, %v1716
  %v1748 = vadd.f32 %v1747, %v1717
  %v1749 = vadd.f32 %v1748, %v1718
  %v1750 = vadd.f32 %v1749, %v1719
  %v1751 = vadd.f32 %v1750, %v1720
  %v1752 = vadd.f32 %v1751, %v1721
  %v1753 = vadd.f32 %v1752, %v1722
  %v1754 = vadd.f32 %v1753, %v1723
  %v1755 = vadd.f32 %v1754, %v1724
  %v1756 = vadd.f32 %v1755, %v1725
  %v1757 = vadd.f32 %v1756, %v1726
  %v1758 = vadd.f32 %v1757, %v1727
  %v1759 = vadd.f32 %v1758, %v1728
  %v1760 = vadd.f32 %v1759, %v1729
  %v1761 = vadd.f32 %v1760, %v1730
  %v1762 = vadd.f32 %v1761, %v1731
  %v1763 = vadd.f32 %v1762, %v1732
  %v1764 = vadd.f32 %v1763, %v1733
  %v1765 = vadd.f32 %v1764, %v1734
  %v1766 = vadd.f32 %v1765, %v1735
  %v1767 = vadd.f32 %v1766, %v1736
  %v1768 = vadd.f32 %v1767, %v1737
  %v1769 = vadd.f32 %v1768, %v1738
  %v1770 = vadd.f32 %v1769, %v1739
  %v1771 = vadd.f32 %v1770, %v1740
  %v1772 = vadd.f32 %v1771, %v1741
  %v1773 = vadd.f32 %v1772, %v1742
  %v1774 = vadd.f32 %v1773, %v1743
  %v1775 = vadd.f32 %v1774, %v1744
  %v1776 = vadd.f32 %v1775, %v1745
  %v1777 = vrot.slane %v1776, 4
  %v1778 = vadd.f32 %v1776, %v1777
  %v1779 = vrot.slane %v1778, 2
  %v1780 = vadd.f32 %v1778, %v1779
  %v1781 = vrot.slane %v1780, 1
  %v1782 = vadd.f32 %v1780, %v1781
  %v1783 = vmul.f32 %v1782, 0.0625
  %v1784 = vmul.f32 %v1713, %v1783
  %v1786 = vlaneseq
  %v1787 = vshrl.u32 %v1786, 7
  %v1788 = vsub.s32 0, %v1787
  %v1789 = vrot.slane %v1784, %v1788
  %v1791 = vsub.f32 %v1582, %v1789
  %v1792 = vsub.f32 %v1585, %v1789
  %v1793 = vsub.f32 %v1590, %v1789
  %v1794 = vsub.f32 %v1593, %v1789
  %v1795 = vsub.f32 %v1598, %v1789
  %v1796 = vsub.f32 %v1601, %v1789
  %v1797 = vsub.f32 %v1606, %v1789
  %v1798 = vsub.f32 %v1609, %v1789
  %v1799 = vsub.f32 %v1614, %v1789
  %v1800 = vsub.f32 %v1617, %v1789
  %v1801 = vsub.f32 %v1622, %v1789
  %v1802 = vsub.f32 %v1625, %v1789
  %v1803 = vsub.f32 %v1630, %v1789
  %v1804 = vsub.f32 %v1633, %v1789
  %v1805 = vsub.f32 %v1638, %v1789
  %v1806 = vsub.f32 %v1641, %v1789
  %v1807 = vsub.f32 %v1646, %v1789
  %v1808 = vsub.f32 %v1649, %v1789
  %v1809 = vsub.f32 %v1654, %v1789
  %v1810 = vsub.f32 %v1657, %v1789
  %v1811 = vsub.f32 %v1662, %v1789
  %v1812 = vsub.f32 %v1665, %v1789
  %v1813 = vsub.f32 %v1670, %v1789
  %v1814 = vsub.f32 %v1673, %v1789
  %v1815 = vsub.f32 %v1678, %v1789
  %v1816 = vsub.f32 %v1681, %v1789
  %v1817 = vsub.f32 %v1686, %v1789
  %v1818 = vsub.f32 %v1689, %v1789
  %v1819 = vsub.f32 %v1694, %v1789
  %v1820 = vsub.f32 %v1697, %v1789
  %v1821 = vsub.f32 %v1702, %v1789
  %v1822 = vsub.f32 %v1705, %v1789
  %v1823 = vmul.f32 %v1791, %v865
  %v1824 = vmul.f32 %v1792, %v866
  %v1825 = vmul.f32 %v1793, %v867
  %v1826 = vmul.f32 %v1794, %v868
  %v1827 = vmul.f32 %v1795, %v869
  %v1828 = vmul.f32 %v1796, %v870
  %v1829 = vmul.f32 %v1797, %v871
  %v1830 = vmul.f32 %v1798, %v872
  %v1831 = vmul.f32 %v1799, %v873
  %v1832 = vmul.f32 %v1800, %v874
  %v1833 = vmul.f32 %v1801, %v875
  %v1834 = vmul.f32 %v1802, %v876
  %v1835 = vmul.f32 %v1803, %v877
  %v1836 = vmul.f32 %v1804, %v878
  %v1837 = vmul.f32 %v1805, %v879
  %v1838 = vmul.f32 %v1806, %v880
  %v1839 = vmul.f32 %v1807, %v881
  %v1840 = vmul.f32 %v1808, %v882
  %v1841 = vmul.f32 %v1809, %v883
  %v1842 = vmul.f32 %v1810, %v884
  %v1843 = vmul.f32 %v1811, %v885
  %v1844 = vmul.f32 %v1812, %v886
  %v1845 = vmul.f32 %v1813, %v887
  %v1846 = vmul.f32 %v1814, %v888
  %v1847 = vmul.f32 %v1815, %v889
  %v1848 = vmul.f32 %v1816, %v890
  %v1849 = vmul.f32 %v1817, %v891
  %v1850 = vmul.f32 %v1818, %v892
  %v1851 = vmul.f32 %v1819, %v893
  %v1852 = vmul.f32 %v1820, %v894
  %v1853 = vmul.f32 %v1821, %v895
  %v1854 = vmul.f32 %v1822, %v896
  %v1855 = vmul.f32 %v1823, %v1823
  %v1856 = vmul.f32 %v1824, %v1824
  %v1857 = vmul.f32 %v1825, %v1825
  %v1858 = vmul.f32 %v1826, %v1826
  %v1859 = vmul.f32 %v1827, %v1827
  %v1860 = vmul.f32 %v1828, %v1828
  %v1861 = vmul.f32 %v1829, %v1829
  %v1862 = vmul.f32 %v1830, %v1830
  %v1863 = vmul.f32 %v1831, %v1831
  %v1864 = vmul.f32 %v1832, %v1832
  %v1865 = vmul.f32 %v1833, %v1833
  %v1866 = vmul.f32 %v1834, %v1834
  %v1867 = vmul.f32 %v1835, %v1835
  %v1868 = vmul.f32 %v1836, %v1836
  %v1869 = vmul.f32 %v1837, %v1837
  %v1870 = vmul.f32 %v1838, %v1838
  %v1871 = vmul.f32 %v1839, %v1839
  %v1872 = vmul.f32 %v1840, %v1840
  %v1873 = vmul.f32 %v1841, %v1841
  %v1874 = vmul.f32 %v1842, %v1842
  %v1875 = vmul.f32 %v1843, %v1843
  %v1876 = vmul.f32 %v1844, %v1844
  %v1877 = vmul.f32 %v1845, %v1845
  %v1878 = vmul.f32 %v1846, %v1846
  %v1879 = vmul.f32 %v1847, %v1847
  %v1880 = vmul.f32 %v1848, %v1848
  %v1881 = vmul.f32 %v1849, %v1849
  %v1882 = vmul.f32 %v1850, %v1850
  %v1883 = vmul.f32 %v1851, %v1851
  %v1884 = vmul.f32 %v1852, %v1852
  %v1885 = vmul.f32 %v1853, %v1853
  %v1886 = vmul.f32 %v1854, %v1854
  %v1887 = vadd.f32 %v1855, %v1856
  %v1888 = vadd.f32 %v1887, %v1857
  %v1889 = vadd.f32 %v1888, %v1858
  %v1890 = vadd.f32 %v1889, %v1859
  %v1891 = vadd.f32 %v1890, %v1860
  %v1892 = vadd.f32 %v1891, %v1861
  %v1893 = vadd.f32 %v1892, %v1862
  %v1894 = vadd.f32 %v1893, %v1863
  %v1895 = vadd.f32 %v1894, %v1864
  %v1896 = vadd.f32 %v1895, %v1865
  %v1897 = vadd.f32 %v1896, %v1866
  %v1898 = vadd.f32 %v1897, %v1867
  %v1899 = vadd.f32 %v1898, %v1868
  %v1900 = vadd.f32 %v1899, %v1869
  %v1901 = vadd.f32 %v1900, %v1870
  %v1902 = vadd.f32 %v1901, %v1871
  %v1903 = vadd.f32 %v1902, %v1872
  %v1904 = vadd.f32 %v1903, %v1873
  %v1905 = vadd.f32 %v1904, %v1874
  %v1906 = vadd.f32 %v1905, %v1875
  %v1907 = vadd.f32 %v1906, %v1876
  %v1908 = vadd.f32 %v1907, %v1877
  %v1909 = vadd.f32 %v1908, %v1878
  %v1910 = vadd.f32 %v1909, %v1879
  %v1911 = vadd.f32 %v1910, %v1880
  %v1912 = vadd.f32 %v1911, %v1881
  %v1913 = vadd.f32 %v1912, %v1882
  %v1914 = vadd.f32 %v1913, %v1883
  %v1915 = vadd.f32 %v1914, %v1884
  %v1916 = vadd.f32 %v1915, %v1885
  %v1917 = vadd.f32 %v1916, %v1886
  %v1918 = vrot.slane %v1917, 4
  %v1919 = vadd.f32 %v1917, %v1918
  %v1920 = vrot.slane %v1919, 2
  %v1921 = vadd.f32 %v1919, %v1920
  %v1922 = vrot.slane %v1921, 1
  %v1923 = vadd.f32 %v1921, %v1922
  %v1924 = vmul.f32 %v1923, 0.0625
  %v1925 = vadd.f32 %v1924, 1e-05
  %v1926 = vrsqrt.pop %v1925
  %v1927 = vmul.f32 %v1823, %v1926
  %v1928 = vmul.f32 %v1824, %v1926
  %v1929 = vmul.f32 %v1825, %v1926
  %v1930 = vmul.f32 %v1826, %v1926
  %v1931 = vmul.f32 %v1827, %v1926
  %v1932 = vmul.f32 %v1828, %v1926
  %v1933 = vmul.f32 %v1829, %v1926
  %v1934 = vmul.f32 %v1830, %v1926
  %v1935 = vmul.f32 %v1831, %v1926
  %v1936 = vmul.f32 %v1832, %v1926
  %v1937 = vmul.f32 %v1833, %v1926
  %v1938 = vmul.f32 %v1834, %v1926
  %v1939 = vmul.f32 %v1835, %v1926
  %v1940 = vmul.f32 %v1836, %v1926
  %v1941 = vmul.f32 %v1837, %v1926
  %v1942 = vmul.f32 %v1838, %v1926
  %v1943 = vmul.f32 %v1839, %v1926
  %v1944 = vmul.f32 %v1840, %v1926
  %v1945 = vmul.f32 %v1841, %v1926
  %v1946 = vmul.f32 %v1842, %v1926
  %v1947 = vmul.f32 %v1843, %v1926
  %v1948 = vmul.f32 %v1844, %v1926
  %v1949 = vmul.f32 %v1845, %v1926
  %v1950 = vmul.f32 %v1846, %v1926
  %v1951 = vmul.f32 %v1847, %v1926
  %v1952 = vmul.f32 %v1848, %v1926
  %v1953 = vmul.f32 %v1849, %v1926
  %v1954 = vmul.f32 %v1850, %v1926
  %v1955 = vmul.f32 %v1851, %v1926
  %v1956 = vmul.f32 %v1852, %v1926
  %v1957 = vmul.f32 %v1853, %v1926
  %v1958 = vmul.f32 %v1854, %v1926
  %v1960 = vlaneseq
  %v1961 = vshrl.u32 %v1960, 7
  %v1962 = vsub.s32 0, %v1961
  %v1963 = vrot.slane %v1709, %v1962
  %v1965 = vmul.f32 %v1927, %v1963
  %v1966 = vmul.f32 %v1928, %v1963
  %v1967 = vmul.f32 %v1929, %v1963
  %v1968 = vmul.f32 %v1930, %v1963
  %v1969 = vmul.f32 %v1931, %v1963
  %v1970 = vmul.f32 %v1932, %v1963
  %v1971 = vmul.f32 %v1933, %v1963
  %v1972 = vmul.f32 %v1934, %v1963
  %v1973 = vmul.f32 %v1935, %v1963
  %v1974 = vmul.f32 %v1936, %v1963
  %v1975 = vmul.f32 %v1937, %v1963
  %v1976 = vmul.f32 %v1938, %v1963
  %v1977 = vmul.f32 %v1939, %v1963
  %v1978 = vmul.f32 %v1940, %v1963
  %v1979 = vmul.f32 %v1941, %v1963
  %v1980 = vmul.f32 %v1942, %v1963
  %v1981 = vmul.f32 %v1943, %v1963
  %v1982 = vmul.f32 %v1944, %v1963
  %v1983 = vmul.f32 %v1945, %v1963
  %v1984 = vmul.f32 %v1946, %v1963
  %v1985 = vmul.f32 %v1947, %v1963
  %v1986 = vmul.f32 %v1948, %v1963
  %v1987 = vmul.f32 %v1949, %v1963
  %v1988 = vmul.f32 %v1950, %v1963
  %v1989 = vmul.f32 %v1951, %v1963
  %v1990 = vmul.f32 %v1952, %v1963
  %v1991 = vmul.f32 %v1953, %v1963
  %v1992 = vmul.f32 %v1954, %v1963
  %v1993 = vmul.f32 %v1955, %v1963
  %v1994 = vmul.f32 %v1956, %v1963
  %v1995 = vmul.f32 %v1957, %v1963
  %v1996 = vmul.f32 %v1958, %v1963
  %v1998 = vlaneseq
  %v1999 = vshrl.u32 %v1998, 7
  %v2000 = vsub.s32 0, %v1999
  %v2001 = vrot.slane %v1711, %v2000
  %v2003 = vadd.f32 %v1965, %v2001
  %v2004 = vadd.f32 %v1966, %v2001
  %v2005 = vadd.f32 %v1967, %v2001
  %v2006 = vadd.f32 %v1968, %v2001
  %v2007 = vadd.f32 %v1969, %v2001
  %v2008 = vadd.f32 %v1970, %v2001
  %v2009 = vadd.f32 %v1971, %v2001
  %v2010 = vadd.f32 %v1972, %v2001
  %v2011 = vadd.f32 %v1973, %v2001
  %v2012 = vadd.f32 %v1974, %v2001
  %v2013 = vadd.f32 %v1975, %v2001
  %v2014 = vadd.f32 %v1976, %v2001
  %v2015 = vadd.f32 %v1977, %v2001
  %v2016 = vadd.f32 %v1978, %v2001
  %v2017 = vadd.f32 %v1979, %v2001
  %v2018 = vadd.f32 %v1980, %v2001
  %v2019 = vadd.f32 %v1981, %v2001
  %v2020 = vadd.f32 %v1982, %v2001
  %v2021 = vadd.f32 %v1983, %v2001
  %v2022 = vadd.f32 %v1984, %v2001
  %v2023 = vadd.f32 %v1985, %v2001
  %v2024 = vadd.f32 %v1986, %v2001
  %v2025 = vadd.f32 %v1987, %v2001
  %v2026 = vadd.f32 %v1988, %v2001
  %v2027 = vadd.f32 %v1989, %v2001
  %v2028 = vadd.f32 %v1990, %v2001
  %v2029 = vadd.f32 %v1991, %v2001
  %v2030 = vadd.f32 %v1992, %v2001
  %v2031 = vadd.f32 %v1993, %v2001
  %v2032 = vadd.f32 %v1994, %v2001
  %v2033 = vadd.f32 %v1995, %v2001
  %v2034 = vadd.f32 %v1996, %v2001
  %v2035 = vmax.f32 %v2003, 0.0
  %v2036 = vmax.f32 %v2004, 0.0
  %v2037 = vmax.f32 %v2005, 0.0
  %v2038 = vmax.f32 %v2006, 0.0
  %v2039 = vmax.f32 %v2007, 0.0
  %v2040 = vmax.f32 %v2008, 0.0
  %v2041 = vmax.f32 %v2009, 0.0
  %v2042 = vmax.f32 %v2010, 0.0
  %v2043 = vmax.f32 %v2011, 0.0
  %v2044 = vmax.f32 %v2012, 0.0
  %v2045 = vmax.f32 %v2013, 0.0
  %v2046 = vmax.f32 %v2014, 0.0
  %v2047 = vmax.f32 %v2015, 0.0
  %v2048 = vmax.f32 %v2016, 0.0
  %v2049 = vmax.f32 %v2017, 0.0
  %v2050 = vmax.f32 %v2018, 0.0
  %v2051 = vmax.f32 %v2019, 0.0
  %v2052 = vmax.f32 %v2020, 0.0
  %v2053 = vmax.f32 %v2021, 0.0
  %v2054 = vmax.f32 %v2022, 0.0
  %v2055 = vmax.f32 %v2023, 0.0
  %v2056 = vmax.f32 %v2024, 0.0
  %v2057 = vmax.f32 %v2025, 0.0
  %v2058 = vmax.f32 %v2026, 0.0
  %v2059 = vmax.f32 %v2027, 0.0
  %v2060 = vmax.f32 %v2028, 0.0
  %v2061 = vmax.f32 %v2029, 0.0
  %v2062 = vmax.f32 %v2030, 0.0
  %v2063 = vmax.f32 %v2031, 0.0
  %v2064 = vmax.f32 %v2032, 0.0
  %v2065 = vmax.f32 %v2033, 0.0
  %v2066 = vmax.f32 %v2034, 0.0
  %v2067 = vmul.f32 %v2035, %v865
  %v2068 = vmul.f32 %v2036, %v866
  %v2069 = vmul.f32 %v2037, %v867
  %v2070 = vmul.f32 %v2038, %v868
  %v2071 = vmul.f32 %v2039, %v869
  %v2072 = vmul.f32 %v2040, %v870
  %v2073 = vmul.f32 %v2041, %v871
  %v2074 = vmul.f32 %v2042, %v872
  %v2075 = vmul.f32 %v2043, %v873
  %v2076 = vmul.f32 %v2044, %v874
  %v2077 = vmul.f32 %v2045, %v875
  %v2078 = vmul.f32 %v2046, %v876
  %v2079 = vmul.f32 %v2047, %v877
  %v2080 = vmul.f32 %v2048, %v878
  %v2081 = vmul.f32 %v2049, %v879
  %v2082 = vmul.f32 %v2050, %v880
  %v2083 = vmul.f32 %v2051, %v881
  %v2084 = vmul.f32 %v2052, %v882
  %v2085 = vmul.f32 %v2053, %v883
  %v2086 = vmul.f32 %v2054, %v884
  %v2087 = vmul.f32 %v2055, %v885
  %v2088 = vmul.f32 %v2056, %v886
  %v2089 = vmul.f32 %v2057, %v887
  %v2090 = vmul.f32 %v2058, %v888
  %v2091 = vmul.f32 %v2059, %v889
  %v2092 = vmul.f32 %v2060, %v890
  %v2093 = vmul.f32 %v2061, %v891
  %v2094 = vmul.f32 %v2062, %v892
  %v2095 = vmul.f32 %v2063, %v893
  %v2096 = vmul.f32 %v2064, %v894
  %v2097 = vmul.f32 %v2065, %v895
  %v2098 = vmul.f32 %v2066, %v896
  %v2099 = vpack.c.bf16 %v2068, %v2067
  %v2100 = vpack.c.bf16 %v2070, %v2069
  %v2101 = vpack.c.bf16 %v2072, %v2071
  %v2102 = vpack.c.bf16 %v2074, %v2073
  %v2103 = vpack.c.bf16 %v2076, %v2075
  %v2104 = vpack.c.bf16 %v2078, %v2077
  %v2105 = vpack.c.bf16 %v2080, %v2079
  %v2106 = vpack.c.bf16 %v2082, %v2081
  %v2107 = vpack.c.bf16 %v2084, %v2083
  %v2108 = vpack.c.bf16 %v2086, %v2085
  %v2109 = vpack.c.bf16 %v2088, %v2087
  %v2110 = vpack.c.bf16 %v2090, %v2089
  %v2111 = vpack.c.bf16 %v2092, %v2091
  %v2112 = vpack.c.bf16 %v2094, %v2093
  %v2113 = vpack.c.bf16 %v2096, %v2095
  %v2114 = vpack.c.bf16 %v2098, %v2097
  %s2115 = scalar_lea.vmem %s3, 64
  %v2116 = vld [vmem:[%s2115] sm:$0xf]
  %v2117 = vld [vmem:[%s2115 + $0x4] sm:$0xf]
  %v2118 = vld [vmem:[%s2115 + $0x8] sm:$0xf]
  %v2119 = vld [vmem:[%s2115 + $0xc] sm:$0xf]
  %v2120 = vld [vmem:[%s2115 + $0x10] sm:$0xf]
  %v2121 = vld [vmem:[%s2115 + $0x14] sm:$0xf]
  %v2122 = vld [vmem:[%s2115 + $0x18] sm:$0xf]
  %v2123 = vld [vmem:[%s2115 + $0x1c] sm:$0xf]
  %v2124 = vld [vmem:[%s2115 + $0x20] sm:$0xf]
  %v2125 = vld [vmem:[%s2115 + $0x24] sm:$0xf]
  %v2126 = vld [vmem:[%s2115 + $0x28] sm:$0xf]
  %v2127 = vld [vmem:[%s2115 + $0x2c] sm:$0xf]
  %v2128 = vld [vmem:[%s2115 + $0x30] sm:$0xf]
  %v2129 = vld [vmem:[%s2115 + $0x34] sm:$0xf]
  %v2130 = vld [vmem:[%s2115 + $0x38] sm:$0xf]
  %v2131 = vld [vmem:[%s2115 + $0x3c] sm:$0xf]
  %v2148 = vunpack.c.l.b16 %v2116
  %v2149 = vunpack.c.l.b16 %v2117
  %v2150 = vunpack.c.l.b16 %v2118
  %v2151 = vunpack.c.l.b16 %v2119
  %v2152 = vunpack.c.l.b16 %v2120
  %v2153 = vunpack.c.l.b16 %v2121
  %v2154 = vunpack.c.l.b16 %v2122
  %v2155 = vunpack.c.l.b16 %v2123
  %v2156 = vunpack.c.l.b16 %v2124
  %v2157 = vunpack.c.l.b16 %v2125
  %v2158 = vunpack.c.l.b16 %v2126
  %v2159 = vunpack.c.l.b16 %v2127
  %v2160 = vunpack.c.l.b16 %v2128
  %v2161 = vunpack.c.l.b16 %v2129
  %v2162 = vunpack.c.l.b16 %v2130
  %v2163 = vunpack.c.l.b16 %v2131
  %v2164 = vpack.c.b16 %v2149, %v2148
  %v2165 = vpack.c.b16 %v2151, %v2150
  %v2166 = vpack.c.b16 %v2153, %v2152
  %v2167 = vpack.c.b16 %v2155, %v2154
  %v2168 = vpack.c.b16 %v2157, %v2156
  %v2169 = vpack.c.b16 %v2159, %v2158
  %v2170 = vpack.c.b16 %v2161, %v2160
  %v2171 = vpack.c.b16 %v2163, %v2162
  %2180 = vmatprep.subr.bf16.mxu0 0
  %2181 = vmatpush1.bf16.msra.mxu0 %v2164
  %2182 = vmatprep.subr.bf16.mxu0 0
  %2183 = vmatpush1.bf16.msra.mxu0 %v2165
  %2184 = vmatprep.subr.bf16.mxu0 0
  %2185 = vmatpush1.bf16.msra.mxu0 %v2166
  %2186 = vmatprep.subr.bf16.mxu0 0
  %2187 = vmatpush1.bf16.msra.mxu0 %v2167
  %2188 = vmatprep.subr.bf16.mxu0 0
  %2189 = vmatpush1.bf16.msra.mxu0 %v2168
  %2190 = vmatprep.subr.bf16.mxu0 0
  %2191 = vmatpush1.bf16.msra.mxu0 %v2169
  %2192 = vmatprep.subr.bf16.mxu0 0
  %2193 = vmatpush1.bf16.msra.mxu0 %v2170
  %2194 = vmatprep.subr.bf16.mxu0 0
  %2195 = vmatpush1.bf16.msra.mxu0 %v2171
  %2196 = vmatprep.subr.bf16.mxu0 0
  %2197 = vmatpush1.bf16.msra.mxu0 0
  %2198 = vmatprep.subr.bf16.mxu0 0
  %2199 = vmatpush1.bf16.msra.mxu0 0
  %2200 = vmatprep.subr.bf16.mxu0 0
  %2201 = vmatpush1.bf16.msra.mxu0 0
  %2202 = vmatprep.subr.bf16.mxu0 0
  %2203 = vmatpush1.bf16.msra.mxu0 0
  %2204 = vmatprep.subr.bf16.mxu0 0
  %2205 = vmatpush1.bf16.msra.mxu0 0
  %2206 = vmatprep.subr.bf16.mxu0 0
  %2207 = vmatpush1.bf16.msra.mxu0 0
  %2208 = vmatprep.subr.bf16.mxu0 0
  %2209 = vmatpush1.bf16.msra.mxu0 0
  %2210 = vmatprep.subr.bf16.mxu0 0
  %2211 = vmatpush1.bf16.msra.mxu0 0
  %2212 = vmatprep.mubr.bf16.mxu0 0
  %2213 = vmatmul.mubr.bf16.gmra.mrb[0].mxu0 %v2099
  %v2214 = vpop.f32.mrb[0].mxu0
  %v2215 = vadd.f32 0.0, %v2214
  %v2216 = vpop.f32.mrb[0].mxu0
  %v2217 = vpop.f32.mrb[0].mxu0
  %v2218 = vadd.f32 0.0, %v2217
  %v2219 = vpop.f32.mrb[0].mxu0
  %2220 = vmatprep.mubr.bf16.mxu0 0
  %2221 = vmatmul.mubr.bf16.gmra.mrb[0].mxu0 %v2100
  %v2222 = vpop.f32.mrb[0].mxu0
  %v2223 = vadd.f32 0.0, %v2222
  %v2224 = vpop.f32.mrb[0].mxu0
  %v2225 = vpop.f32.mrb[0].mxu0
  %v2226 = vadd.f32 0.0, %v2225
  %v2227 = vpop.f32.mrb[0].mxu0
  %2228 = vmatprep.mubr.bf16.mxu0 0
  %2229 = vmatmul.mubr.bf16.gmra.mrb[0].mxu0 %v2101
  %v2230 = vpop.f32.mrb[0].mxu0
  %v2231 = vadd.f32 0.0, %v2230
  %v2232 = vpop.f32.mrb[0].mxu0
  %v2233 = vpop.f32.mrb[0].mxu0
  %v2234 = vadd.f32 0.0, %v2233
  %v2235 = vpop.f32.mrb[0].mxu0
  %2236 = vmatprep.mubr.bf16.mxu0 0
  %2237 = vmatmul.mubr.bf16.gmra.mrb[0].mxu0 %v2102
  %v2238 = vpop.f32.mrb[0].mxu0
  %v2239 = vadd.f32 0.0, %v2238
  %v2240 = vpop.f32.mrb[0].mxu0
  %v2241 = vpop.f32.mrb[0].mxu0
  %v2242 = vadd.f32 0.0, %v2241
  %v2243 = vpop.f32.mrb[0].mxu0
  %2244 = vmatprep.mubr.bf16.mxu0 0
  %2245 = vmatmul.mubr.bf16.gmra.mrb[0].mxu0 %v2103
  %v2246 = vpop.f32.mrb[0].mxu0
  %v2247 = vadd.f32 0.0, %v2246
  %v2248 = vpop.f32.mrb[0].mxu0
  %v2249 = vpop.f32.mrb[0].mxu0
  %v2250 = vadd.f32 0.0, %v2249
  %v2251 = vpop.f32.mrb[0].mxu0
  %2252 = vmatprep.mubr.bf16.mxu0 0
  %2253 = vmatmul.mubr.bf16.gmra.mrb[0].mxu0 %v2104
  %v2254 = vpop.f32.mrb[0].mxu0
  %v2255 = vadd.f32 0.0, %v2254
  %v2256 = vpop.f32.mrb[0].mxu0
  %v2257 = vpop.f32.mrb[0].mxu0
  %v2258 = vadd.f32 0.0, %v2257
  %v2259 = vpop.f32.mrb[0].mxu0
  %2260 = vmatprep.mubr.bf16.mxu0 0
  %2261 = vmatmul.mubr.bf16.gmra.mrb[0].mxu0 %v2105
  %v2262 = vpop.f32.mrb[0].mxu0
  %v2263 = vadd.f32 0.0, %v2262
  %v2264 = vpop.f32.mrb[0].mxu0
  %v2265 = vpop.f32.mrb[0].mxu0
  %v2266 = vadd.f32 0.0, %v2265
  %v2267 = vpop.f32.mrb[0].mxu0
  %2268 = vmatprep.mubr.bf16.mxu0 0
  %2269 = vmatmul.mubr.bf16.gmra.mrb[0].mxu0 %v2106
  %v2270 = vpop.f32.mrb[0].mxu0
  %v2271 = vadd.f32 0.0, %v2270
  %v2272 = vpop.f32.mrb[0].mxu0
  %v2273 = vpop.f32.mrb[0].mxu0
  %v2274 = vadd.f32 0.0, %v2273
  %v2275 = vpop.f32.mrb[0].mxu0
  %2276 = vmatprep.mubr.bf16.mxu0 0
  %2277 = vmatmul.mubr.bf16.gmra.mrb[0].mxu0 %v2107
  %v2278 = vpop.f32.mrb[0].mxu0
  %v2279 = vadd.f32 0.0, %v2278
  %v2280 = vpop.f32.mrb[0].mxu0
  %v2281 = vpop.f32.mrb[0].mxu0
  %v2282 = vadd.f32 0.0, %v2281
  %v2283 = vpop.f32.mrb[0].mxu0
  %2284 = vmatprep.mubr.bf16.mxu0 0
  %2285 = vmatmul.mubr.bf16.gmra.mrb[0].mxu0 %v2108
  %v2286 = vpop.f32.mrb[0].mxu0
  %v2287 = vadd.f32 0.0, %v2286
  %v2288 = vpop.f32.mrb[0].mxu0
  %v2289 = vpop.f32.mrb[0].mxu0
  %v2290 = vadd.f32 0.0, %v2289
  %v2291 = vpop.f32.mrb[0].mxu0
  %2292 = vmatprep.mubr.bf16.mxu0 0
  %2293 = vmatmul.mubr.bf16.gmra.mrb[0].mxu0 %v2109
  %v2294 = vpop.f32.mrb[0].mxu0
  %v2295 = vadd.f32 0.0, %v2294
  %v2296 = vpop.f32.mrb[0].mxu0
  %v2297 = vpop.f32.mrb[0].mxu0
  %v2298 = vadd.f32 0.0, %v2297
  %v2299 = vpop.f32.mrb[0].mxu0
  %2300 = vmatprep.mubr.bf16.mxu0 0
  %2301 = vmatmul.mubr.bf16.gmra.mrb[0].mxu0 %v2110
  %v2302 = vpop.f32.mrb[0].mxu0
  %v2303 = vadd.f32 0.0, %v2302
  %v2304 = vpop.f32.mrb[0].mxu0
  %v2305 = vpop.f32.mrb[0].mxu0
  %v2306 = vadd.f32 0.0, %v2305
  %v2307 = vpop.f32.mrb[0].mxu0
  %2308 = vmatprep.mubr.bf16.mxu0 0
  %2309 = vmatmul.mubr.bf16.gmra.mrb[0].mxu0 %v2111
  %v2310 = vpop.f32.mrb[0].mxu0
  %v2311 = vadd.f32 0.0, %v2310
  %v2312 = vpop.f32.mrb[0].mxu0
  %v2313 = vpop.f32.mrb[0].mxu0
  %v2314 = vadd.f32 0.0, %v2313
  %v2315 = vpop.f32.mrb[0].mxu0
  %2316 = vmatprep.mubr.bf16.mxu0 0
  %2317 = vmatmul.mubr.bf16.gmra.mrb[0].mxu0 %v2112
  %v2318 = vpop.f32.mrb[0].mxu0
  %v2319 = vadd.f32 0.0, %v2318
  %v2320 = vpop.f32.mrb[0].mxu0
  %v2321 = vpop.f32.mrb[0].mxu0
  %v2322 = vadd.f32 0.0, %v2321
  %v2323 = vpop.f32.mrb[0].mxu0
  %2324 = vmatprep.mubr.bf16.mxu0 0
  %2325 = vmatmul.mubr.bf16.gmra.mrb[0].mxu0 %v2113
  %v2326 = vpop.f32.mrb[0].mxu0
  %v2327 = vadd.f32 0.0, %v2326
  %v2328 = vpop.f32.mrb[0].mxu0
  %v2329 = vpop.f32.mrb[0].mxu0
  %v2330 = vadd.f32 0.0, %v2329
  %v2331 = vpop.f32.mrb[0].mxu0
  %2332 = vmatprep.mubr.bf16.mxu0 0
  %2333 = vmatmul.mubr.bf16.gmra.mrb[0].mxu0 %v2114
  %v2334 = vpop.f32.mrb[0].mxu0
  %v2335 = vadd.f32 0.0, %v2334
  %v2336 = vpop.f32.mrb[0].mxu0
  %v2337 = vpop.f32.mrb[0].mxu0
  %v2338 = vadd.f32 0.0, %v2337
  %v2339 = vpop.f32.mrb[0].mxu0
  %2340 = vdwg.mxu0
  %v2341 = vpack.c.bf16 %v2218, %v2215
  %v2342 = vpack.c.bf16 %v2226, %v2223
  %v2343 = vpack.c.bf16 %v2234, %v2231
  %v2344 = vpack.c.bf16 %v2242, %v2239
  %v2345 = vpack.c.bf16 %v2250, %v2247
  %v2346 = vpack.c.bf16 %v2258, %v2255
  %v2347 = vpack.c.bf16 %v2266, %v2263
  %v2348 = vpack.c.bf16 %v2274, %v2271
  %v2349 = vpack.c.bf16 %v2282, %v2279
  %v2350 = vpack.c.bf16 %v2290, %v2287
  %v2351 = vpack.c.bf16 %v2298, %v2295
  %v2352 = vpack.c.bf16 %v2306, %v2303
  %v2353 = vpack.c.bf16 %v2314, %v2311
  %v2354 = vpack.c.bf16 %v2322, %v2319
  %v2355 = vpack.c.bf16 %v2330, %v2327
  %v2356 = vpack.c.bf16 %v2338, %v2335
  %s2357 = scalar_lea.vmem %s4, 2
  %v2358 = vld [vmem:[%s2357] sm:$0x1]
  %v2360 = vlaneseq
  %v2361 = vshrl.u32 %v2360, 7
  %v2362 = vsub.s32 0, %v2361
  %v2363 = vrot.slane %v2358, %v2362
  %2365 = vmatprep.subr.bf16.mxu0 0
  %2366 = vmatpush1.bf16.msra.mxu0 %v2341
  %2367 = vmatprep.subr.bf16.mxu0 0
  %2368 = vmatpush1.bf16.msra.mxu0 %v2342
  %2369 = vmatprep.subr.bf16.mxu0 0
  %2370 = vmatpush1.bf16.msra.mxu0 %v2343
  %2371 = vmatprep.subr.bf16.mxu0 0
  %2372 = vmatpush1.bf16.msra.mxu0 %v2344
  %2373 = vmatprep.subr.bf16.mxu0 0
  %2374 = vmatpush1.bf16.msra.mxu0 %v2345
  %2375 = vmatprep.subr.bf16.mxu0 0
  %2376 = vmatpush1.bf16.msra.mxu0 %v2346
  %2377 = vmatprep.subr.bf16.mxu0 0
  %2378 = vmatpush1.bf16.msra.mxu0 %v2347
  %2379 = vmatprep.subr.bf16.mxu0 0
  %2380 = vmatpush1.bf16.msra.mxu0 %v2348
  %2381 = vmatprep.subr.bf16.mxu0 0
  %2382 = vmatpush1.bf16.msra.mxu0 %v2349
  %2383 = vmatprep.subr.bf16.mxu0 0
  %2384 = vmatpush1.bf16.msra.mxu0 %v2350
  %2385 = vmatprep.subr.bf16.mxu0 0
  %2386 = vmatpush1.bf16.msra.mxu0 %v2351
  %2387 = vmatprep.subr.bf16.mxu0 0
  %2388 = vmatpush1.bf16.msra.mxu0 %v2352
  %2389 = vmatprep.subr.bf16.mxu0 0
  %2390 = vmatpush1.bf16.msra.mxu0 %v2353
  %2391 = vmatprep.subr.bf16.mxu0 0
  %2392 = vmatpush1.bf16.msra.mxu0 %v2354
  %2393 = vmatprep.subr.bf16.mxu0 0
  %2394 = vmatpush1.bf16.msra.mxu0 %v2355
  %2395 = vmatprep.subr.bf16.mxu0 0
  %2396 = vmatpush1.bf16.msra.mxu0 %v2356
  %2397 = vmatprep.mubr.bf16.mxu0 %v541
  %2398 = vmatmul.mubr.bf16.gmra.mrb[0].mxu0 %v540
  %v2399 = vpop.f32.mrb[0].mxu0
  %v2400 = vadd.f32 %v2363, %v2399
  %v2401 = vpop.f32.mrb[0].mxu0
  %v2402 = vpop.f32.mrb[0].mxu0
  %v2403 = vadd.f32 %v2363, %v2402
  %v2404 = vpop.f32.mrb[0].mxu0
  %2405 = vmatprep.mubr.bf16.mxu0 %v543
  %2406 = vmatmul.mubr.bf16.gmra.mrb[0].mxu0 %v542
  %v2407 = vpop.f32.mrb[0].mxu0
  %v2408 = vadd.f32 %v2363, %v2407
  %v2409 = vpop.f32.mrb[0].mxu0
  %v2410 = vpop.f32.mrb[0].mxu0
  %v2411 = vadd.f32 %v2363, %v2410
  %v2412 = vpop.f32.mrb[0].mxu0
  %2413 = vmatprep.mubr.bf16.mxu0 %v545
  %2414 = vmatmul.mubr.bf16.gmra.mrb[0].mxu0 %v544
  %v2415 = vpop.f32.mrb[0].mxu0
  %v2416 = vadd.f32 %v2363, %v2415
  %v2417 = vpop.f32.mrb[0].mxu0
  %v2418 = vpop.f32.mrb[0].mxu0
  %v2419 = vadd.f32 %v2363, %v2418
  %v2420 = vpop.f32.mrb[0].mxu0
  %2421 = vmatprep.mubr.bf16.mxu0 %v547
  %2422 = vmatmul.mubr.bf16.gmra.mrb[0].mxu0 %v546
  %v2423 = vpop.f32.mrb[0].mxu0
  %v2424 = vadd.f32 %v2363, %v2423
  %v2425 = vpop.f32.mrb[0].mxu0
  %v2426 = vpop.f32.mrb[0].mxu0
  %v2427 = vadd.f32 %v2363, %v2426
  %v2428 = vpop.f32.mrb[0].mxu0
  %2429 = vmatprep.mubr.bf16.mxu0 %v549
  %2430 = vmatmul.mubr.bf16.gmra.mrb[0].mxu0 %v548
  %v2431 = vpop.f32.mrb[0].mxu0
  %v2432 = vadd.f32 %v2363, %v2431
  %v2433 = vpop.f32.mrb[0].mxu0
  %v2434 = vpop.f32.mrb[0].mxu0
  %v2435 = vadd.f32 %v2363, %v2434
  %v2436 = vpop.f32.mrb[0].mxu0
  %2437 = vmatprep.mubr.bf16.mxu0 %v551
  %2438 = vmatmul.mubr.bf16.gmra.mrb[0].mxu0 %v550
  %v2439 = vpop.f32.mrb[0].mxu0
  %v2440 = vadd.f32 %v2363, %v2439
  %v2441 = vpop.f32.mrb[0].mxu0
  %v2442 = vpop.f32.mrb[0].mxu0
  %v2443 = vadd.f32 %v2363, %v2442
  %v2444 = vpop.f32.mrb[0].mxu0
  %2445 = vmatprep.mubr.bf16.mxu0 %v553
  %2446 = vmatmul.mubr.bf16.gmra.mrb[0].mxu0 %v552
  %v2447 = vpop.f32.mrb[0].mxu0
  %v2448 = vadd.f32 %v2363, %v2447
  %v2449 = vpop.f32.mrb[0].mxu0
  %v2450 = vpop.f32.mrb[0].mxu0
  %v2451 = vadd.f32 %v2363, %v2450
  %v2452 = vpop.f32.mrb[0].mxu0
  %2453 = vmatprep.mubr.bf16.mxu0 %v555
  %2454 = vmatmul.mubr.bf16.gmra.mrb[0].mxu0 %v554
  %v2455 = vpop.f32.mrb[0].mxu0
  %v2456 = vadd.f32 %v2363, %v2455
  %v2457 = vpop.f32.mrb[0].mxu0
  %v2458 = vpop.f32.mrb[0].mxu0
  %v2459 = vadd.f32 %v2363, %v2458
  %v2460 = vpop.f32.mrb[0].mxu0
  %2461 = vmatprep.mubr.bf16.mxu0 %v557
  %2462 = vmatmul.mubr.bf16.gmra.mrb[0].mxu0 %v556
  %v2463 = vpop.f32.mrb[0].mxu0
  %v2464 = vadd.f32 %v2363, %v2463
  %v2465 = vpop.f32.mrb[0].mxu0
  %v2466 = vpop.f32.mrb[0].mxu0
  %v2467 = vadd.f32 %v2363, %v2466
  %v2468 = vpop.f32.mrb[0].mxu0
  %2469 = vmatprep.mubr.bf16.mxu0 %v559
  %2470 = vmatmul.mubr.bf16.gmra.mrb[0].mxu0 %v558
  %v2471 = vpop.f32.mrb[0].mxu0
  %v2472 = vadd.f32 %v2363, %v2471
  %v2473 = vpop.f32.mrb[0].mxu0
  %v2474 = vpop.f32.mrb[0].mxu0
  %v2475 = vadd.f32 %v2363, %v2474
  %v2476 = vpop.f32.mrb[0].mxu0
  %2477 = vmatprep.mubr.bf16.mxu0 %v561
  %2478 = vmatmul.mubr.bf16.gmra.mrb[0].mxu0 %v560
  %v2479 = vpop.f32.mrb[0].mxu0
  %v2480 = vadd.f32 %v2363, %v2479
  %v2481 = vpop.f32.mrb[0].mxu0
  %v2482 = vpop.f32.mrb[0].mxu0
  %v2483 = vadd.f32 %v2363, %v2482
  %v2484 = vpop.f32.mrb[0].mxu0
  %2485 = vmatprep.mubr.bf16.mxu0 %v563
  %2486 = vmatmul.mubr.bf16.gmra.mrb[0].mxu0 %v562
  %v2487 = vpop.f32.mrb[0].mxu0
  %v2488 = vadd.f32 %v2363, %v2487
  %v2489 = vpop.f32.mrb[0].mxu0
  %v2490 = vpop.f32.mrb[0].mxu0
  %v2491 = vadd.f32 %v2363, %v2490
  %v2492 = vpop.f32.mrb[0].mxu0
  %2493 = vmatprep.mubr.bf16.mxu0 %v565
  %2494 = vmatmul.mubr.bf16.gmra.mrb[0].mxu0 %v564
  %v2495 = vpop.f32.mrb[0].mxu0
  %v2496 = vadd.f32 %v2363, %v2495
  %v2497 = vpop.f32.mrb[0].mxu0
  %v2498 = vpop.f32.mrb[0].mxu0
  %v2499 = vadd.f32 %v2363, %v2498
  %v2500 = vpop.f32.mrb[0].mxu0
  %2501 = vmatprep.mubr.bf16.mxu0 %v567
  %2502 = vmatmul.mubr.bf16.gmra.mrb[0].mxu0 %v566
  %v2503 = vpop.f32.mrb[0].mxu0
  %v2504 = vadd.f32 %v2363, %v2503
  %v2505 = vpop.f32.mrb[0].mxu0
  %v2506 = vpop.f32.mrb[0].mxu0
  %v2507 = vadd.f32 %v2363, %v2506
  %v2508 = vpop.f32.mrb[0].mxu0
  %2509 = vmatprep.mubr.bf16.mxu0 %v569
  %2510 = vmatmul.mubr.bf16.gmra.mrb[0].mxu0 %v568
  %v2511 = vpop.f32.mrb[0].mxu0
  %v2512 = vadd.f32 %v2363, %v2511
  %v2513 = vpop.f32.mrb[0].mxu0
  %v2514 = vpop.f32.mrb[0].mxu0
  %v2515 = vadd.f32 %v2363, %v2514
  %v2516 = vpop.f32.mrb[0].mxu0
  %2517 = vmatprep.mubr.bf16.mxu0 %v571
  %2518 = vmatmul.mubr.bf16.gmra.mrb[0].mxu0 %v570
  %v2519 = vpop.f32.mrb[0].mxu0
  %v2520 = vadd.f32 %v2363, %v2519
  %v2521 = vpop.f32.mrb[0].mxu0
  %v2522 = vpop.f32.mrb[0].mxu0
  %v2523 = vadd.f32 %v2363, %v2522
  %v2524 = vpop.f32.mrb[0].mxu0
  %2525 = vdwg.mxu0
  %s2526 = scalar_lea.vmem %s5, 2
  %v2527 = vld [vmem:[%s2526] sm:$0x1]
  %s2528 = scalar_lea.vmem %s6, 2
  %v2529 = vld [vmem:[%s2528] sm:$0x1]
  %s2530 = scalar_lea.vmem %s7, 2
  %v2531 = vld [vmem:[%s2530] sm:$0x1]
  %v2532 = vmul.f32 %v2400, %v865
  %v2533 = vmul.f32 %v2403, %v866
  %v2534 = vmul.f32 %v2408, %v867
  %v2535 = vmul.f32 %v2411, %v868
  %v2536 = vmul.f32 %v2416, %v869
  %v2537 = vmul.f32 %v2419, %v870
  %v2538 = vmul.f32 %v2424, %v871
  %v2539 = vmul.f32 %v2427, %v872
  %v2540 = vmul.f32 %v2432, %v873
  %v2541 = vmul.f32 %v2435, %v874
  %v2542 = vmul.f32 %v2440, %v875
  %v2543 = vmul.f32 %v2443, %v876
  %v2544 = vmul.f32 %v2448, %v877
  %v2545 = vmul.f32 %v2451, %v878
  %v2546 = vmul.f32 %v2456, %v879
  %v2547 = vmul.f32 %v2459, %v880
  %v2548 = vmul.f32 %v2464, %v881
  %v2549 = vmul.f32 %v2467, %v882
  %v2550 = vmul.f32 %v2472, %v883
  %v2551 = vmul.f32 %v2475, %v884
  %v2552 = vmul.f32 %v2480, %v885
  %v2553 = vmul.f32 %v2483, %v886
  %v2554 = vmul.f32 %v2488, %v887
  %v2555 = vmul.f32 %v2491, %v888
  %v2556 = vmul.f32 %v2496, %v889
  %v2557 = vmul.f32 %v2499, %v890
  %v2558 = vmul.f32 %v2504, %v891
  %v2559 = vmul.f32 %v2507, %v892
  %v2560 = vmul.f32 %v2512, %v893
  %v2561 = vmul.f32 %v2515, %v894
  %v2562 = vmul.f32 %v2520, %v895
  %v2563 = vmul.f32 %v2523, %v896
  %v2564 = vadd.f32 %v2532, %v2533
  %v2565 = vadd.f32 %v2564, %v2534
  %v2566 = vadd.f32 %v2565, %v2535
  %v2567 = vadd.f32 %v2566, %v2536
  %v2568 = vadd.f32 %v2567, %v2537
  %v2569 = vadd.f32 %v2568, %v2538
  %v2570 = vadd.f32 %v2569, %v2539
  %v2571 = vadd.f32 %v2570, %v2540
  %v2572 = vadd.f32 %v2571, %v2541
  %v2573 = vadd.f32 %v2572, %v2542
  %v2574 = vadd.f32 %v2573, %v2543
  %v2575 = vadd.f32 %v2574, %v2544
  %v2576 = vadd.f32 %v2575, %v2545
  %v2577 = vadd.f32 %v2576, %v2546
  %v2578 = vadd.f32 %v2577, %v2547
  %v2579 = vadd.f32 %v2578, %v2548
  %v2580 = vadd.f32 %v2579, %v2549
  %v2581 = vadd.f32 %v2580, %v2550
  %v2582 = vadd.f32 %v2581, %v2551
  %v2583 = vadd.f32 %v2582, %v2552
  %v2584 = vadd.f32 %v2583, %v2553
  %v2585 = vadd.f32 %v2584, %v2554
  %v2586 = vadd.f32 %v2585, %v2555
  %v2587 = vadd.f32 %v2586, %v2556
  %v2588 = vadd.f32 %v2587, %v2557
  %v2589 = vadd.f32 %v2588, %v2558
  %v2590 = vadd.f32 %v2589, %v2559
  %v2591 = vadd.f32 %v2590, %v2560
  %v2592 = vadd.f32 %v2591, %v2561
  %v2593 = vadd.f32 %v2592, %v2562
  %v2594 = vadd.f32 %v2593, %v2563
  %v2595 = vrot.slane %v2594, 4
  %v2596 = vadd.f32 %v2594, %v2595
  %v2597 = vrot.slane %v2596, 2
  %v2598 = vadd.f32 %v2596, %v2597
  %v2599 = vrot.slane %v2598, 1
  %v2600 = vadd.f32 %v2598, %v2599
  %v2601 = vmul.f32 %v2600, 0.0625
  %v2602 = vmul.f32 %v2531, %v2601
  %v2604 = vlaneseq
  %v2605 = vshrl.u32 %v2604, 7
  %v2606 = vsub.s32 0, %v2605
  %v2607 = vrot.slane %v2602, %v2606
  %v2609 = vsub.f32 %v2400, %v2607
  %v2610 = vsub.f32 %v2403, %v2607
  %v2611 = vsub.f32 %v2408, %v2607
  %v2612 = vsub.f32 %v2411, %v2607
  %v2613 = vsub.f32 %v2416, %v2607
  %v2614 = vsub.f32 %v2419, %v2607
  %v2615 = vsub.f32 %v2424, %v2607
  %v2616 = vsub.f32 %v2427, %v2607
  %v2617 = vsub.f32 %v2432, %v2607
  %v2618 = vsub.f32 %v2435, %v2607
  %v2619 = vsub.f32 %v2440, %v2607
  %v2620 = vsub.f32 %v2443, %v2607
  %v2621 = vsub.f32 %v2448, %v2607
  %v2622 = vsub.f32 %v2451, %v2607
  %v2623 = vsub.f32 %v2456, %v2607
  %v2624 = vsub.f32 %v2459, %v2607
  %v2625 = vsub.f32 %v2464, %v2607
  %v2626 = vsub.f32 %v2467, %v2607
  %v2627 = vsub.f32 %v2472, %v2607
  %v2628 = vsub.f32 %v2475, %v2607
  %v2629 = vsub.f32 %v2480, %v2607
  %v2630 = vsub.f32 %v2483, %v2607
  %v2631 = vsub.f32 %v2488, %v2607
  %v2632 = vsub.f32 %v2491, %v2607
  %v2633 = vsub.f32 %v2496, %v2607
  %v2634 = vsub.f32 %v2499, %v2607
  %v2635 = vsub.f32 %v2504, %v2607
  %v2636 = vsub.f32 %v2507, %v2607
  %v2637 = vsub.f32 %v2512, %v2607
  %v2638 = vsub.f32 %v2515, %v2607
  %v2639 = vsub.f32 %v2520, %v2607
  %v2640 = vsub.f32 %v2523, %v2607
  %v2641 = vmul.f32 %v2609, %v865
  %v2642 = vmul.f32 %v2610, %v866
  %v2643 = vmul.f32 %v2611, %v867
  %v2644 = vmul.f32 %v2612, %v868
  %v2645 = vmul.f32 %v2613, %v869
  %v2646 = vmul.f32 %v2614, %v870
  %v2647 = vmul.f32 %v2615, %v871
  %v2648 = vmul.f32 %v2616, %v872
  %v2649 = vmul.f32 %v2617, %v873
  %v2650 = vmul.f32 %v2618, %v874
  %v2651 = vmul.f32 %v2619, %v875
  %v2652 = vmul.f32 %v2620, %v876
  %v2653 = vmul.f32 %v2621, %v877
  %v2654 = vmul.f32 %v2622, %v878
  %v2655 = vmul.f32 %v2623, %v879
  %v2656 = vmul.f32 %v2624, %v880
  %v2657 = vmul.f32 %v2625, %v881
  %v2658 = vmul.f32 %v2626, %v882
  %v2659 = vmul.f32 %v2627, %v883
  %v2660 = vmul.f32 %v2628, %v884
  %v2661 = vmul.f32 %v2629, %v885
  %v2662 = vmul.f32 %v2630, %v886
  %v2663 = vmul.f32 %v2631, %v887
  %v2664 = vmul.f32 %v2632, %v888
  %v2665 = vmul.f32 %v2633, %v889
  %v2666 = vmul.f32 %v2634, %v890
  %v2667 = vmul.f32 %v2635, %v891
  %v2668 = vmul.f32 %v2636, %v892
  %v2669 = vmul.f32 %v2637, %v893
  %v2670 = vmul.f32 %v2638, %v894
  %v2671 = vmul.f32 %v2639, %v895
  %v2672 = vmul.f32 %v2640, %v896
  %v2673 = vmul.f32 %v2641, %v2641
  %v2674 = vmul.f32 %v2642, %v2642
  %v2675 = vmul.f32 %v2643, %v2643
  %v2676 = vmul.f32 %v2644, %v2644
  %v2677 = vmul.f32 %v2645, %v2645
  %v2678 = vmul.f32 %v2646, %v2646
  %v2679 = vmul.f32 %v2647, %v2647
  %v2680 = vmul.f32 %v2648, %v2648
  %v2681 = vmul.f32 %v2649, %v2649
  %v2682 = vmul.f32 %v2650, %v2650
  %v2683 = vmul.f32 %v2651, %v2651
  %v2684 = vmul.f32 %v2652, %v2652
  %v2685 = vmul.f32 %v2653, %v2653
  %v2686 = vmul.f32 %v2654, %v2654
  %v2687 = vmul.f32 %v2655, %v2655
  %v2688 = vmul.f32 %v2656, %v2656
  %v2689 = vmul.f32 %v2657, %v2657
  %v2690 = vmul.f32 %v2658, %v2658
  %v2691 = vmul.f32 %v2659, %v2659
  %v2692 = vmul.f32 %v2660, %v2660
  %v2693 = vmul.f32 %v2661, %v2661
  %v2694 = vmul.f32 %v2662, %v2662
  %v2695 = vmul.f32 %v2663, %v2663
  %v2696 = vmul.f32 %v2664, %v2664
  %v2697 = vmul.f32 %v2665, %v2665
  %v2698 = vmul.f32 %v2666, %v2666
  %v2699 = vmul.f32 %v2667, %v2667
  %v2700 = vmul.f32 %v2668, %v2668
  %v2701 = vmul.f32 %v2669, %v2669
  %v2702 = vmul.f32 %v2670, %v2670
  %v2703 = vmul.f32 %v2671, %v2671
  %v2704 = vmul.f32 %v2672, %v2672
  %v2705 = vadd.f32 %v2673, %v2674
  %v2706 = vadd.f32 %v2705, %v2675
  %v2707 = vadd.f32 %v2706, %v2676
  %v2708 = vadd.f32 %v2707, %v2677
  %v2709 = vadd.f32 %v2708, %v2678
  %v2710 = vadd.f32 %v2709, %v2679
  %v2711 = vadd.f32 %v2710, %v2680
  %v2712 = vadd.f32 %v2711, %v2681
  %v2713 = vadd.f32 %v2712, %v2682
  %v2714 = vadd.f32 %v2713, %v2683
  %v2715 = vadd.f32 %v2714, %v2684
  %v2716 = vadd.f32 %v2715, %v2685
  %v2717 = vadd.f32 %v2716, %v2686
  %v2718 = vadd.f32 %v2717, %v2687
  %v2719 = vadd.f32 %v2718, %v2688
  %v2720 = vadd.f32 %v2719, %v2689
  %v2721 = vadd.f32 %v2720, %v2690
  %v2722 = vadd.f32 %v2721, %v2691
  %v2723 = vadd.f32 %v2722, %v2692
  %v2724 = vadd.f32 %v2723, %v2693
  %v2725 = vadd.f32 %v2724, %v2694
  %v2726 = vadd.f32 %v2725, %v2695
  %v2727 = vadd.f32 %v2726, %v2696
  %v2728 = vadd.f32 %v2727, %v2697
  %v2729 = vadd.f32 %v2728, %v2698
  %v2730 = vadd.f32 %v2729, %v2699
  %v2731 = vadd.f32 %v2730, %v2700
  %v2732 = vadd.f32 %v2731, %v2701
  %v2733 = vadd.f32 %v2732, %v2702
  %v2734 = vadd.f32 %v2733, %v2703
  %v2735 = vadd.f32 %v2734, %v2704
  %v2736 = vrot.slane %v2735, 4
  %v2737 = vadd.f32 %v2735, %v2736
  %v2738 = vrot.slane %v2737, 2
  %v2739 = vadd.f32 %v2737, %v2738
  %v2740 = vrot.slane %v2739, 1
  %v2741 = vadd.f32 %v2739, %v2740
  %v2742 = vmul.f32 %v2741, 0.0625
  %v2743 = vadd.f32 %v2742, 1e-05
  %v2744 = vrsqrt.pop %v2743
  %v2745 = vmul.f32 %v2641, %v2744
  %v2746 = vmul.f32 %v2642, %v2744
  %v2747 = vmul.f32 %v2643, %v2744
  %v2748 = vmul.f32 %v2644, %v2744
  %v2749 = vmul.f32 %v2645, %v2744
  %v2750 = vmul.f32 %v2646, %v2744
  %v2751 = vmul.f32 %v2647, %v2744
  %v2752 = vmul.f32 %v2648, %v2744
  %v2753 = vmul.f32 %v2649, %v2744
  %v2754 = vmul.f32 %v2650, %v2744
  %v2755 = vmul.f32 %v2651, %v2744
  %v2756 = vmul.f32 %v2652, %v2744
  %v2757 = vmul.f32 %v2653, %v2744
  %v2758 = vmul.f32 %v2654, %v2744
  %v2759 = vmul.f32 %v2655, %v2744
  %v2760 = vmul.f32 %v2656, %v2744
  %v2761 = vmul.f32 %v2657, %v2744
  %v2762 = vmul.f32 %v2658, %v2744
  %v2763 = vmul.f32 %v2659, %v2744
  %v2764 = vmul.f32 %v2660, %v2744
  %v2765 = vmul.f32 %v2661, %v2744
  %v2766 = vmul.f32 %v2662, %v2744
  %v2767 = vmul.f32 %v2663, %v2744
  %v2768 = vmul.f32 %v2664, %v2744
  %v2769 = vmul.f32 %v2665, %v2744
  %v2770 = vmul.f32 %v2666, %v2744
  %v2771 = vmul.f32 %v2667, %v2744
  %v2772 = vmul.f32 %v2668, %v2744
  %v2773 = vmul.f32 %v2669, %v2744
  %v2774 = vmul.f32 %v2670, %v2744
  %v2775 = vmul.f32 %v2671, %v2744
  %v2776 = vmul.f32 %v2672, %v2744
  %v2778 = vlaneseq
  %v2779 = vshrl.u32 %v2778, 7
  %v2780 = vsub.s32 0, %v2779
  %v2781 = vrot.slane %v2527, %v2780
  %v2783 = vmul.f32 %v2745, %v2781
  %v2784 = vmul.f32 %v2746, %v2781
  %v2785 = vmul.f32 %v2747, %v2781
  %v2786 = vmul.f32 %v2748, %v2781
  %v2787 = vmul.f32 %v2749, %v2781
  %v2788 = vmul.f32 %v2750, %v2781
  %v2789 = vmul.f32 %v2751, %v2781
  %v2790 = vmul.f32 %v2752, %v2781
  %v2791 = vmul.f32 %v2753, %v2781
  %v2792 = vmul.f32 %v2754, %v2781
  %v2793 = vmul.f32 %v2755, %v2781
  %v2794 = vmul.f32 %v2756, %v2781
  %v2795 = vmul.f32 %v2757, %v2781
  %v2796 = vmul.f32 %v2758, %v2781
  %v2797 = vmul.f32 %v2759, %v2781
  %v2798 = vmul.f32 %v2760, %v2781
  %v2799 = vmul.f32 %v2761, %v2781
  %v2800 = vmul.f32 %v2762, %v2781
  %v2801 = vmul.f32 %v2763, %v2781
  %v2802 = vmul.f32 %v2764, %v2781
  %v2803 = vmul.f32 %v2765, %v2781
  %v2804 = vmul.f32 %v2766, %v2781
  %v2805 = vmul.f32 %v2767, %v2781
  %v2806 = vmul.f32 %v2768, %v2781
  %v2807 = vmul.f32 %v2769, %v2781
  %v2808 = vmul.f32 %v2770, %v2781
  %v2809 = vmul.f32 %v2771, %v2781
  %v2810 = vmul.f32 %v2772, %v2781
  %v2811 = vmul.f32 %v2773, %v2781
  %v2812 = vmul.f32 %v2774, %v2781
  %v2813 = vmul.f32 %v2775, %v2781
  %v2814 = vmul.f32 %v2776, %v2781
  %v2816 = vlaneseq
  %v2817 = vshrl.u32 %v2816, 7
  %v2818 = vsub.s32 0, %v2817
  %v2819 = vrot.slane %v2529, %v2818
  %v2821 = vadd.f32 %v2783, %v2819
  %v2822 = vadd.f32 %v2784, %v2819
  %v2823 = vadd.f32 %v2785, %v2819
  %v2824 = vadd.f32 %v2786, %v2819
  %v2825 = vadd.f32 %v2787, %v2819
  %v2826 = vadd.f32 %v2788, %v2819
  %v2827 = vadd.f32 %v2789, %v2819
  %v2828 = vadd.f32 %v2790, %v2819
  %v2829 = vadd.f32 %v2791, %v2819
  %v2830 = vadd.f32 %v2792, %v2819
  %v2831 = vadd.f32 %v2793, %v2819
  %v2832 = vadd.f32 %v2794, %v2819
  %v2833 = vadd.f32 %v2795, %v2819
  %v2834 = vadd.f32 %v2796, %v2819
  %v2835 = vadd.f32 %v2797, %v2819
  %v2836 = vadd.f32 %v2798, %v2819
  %v2837 = vadd.f32 %v2799, %v2819
  %v2838 = vadd.f32 %v2800, %v2819
  %v2839 = vadd.f32 %v2801, %v2819
  %v2840 = vadd.f32 %v2802, %v2819
  %v2841 = vadd.f32 %v2803, %v2819
  %v2842 = vadd.f32 %v2804, %v2819
  %v2843 = vadd.f32 %v2805, %v2819
  %v2844 = vadd.f32 %v2806, %v2819
  %v2845 = vadd.f32 %v2807, %v2819
  %v2846 = vadd.f32 %v2808, %v2819
  %v2847 = vadd.f32 %v2809, %v2819
  %v2848 = vadd.f32 %v2810, %v2819
  %v2849 = vadd.f32 %v2811, %v2819
  %v2850 = vadd.f32 %v2812, %v2819
  %v2851 = vadd.f32 %v2813, %v2819
  %v2852 = vadd.f32 %v2814, %v2819
  %v2853 = vmax.f32 %v2821, 0.0
  %v2854 = vmax.f32 %v2822, 0.0
  %v2855 = vmax.f32 %v2823, 0.0
  %v2856 = vmax.f32 %v2824, 0.0
  %v2857 = vmax.f32 %v2825, 0.0
  %v2858 = vmax.f32 %v2826, 0.0
  %v2859 = vmax.f32 %v2827, 0.0
  %v2860 = vmax.f32 %v2828, 0.0
  %v2861 = vmax.f32 %v2829, 0.0
  %v2862 = vmax.f32 %v2830, 0.0
  %v2863 = vmax.f32 %v2831, 0.0
  %v2864 = vmax.f32 %v2832, 0.0
  %v2865 = vmax.f32 %v2833, 0.0
  %v2866 = vmax.f32 %v2834, 0.0
  %v2867 = vmax.f32 %v2835, 0.0
  %v2868 = vmax.f32 %v2836, 0.0
  %v2869 = vmax.f32 %v2837, 0.0
  %v2870 = vmax.f32 %v2838, 0.0
  %v2871 = vmax.f32 %v2839, 0.0
  %v2872 = vmax.f32 %v2840, 0.0
  %v2873 = vmax.f32 %v2841, 0.0
  %v2874 = vmax.f32 %v2842, 0.0
  %v2875 = vmax.f32 %v2843, 0.0
  %v2876 = vmax.f32 %v2844, 0.0
  %v2877 = vmax.f32 %v2845, 0.0
  %v2878 = vmax.f32 %v2846, 0.0
  %v2879 = vmax.f32 %v2847, 0.0
  %v2880 = vmax.f32 %v2848, 0.0
  %v2881 = vmax.f32 %v2849, 0.0
  %v2882 = vmax.f32 %v2850, 0.0
  %v2883 = vmax.f32 %v2851, 0.0
  %v2884 = vmax.f32 %v2852, 0.0
  %v2885 = vmul.f32 %v2853, %v865
  %v2886 = vmul.f32 %v2854, %v866
  %v2887 = vmul.f32 %v2855, %v867
  %v2888 = vmul.f32 %v2856, %v868
  %v2889 = vmul.f32 %v2857, %v869
  %v2890 = vmul.f32 %v2858, %v870
  %v2891 = vmul.f32 %v2859, %v871
  %v2892 = vmul.f32 %v2860, %v872
  %v2893 = vmul.f32 %v2861, %v873
  %v2894 = vmul.f32 %v2862, %v874
  %v2895 = vmul.f32 %v2863, %v875
  %v2896 = vmul.f32 %v2864, %v876
  %v2897 = vmul.f32 %v2865, %v877
  %v2898 = vmul.f32 %v2866, %v878
  %v2899 = vmul.f32 %v2867, %v879
  %v2900 = vmul.f32 %v2868, %v880
  %v2901 = vmul.f32 %v2869, %v881
  %v2902 = vmul.f32 %v2870, %v882
  %v2903 = vmul.f32 %v2871, %v883
  %v2904 = vmul.f32 %v2872, %v884
  %v2905 = vmul.f32 %v2873, %v885
  %v2906 = vmul.f32 %v2874, %v886
  %v2907 = vmul.f32 %v2875, %v887
  %v2908 = vmul.f32 %v2876, %v888
  %v2909 = vmul.f32 %v2877, %v889
  %v2910 = vmul.f32 %v2878, %v890
  %v2911 = vmul.f32 %v2879, %v891
  %v2912 = vmul.f32 %v2880, %v892
  %v2913 = vmul.f32 %v2881, %v893
  %v2914 = vmul.f32 %v2882, %v894
  %v2915 = vmul.f32 %v2883, %v895
  %v2916 = vmul.f32 %v2884, %v896
  %v2917 = vpack.c.bf16 %v2886, %v2885
  %v2918 = vpack.c.bf16 %v2888, %v2887
  %v2919 = vpack.c.bf16 %v2890, %v2889
  %v2920 = vpack.c.bf16 %v2892, %v2891
  %v2921 = vpack.c.bf16 %v2894, %v2893
  %v2922 = vpack.c.bf16 %v2896, %v2895
  %v2923 = vpack.c.bf16 %v2898, %v2897
  %v2924 = vpack.c.bf16 %v2900, %v2899
  %v2925 = vpack.c.bf16 %v2902, %v2901
  %v2926 = vpack.c.bf16 %v2904, %v2903
  %v2927 = vpack.c.bf16 %v2906, %v2905
  %v2928 = vpack.c.bf16 %v2908, %v2907
  %v2929 = vpack.c.bf16 %v2910, %v2909
  %v2930 = vpack.c.bf16 %v2912, %v2911
  %v2931 = vpack.c.bf16 %v2914, %v2913
  %v2932 = vpack.c.bf16 %v2916, %v2915
  %v2933 = vld [vmem:[%s8] sm:$0xf]
  %v2934 = vld [vmem:[%s8 + $0x4] sm:$0xf]
  %v2935 = vld [vmem:[%s8 + $0x8] sm:$0xf]
  %v2936 = vld [vmem:[%s8 + $0xc] sm:$0xf]
  %v2937 = vld [vmem:[%s8 + $0x10] sm:$0xf]
  %v2938 = vld [vmem:[%s8 + $0x14] sm:$0xf]
  %v2939 = vld [vmem:[%s8 + $0x18] sm:$0xf]
  %v2940 = vld [vmem:[%s8 + $0x1c] sm:$0xf]
  %v2941 = vld [vmem:[%s8 + $0x20] sm:$0xf]
  %v2942 = vld [vmem:[%s8 + $0x24] sm:$0xf]
  %v2943 = vld [vmem:[%s8 + $0x28] sm:$0xf]
  %v2944 = vld [vmem:[%s8 + $0x2c] sm:$0xf]
  %v2945 = vld [vmem:[%s8 + $0x30] sm:$0xf]
  %v2946 = vld [vmem:[%s8 + $0x34] sm:$0xf]
  %v2947 = vld [vmem:[%s8 + $0x38] sm:$0xf]
  %v2948 = vld [vmem:[%s8 + $0x3c] sm:$0xf]
  %v2949 = vld [vmem:[%s9] sm:$0x1]
  %v2951 = vlaneseq
  %v2952 = vshrl.u32 %v2951, 7
  %v2953 = vsub.s32 0, %v2952
  %v2954 = vrot.slane %v2949, %v2953
  %v2972 = vunpack.c.l.b16 %v2933
  %v2973 = vunpack.c.l.b16 %v2934
  %v2974 = vunpack.c.l.b16 %v2935
  %v2975 = vunpack.c.l.b16 %v2936
  %v2976 = vunpack.c.l.b16 %v2937
  %v2977 = vunpack.c.l.b16 %v2938
  %v2978 = vunpack.c.l.b16 %v2939
  %v2979 = vunpack.c.l.b16 %v2940
  %v2980 = vunpack.c.l.b16 %v2941
  %v2981 = vunpack.c.l.b16 %v2942
  %v2982 = vunpack.c.l.b16 %v2943
  %v2983 = vunpack.c.l.b16 %v2944
  %v2984 = vunpack.c.l.b16 %v2945
  %v2985 = vunpack.c.l.b16 %v2946
  %v2986 = vunpack.c.l.b16 %v2947
  %v2987 = vunpack.c.l.b16 %v2948
  %v2988 = vpack.c.b16 %v2973, %v2972
  %v2989 = vpack.c.b16 %v2975, %v2974
  %v2990 = vpack.c.b16 %v2977, %v2976
  %v2991 = vpack.c.b16 %v2979, %v2978
  %v2992 = vpack.c.b16 %v2981, %v2980
  %v2993 = vpack.c.b16 %v2983, %v2982
  %v2994 = vpack.c.b16 %v2985, %v2984
  %v2995 = vpack.c.b16 %v2987, %v2986
  %3004 = vmatprep.subr.bf16.mxu0 0
  %3005 = vmatpush1.bf16.msra.mxu0 %v2988
  %3006 = vmatprep.subr.bf16.mxu0 0
  %3007 = vmatpush1.bf16.msra.mxu0 %v2989
  %3008 = vmatprep.subr.bf16.mxu0 0
  %3009 = vmatpush1.bf16.msra.mxu0 %v2990
  %3010 = vmatprep.subr.bf16.mxu0 0
  %3011 = vmatpush1.bf16.msra.mxu0 %v2991
  %3012 = vmatprep.subr.bf16.mxu0 0
  %3013 = vmatpush1.bf16.msra.mxu0 %v2992
  %3014 = vmatprep.subr.bf16.mxu0 0
  %3015 = vmatpush1.bf16.msra.mxu0 %v2993
  %3016 = vmatprep.subr.bf16.mxu0 0
  %3017 = vmatpush1.bf16.msra.mxu0 %v2994
  %3018 = vmatprep.subr.bf16.mxu0 0
  %3019 = vmatpush1.bf16.msra.mxu0 %v2995
  %3020 = vmatprep.subr.bf16.mxu0 0
  %3021 = vmatpush1.bf16.msra.mxu0 0
  %3022 = vmatprep.subr.bf16.mxu0 0
  %3023 = vmatpush1.bf16.msra.mxu0 0
  %3024 = vmatprep.subr.bf16.mxu0 0
  %3025 = vmatpush1.bf16.msra.mxu0 0
  %3026 = vmatprep.subr.bf16.mxu0 0
  %3027 = vmatpush1.bf16.msra.mxu0 0
  %3028 = vmatprep.subr.bf16.mxu0 0
  %3029 = vmatpush1.bf16.msra.mxu0 0
  %3030 = vmatprep.subr.bf16.mxu0 0
  %3031 = vmatpush1.bf16.msra.mxu0 0
  %3032 = vmatprep.subr.bf16.mxu0 0
  %3033 = vmatpush1.bf16.msra.mxu0 0
  %3034 = vmatprep.subr.bf16.mxu0 0
  %3035 = vmatpush1.bf16.msra.mxu0 0
  %3036 = vmatprep.mubr.bf16.mxu0 0
  %3037 = vmatmul.mubr.bf16.gmra.mrb[0].mxu0 %v2917
  %v3038 = vpop.f32.mrb[0].mxu0
  %v3039 = vadd.f32 %v2954, %v3038
  %v3040 = vpop.f32.mrb[0].mxu0
  %v3041 = vpop.f32.mrb[0].mxu0
  %v3042 = vadd.f32 %v2954, %v3041
  %v3043 = vpop.f32.mrb[0].mxu0
  %3044 = vmatprep.mubr.bf16.mxu0 0
  %3045 = vmatmul.mubr.bf16.gmra.mrb[0].mxu0 %v2918
  %v3046 = vpop.f32.mrb[0].mxu0
  %v3047 = vadd.f32 %v2954, %v3046
  %v3048 = vpop.f32.mrb[0].mxu0
  %v3049 = vpop.f32.mrb[0].mxu0
  %v3050 = vadd.f32 %v2954, %v3049
  %v3051 = vpop.f32.mrb[0].mxu0
  %3052 = vmatprep.mubr.bf16.mxu0 0
  %3053 = vmatmul.mubr.bf16.gmra.mrb[0].mxu0 %v2919
  %v3054 = vpop.f32.mrb[0].mxu0
  %v3055 = vadd.f32 %v2954, %v3054
  %v3056 = vpop.f32.mrb[0].mxu0
  %v3057 = vpop.f32.mrb[0].mxu0
  %v3058 = vadd.f32 %v2954, %v3057
  %v3059 = vpop.f32.mrb[0].mxu0
  %3060 = vmatprep.mubr.bf16.mxu0 0
  %3061 = vmatmul.mubr.bf16.gmra.mrb[0].mxu0 %v2920
  %v3062 = vpop.f32.mrb[0].mxu0
  %v3063 = vadd.f32 %v2954, %v3062
  %v3064 = vpop.f32.mrb[0].mxu0
  %v3065 = vpop.f32.mrb[0].mxu0
  %v3066 = vadd.f32 %v2954, %v3065
  %v3067 = vpop.f32.mrb[0].mxu0
  %3068 = vmatprep.mubr.bf16.mxu0 0
  %3069 = vmatmul.mubr.bf16.gmra.mrb[0].mxu0 %v2921
  %v3070 = vpop.f32.mrb[0].mxu0
  %v3071 = vadd.f32 %v2954, %v3070
  %v3072 = vpop.f32.mrb[0].mxu0
  %v3073 = vpop.f32.mrb[0].mxu0
  %v3074 = vadd.f32 %v2954, %v3073
  %v3075 = vpop.f32.mrb[0].mxu0
  %3076 = vmatprep.mubr.bf16.mxu0 0
  %3077 = vmatmul.mubr.bf16.gmra.mrb[0].mxu0 %v2922
  %v3078 = vpop.f32.mrb[0].mxu0
  %v3079 = vadd.f32 %v2954, %v3078
  %v3080 = vpop.f32.mrb[0].mxu0
  %v3081 = vpop.f32.mrb[0].mxu0
  %v3082 = vadd.f32 %v2954, %v3081
  %v3083 = vpop.f32.mrb[0].mxu0
  %3084 = vmatprep.mubr.bf16.mxu0 0
  %3085 = vmatmul.mubr.bf16.gmra.mrb[0].mxu0 %v2923
  %v3086 = vpop.f32.mrb[0].mxu0
  %v3087 = vadd.f32 %v2954, %v3086
  %v3088 = vpop.f32.mrb[0].mxu0
  %v3089 = vpop.f32.mrb[0].mxu0
  %v3090 = vadd.f32 %v2954, %v3089
  %v3091 = vpop.f32.mrb[0].mxu0
  %3092 = vmatprep.mubr.bf16.mxu0 0
  %3093 = vmatmul.mubr.bf16.gmra.mrb[0].mxu0 %v2924
  %v3094 = vpop.f32.mrb[0].mxu0
  %v3095 = vadd.f32 %v2954, %v3094
  %v3096 = vpop.f32.mrb[0].mxu0
  %v3097 = vpop.f32.mrb[0].mxu0
  %v3098 = vadd.f32 %v2954, %v3097
  %v3099 = vpop.f32.mrb[0].mxu0
  %3100 = vmatprep.mubr.bf16.mxu0 0
  %3101 = vmatmul.mubr.bf16.gmra.mrb[0].mxu0 %v2925
  %v3102 = vpop.f32.mrb[0].mxu0
  %v3103 = vadd.f32 %v2954, %v3102
  %v3104 = vpop.f32.mrb[0].mxu0
  %v3105 = vpop.f32.mrb[0].mxu0
  %v3106 = vadd.f32 %v2954, %v3105
  %v3107 = vpop.f32.mrb[0].mxu0
  %3108 = vmatprep.mubr.bf16.mxu0 0
  %3109 = vmatmul.mubr.bf16.gmra.mrb[0].mxu0 %v2926
  %v3110 = vpop.f32.mrb[0].mxu0
  %v3111 = vadd.f32 %v2954, %v3110
  %v3112 = vpop.f32.mrb[0].mxu0
  %v3113 = vpop.f32.mrb[0].mxu0
  %v3114 = vadd.f32 %v2954, %v3113
  %v3115 = vpop.f32.mrb[0].mxu0
  %3116 = vmatprep.mubr.bf16.mxu0 0
  %3117 = vmatmul.mubr.bf16.gmra.mrb[0].mxu0 %v2927
  %v3118 = vpop.f32.mrb[0].mxu0
  %v3119 = vadd.f32 %v2954, %v3118
  %v3120 = vpop.f32.mrb[0].mxu0
  %v3121 = vpop.f32.mrb[0].mxu0
  %v3122 = vadd.f32 %v2954, %v3121
  %v3123 = vpop.f32.mrb[0].mxu0
  %3124 = vmatprep.mubr.bf16.mxu0 0
  %3125 = vmatmul.mubr.bf16.gmra.mrb[0].mxu0 %v2928
  %v3126 = vpop.f32.mrb[0].mxu0
  %v3127 = vadd.f32 %v2954, %v3126
  %v3128 = vpop.f32.mrb[0].mxu0
  %v3129 = vpop.f32.mrb[0].mxu0
  %v3130 = vadd.f32 %v2954, %v3129
  %v3131 = vpop.f32.mrb[0].mxu0
  %3132 = vmatprep.mubr.bf16.mxu0 0
  %3133 = vmatmul.mubr.bf16.gmra.mrb[0].mxu0 %v2929
  %v3134 = vpop.f32.mrb[0].mxu0
  %v3135 = vadd.f32 %v2954, %v3134
  %v3136 = vpop.f32.mrb[0].mxu0
  %v3137 = vpop.f32.mrb[0].mxu0
  %v3138 = vadd.f32 %v2954, %v3137
  %v3139 = vpop.f32.mrb[0].mxu0
  %3140 = vmatprep.mubr.bf16.mxu0 0
  %3141 = vmatmul.mubr.bf16.gmra.mrb[0].mxu0 %v2930
  %v3142 = vpop.f32.mrb[0].mxu0
  %v3143 = vadd.f32 %v2954, %v3142
  %v3144 = vpop.f32.mrb[0].mxu0
  %v3145 = vpop.f32.mrb[0].mxu0
  %v3146 = vadd.f32 %v2954, %v3145
  %v3147 = vpop.f32.mrb[0].mxu0
  %3148 = vmatprep.mubr.bf16.mxu0 0
  %3149 = vmatmul.mubr.bf16.gmra.mrb[0].mxu0 %v2931
  %v3150 = vpop.f32.mrb[0].mxu0
  %v3151 = vadd.f32 %v2954, %v3150
  %v3152 = vpop.f32.mrb[0].mxu0
  %v3153 = vpop.f32.mrb[0].mxu0
  %v3154 = vadd.f32 %v2954, %v3153
  %v3155 = vpop.f32.mrb[0].mxu0
  %3156 = vmatprep.mubr.bf16.mxu0 0
  %3157 = vmatmul.mubr.bf16.gmra.mrb[0].mxu0 %v2932
  %v3158 = vpop.f32.mrb[0].mxu0
  %v3159 = vadd.f32 %v2954, %v3158
  %v3160 = vpop.f32.mrb[0].mxu0
  %v3161 = vpop.f32.mrb[0].mxu0
  %v3162 = vadd.f32 %v2954, %v3161
  %v3163 = vpop.f32.mrb[0].mxu0
  %3164 = vdwg.mxu0
  %3165 = vst [vmem:[%s10] sm:$0xff] %v3039
  %3166 = vst [vmem:[%s10 + $0x8] sm:$0xff] %v3042
  %3167 = vst [vmem:[%s10 + $0x10] sm:$0xff] %v3047
  %3168 = vst [vmem:[%s10 + $0x18] sm:$0xff] %v3050
  %3169 = vst [vmem:[%s10 + $0x20] sm:$0xff] %v3055
  %3170 = vst [vmem:[%s10 + $0x28] sm:$0xff] %v3058
  %3171 = vst [vmem:[%s10 + $0x30] sm:$0xff] %v3063
  %3172 = vst [vmem:[%s10 + $0x38] sm:$0xff] %v3066
  %3173 = vst [vmem:[%s10 + $0x40] sm:$0xff] %v3071
  %3174 = vst [vmem:[%s10 + $0x48] sm:$0xff] %v3074
  %3175 = vst [vmem:[%s10 + $0x50] sm:$0xff] %v3079
  %3176 = vst [vmem:[%s10 + $0x58] sm:$0xff] %v3082
  %3177 = vst [vmem:[%s10 + $0x60] sm:$0xff] %v3087
  %3178 = vst [vmem:[%s10 + $0x68] sm:$0xff] %v3090
  %3179 = vst [vmem:[%s10 + $0x70] sm:$0xff] %v3095
  %3180 = vst [vmem:[%s10 + $0x78] sm:$0xff] %v3098
  %3181 = vst [vmem:[%s10 + $0x80] sm:$0xff] %v3103
  %3182 = vst [vmem:[%s10 + $0x88] sm:$0xff] %v3106
  %3183 = vst [vmem:[%s10 + $0x90] sm:$0xff] %v3111
  %3184 = vst [vmem:[%s10 + $0x98] sm:$0xff] %v3114
  %3185 = vst [vmem:[%s10 + $0xa0] sm:$0xff] %v3119
  %3186 = vst [vmem:[%s10 + $0xa8] sm:$0xff] %v3122
  %3187 = vst [vmem:[%s10 + $0xb0] sm:$0xff] %v3127
  %3188 = vst [vmem:[%s10 + $0xb8] sm:$0xff] %v3130
  %3189 = vst [vmem:[%s10 + $0xc0] sm:$0xff] %v3135
  %3190 = vst [vmem:[%s10 + $0xc8] sm:$0xff] %v3138
  %3191 = vst [vmem:[%s10 + $0xd0] sm:$0xff] %v3143
  %3192 = vst [vmem:[%s10 + $0xd8] sm:$0xff] %v3146
  %3193 = vst [vmem:[%s10 + $0xe0] sm:$0xff] %v3151
  %3194 = vst [vmem:[%s10 + $0xe8] sm:$0xff] %v3154
  %3195 = vst [vmem:[%s10 + $0xf0] sm:$0xff] %v3159
  %3196 = vst [vmem:[%s10 + $0xf8] sm:$0xff] %v3162
  // Predicated region
  $region42: #{galactic_gnn_forward.1} parent=0 // pred_check
    _
  $region43: #{galactic_gnn_forward.1} parent=0 // pred_check_branch
    %3198 = sbr.rel (0) target = $region45
  $region44: #{galactic_gnn_forward.1} parent=0 // pred_region
    _
  $region45: #{galactic_gnn_forward.1} parent=0 // pred_fallthru
    _
  // Predicated region
  $region46: #{galactic_gnn_forward.1} parent=0 // pred_check
    _
  $region47: #{galactic_gnn_forward.1} parent=0 // pred_check_branch
    %3200 = sbr.rel (0) target = $region49
  $region48: #{galactic_gnn_forward.1} parent=0 // pred_region
    _
  $region49: #{galactic_gnn_forward.1} parent=0 // pred_fallthru
    _

</llo_original>
